<compile_context>
chip_gen: v6e
topology: v6e:2x2x1
jax: 0.10.0
libtpu: 0.0.40
codegen_flags: <defaults>
</compile_context>

<pallas_src>
import jax
import jax.numpy as jnp
import numpy as np
from jax.experimental import pallas as pl
from jax.experimental.pallas import tpu as pltpu

N_HEAD = 4  # config.n_head


def _norm_linear_attn_kernel(x_ref, wqkvuT_ref, bqkvu_ref, cos_ref, sin_ref,
                             woutT_ref, bout_ref, o_ref,
                             scos_ref, ssin_ref, acc_ref):
    ci = pl.program_id(1)

    # Reset carried per-head KV state at the start of each batch element's
    # chunk sweep (chunk axis is the innermost / fastest grid axis).
    @pl.when(ci == 0)
    def _():
        scos_ref[...] = jnp.zeros_like(scos_ref)
        ssin_ref[...] = jnp.zeros_like(ssin_ref)

    x = x_ref[0]                                  # (tq, H), compute dtype
    tq, H = x.shape
    h = scos_ref.shape[0]
    d = scos_ref.shape[1]
    cdt = x_ref.dtype                             # compute dtype for MXU operands

    # ---- qkvu projection: compute-dtype MXU, f32 accumulation ----
    qkvu = jnp.dot(x, wqkvuT_ref[...], preferred_element_type=jnp.float32)
    qkvu = qkvu + bqkvu_ref[0]                    # f32
    q = qkvu[:, 0 * H:1 * H]
    k = qkvu[:, 1 * H:2 * H]
    v = qkvu[:, 2 * H:3 * H]
    u = qkvu[:, 3 * H:4 * H]

    # SiLU (sigmoid on EUP, mul on VALU), f32
    q = q * jax.nn.sigmoid(q)
    k = k * jax.nn.sigmoid(k)

    # LRPE: full-width, lane-dense (tq, H) multiplies in f32, then ONE cast to
    # the compute dtype so every remaining matmul feeds the MXU bf16 operands.
    # TODO(synk): generate cos/sin in-kernel from iota * theta (EUP/VPU slots
    # are idle under the MXU) to remove the table HBM stream entirely.
    cos_t = cos_ref[...].astype(jnp.float32)
    sin_t = sin_ref[...].astype(jnp.float32)
    qc = (q * cos_t).astype(cdt)
    qs = (q * sin_t).astype(cdt)
    kc = (k * cos_t).astype(cdt)
    ks = (k * sin_t).astype(cdt)
    vc = v.astype(cdt)

    # Causal predicate for the diagonal (tq, tq) block — no materialized mask
    row = jax.lax.broadcasted_iota(jnp.int32, (tq, tq), 0)
    col = jax.lax.broadcasted_iota(jnp.int32, (tq, tq), 1)
    causal = row >= col

    # TODO(synk): fuse the cos/sin halves into a single K=2d contraction
    # (lane concat of qc|qs / kc|ks with a (2d, d) state) once unaligned
    # minor-dim concat relayout cost is verified on the target Mosaic build.
    for hh in range(h):                           # static unrolled head loop
        lo = hh * d
        qch = qc[:, lo:lo + d]
        qsh = qs[:, lo:lo + d]
        kch = kc[:, lo:lo + d]
        ksh = ks[:, lo:lo + d]
        vh = vc[:, lo:lo + d]

        # -- off-diagonal (strictly earlier chunks) via carried f32 state,
        #    compute-dtype MXU operands --
        s_c = scos_ref[hh]                        # (d, d) f32
        s_s = ssin_ref[hh]
        off = (jnp.dot(qch, s_c.astype(cdt), preferred_element_type=jnp.float32) +
               jnp.dot(qsh, s_s.astype(cdt), preferred_element_type=jnp.float32))

        # -- diagonal block, masked --
        energy = (jax.lax.dot_general(qch, kch, (((1,), (1,)), ((), ())),
                                      preferred_element_type=jnp.float32) +
                  jax.lax.dot_general(qsh, ksh, (((1,), (1,)), ((), ())),
                                      preferred_element_type=jnp.float32))
        energy = jnp.where(causal, energy, 0.0)
        diag = jnp.dot(energy.astype(cdt), vh, preferred_element_type=jnp.float32)

        # Lane-dense accumulator slab.
        # TODO(synk): if production d < 128, these are vst.msk partial stores;
        # switch to an (h, tq, d) scratch + one reassemble in that case.
        acc_ref[:, lo:lo + d] = off + diag

        # -- update carried state: K^T V with compute-dtype operands, f32 acc --
        scos_ref[hh] = s_c + jax.lax.dot_general(
            kch, vh, (((0,), (0,)), ((), ())), preferred_element_type=jnp.float32)
        ssin_ref[hh] = s_s + jax.lax.dot_general(
            ksh, vh, (((0,), (0,)), ((), ())), preferred_element_type=jnp.float32)

    out = acc_ref[...]                            # (tq, H) f32  ('b h n d -> b n (h d)')

    # SimpleRMSNorm (naive srms): x * rsqrt(mean(x^2, -1) + eps), f32
    ms = jnp.mean(out * out, axis=-1, keepdims=True)
    out = out * jax.lax.rsqrt(ms + 1e-6)

    # gate with u, then output projection (compute dtype MXU, f32 acc)
    out = (u * out).astype(cdt)
    out = jnp.dot(out, woutT_ref[...], preferred_element_type=jnp.float32)
    out = out + bout_ref[0]
    o_ref[0] = out.astype(o_ref.dtype)


def _pick_block_q(n, target):
    """Largest multiple of 8 that divides n, capped at `target`; else full n."""
    if n <= target:
        return n
    bq = (target // 8) * 8
    while bq >= 8:
        if n % bq == 0:
            return bq
        bq -= 8
    return n  # TODO(synk): pad the sequence instead of falling back to a full-n block


def norm_linear_attention(x, w_qkvu, b_qkvu, w_out, b_out, n_head=N_HEAD,
                          block_q=None, compute_dtype=jnp.bfloat16,
                          out_dtype=None):
    B, n, H = x.shape
    d = H // n_head
    if out_dtype is None:
        out_dtype = x.dtype
    if block_q is None:
        # Bigger chunks amortize the ~0.35us/grid-step overhead and the
        # per-chunk state matmuls; keep diagonal FLOPs below projection cost.
        block_q = 512 if H >= 512 else 256
    tq = _pick_block_q(n, block_q)
    n_chunks = n // tq

    # LRPE angle tables, lane-dense (n, H): column h*d + j <-> (head h, dim j),
    # matching the flat '(h d)' channel layout the kernel works in.
    theta = 10000.0 ** (-2.0 / H * jnp.arange(H, dtype=jnp.float32))    # (H,)
    ang = jnp.arange(n, dtype=jnp.float32)[:, None] * theta[None, :]    # (n, H)
    cos_tab = jnp.cos(ang).astype(compute_dtype)
    sin_tab = jnp.sin(ang).astype(compute_dtype)

    # Host-side prep: pre-transposed weights (no in-kernel .T), MXU operand cast.
    x_c = x.astype(compute_dtype)
    w_qkvu_t = jnp.transpose(w_qkvu).astype(compute_dtype)   # (H, 4H)
    w_out_t = jnp.transpose(w_out).astype(compute_dtype)     # (H, H)
    b_qkvu2 = b_qkvu.reshape(1, 4 * H).astype(jnp.float32)
    b_out2 = b_out.reshape(1, H).astype(jnp.float32)

    # Generation-aware VMEM budget (v5e/v6e: 128 MiB physical, v7x: 64 MiB).
    isz = np.dtype(compute_dtype).itemsize
    osz = np.dtype(out_dtype).itemsize
    # Pipeline double-buffers all inputs/outputs; scratch is single-buffered.
    # TODO(synk): for very large H on v7x, single-buffer the grid-invariant
    # weights (pipeline_mode=pl.Buffered(1)) or stream W_qkvu^T over a K axis.
    est = (2 * (tq * H * isz                 # x chunk
                + 2 * tq * H * isz           # cos + sin chunks
                + tq * H * osz               # output chunk
                + H * 4 * H * isz            # W_qkvu^T
                + H * H * isz                # W_out^T
                + 4 * H * 4 + H * 4)         # biases (f32)
           + 2 * n_head * d * d * 4          # carried K^T V state (f32)
           + tq * H * 4)                     # head-output accumulator (f32)
    try:
        vmem_cap = int(pltpu.get_tpu_info().vmem_capacity_bytes)
    except Exception:
        vmem_cap = 64 << 20                  # conservative fallback (v7x-sized)
    vmem_limit = int(min(max(4 * est, 16 << 20), (vmem_cap * 7) // 8))

    # Advisory cost estimate so XLA schedules neighbours around the long call.
    flops = B * n * (10 * H * H + 6 * tq * H + 8 * H * d)
    transcendentals = B * n * 2 * H                      # SiLU sigmoids on q, k
    bytes_accessed = (B * n * H * (isz + osz)            # x in, out
                      + 2 * n * H * isz                  # cos/sin tables
                      + 5 * H * H * isz + 5 * H * 4)     # weights + biases

    grid_spec = pltpu.PrefetchScalarGridSpec(
        num_scalar_prefetch=0,
        grid=(B, n_chunks),
        in_specs=[
            pl.BlockSpec((1, tq, H), lambda b, i: (b, i, 0)),        # x chunk
            pl.BlockSpec((H, 4 * H), lambda b, i: (0, 0)),           # W_qkvu^T
            pl.BlockSpec((1, 4 * H), lambda b, i: (0, 0)),           # b_qkvu
            pl.BlockSpec((tq, H), lambda b, i: (i, 0)),              # cos chunk (n, H)
            pl.BlockSpec((tq, H), lambda b, i: (i, 0)),              # sin chunk (n, H)
            pl.BlockSpec((H, H), lambda b, i: (0, 0)),               # W_out^T
            pl.BlockSpec((1, H), lambda b, i: (0, 0)),               # b_out
        ],
        out_specs=pl.BlockSpec((1, tq, H), lambda b, i: (b, i, 0)),
        scratch_shapes=[
            pltpu.VMEM((n_head, d, d), jnp.float32),   # running K^T V (cos half)
            pltpu.VMEM((n_head, d, d), jnp.float32),   # running K^T V (sin half)
            pltpu.VMEM((tq, H), jnp.float32),          # lane-dense head-output slab
        ],
    )
    # TODO(synk): v7x megacore — batch is the only "parallel" grid axis (the
    # chunk axis carries state); keep B even or shard batch outside the kernel.
    return pl.pallas_call(
        _norm_linear_attn_kernel,
        out_shape=jax.ShapeDtypeStruct((B, n, H), out_dtype),
        grid_spec=grid_spec,
        compiler_params=pltpu.CompilerParams(
            dimension_semantics=("parallel", "arbitrary"),
            vmem_limit_bytes=vmem_limit,
        ),
        cost_estimate=pl.CostEstimate(
            flops=int(flops),
            transcendentals=int(transcendentals),
            bytes_accessed=int(bytes_accessed)),
    )(x_c, w_qkvu_t, b_qkvu2, cos_tab, sin_tab, w_out_t, b_out2)


def reference(x, w_qkvu, b_qkvu, w_out, b_out, n_head=N_HEAD):
    """Pure-JAX replica of the PyTorch training forward for validation."""
    B, n, H = x.shape
    d = H // n_head
    qkvu = x @ w_qkvu.T + b_qkvu
    q, k, v, u = jnp.split(qkvu, 4, axis=-1)

    def heads(t):
        return jnp.transpose(t.reshape(B, n, n_head, d), (0, 2, 1, 3))

    q, k, v = heads(q), heads(k), heads(v)
    q = jax.nn.silu(q)
    k = jax.nn.silu(k)
    theta = (10000.0 ** (-2.0 / H * jnp.arange(H, dtype=jnp.float32))
             ).reshape(n_head, 1, d)
    index = jnp.arange(n, dtype=jnp.float32).reshape(1, n, 1)
    ang = theta * index
    q = jnp.concatenate([q * jnp.cos(ang), q * jnp.sin(ang)], axis=-1)
    k = jnp.concatenate([k * jnp.cos(ang), k * jnp.sin(ang)], axis=-1)
    mask = jnp.tril(jnp.ones((n, n), jnp.float32))
    energy = jnp.einsum('bhnd,bhmd->bhnm', q, k) * mask
    out = jnp.einsum('bhnm,bhmd->bhnd', energy, v)
    out = jnp.transpose(out, (0, 2, 1, 3)).reshape(B, n, H)
    out = out * jax.lax.rsqrt(jnp.mean(out * out, -1, keepdims=True) + 1e-6)
    out = u * out
    return out @ w_out.T + b_out


if __name__ == "__main__":
    B, n, H = 2, 128, 32                     # batch, seq, n_embd (small, >1 chunk)
    n_head = N_HEAD
    key = jax.random.PRNGKey(0)
    kx, k1, k2, k3, k4 = jax.random.split(key, 5)

    x = jax.random.normal(kx, (B, n, H), dtype=jnp.float32)
    # deterministic synthetic parameters (nn.Linear shapes, bias=True)
    w_qkvu = 0.05 * jax.random.normal(k1, (4 * H, H), dtype=jnp.float32)
    b_qkvu = 0.02 * jax.random.normal(k2, (4 * H,), dtype=jnp.float32)
    w_out = 0.05 * jax.random.normal(k3, (H, H), dtype=jnp.float32)
    b_out = 0.02 * jax.random.normal(k4, (H,), dtype=jnp.float32)

    ref = reference(x, w_qkvu, b_qkvu, w_out, b_out, n_head=n_head)

    # f32 compute path: tight check that the chunked/carried-state restructure
    # matches the masked-quadratic reference.
    out_f32 = norm_linear_attention(x, w_qkvu, b_qkvu, w_out, b_out,
                                    n_head=n_head, block_q=64,
                                    compute_dtype=jnp.float32)
    out_f32 = jax.block_until_ready(out_f32)
    np.testing.assert_allclose(np.asarray(out_f32), np.asarray(ref),
                               rtol=1e-4, atol=1e-4)

    # bf16 MXU path (bf16 operands everywhere, f32 accumulation + f32 state):
    # production configuration, looser check.
    out_bf16 = norm_linear_attention(x, w_qkvu, b_qkvu, w_out, b_out,
                                     n_head=n_head, block_q=64,
                                     compute_dtype=jnp.bfloat16)
    out_bf16 = jax.block_until_ready(out_bf16)
    np.testing.assert_allclose(np.asarray(out_bf16), np.asarray(ref),
                               rtol=4e-2, atol=4e-2)

    print("KERNEL_OK")
</pallas_src>

<mosaic_0001>
module attributes {stable_mosaic.version = 11 : i64} {
  func.func @_norm_linear_attn_kernel(%arg0: i32, %arg1: i32, %arg2: memref<1x64x32xf32, #tpu.memory_space<vmem>>, %arg3: memref<32x128xf32, #tpu.memory_space<vmem>>, %arg4: memref<1x128xf32, #tpu.memory_space<vmem>>, %arg5: memref<64x32xf32, #tpu.memory_space<vmem>>, %arg6: memref<64x32xf32, #tpu.memory_space<vmem>>, %arg7: memref<32x32xf32, #tpu.memory_space<vmem>>, %arg8: memref<1x32xf32, #tpu.memory_space<vmem>>, %arg9: memref<1x64x32xf32, #tpu.memory_space<vmem>>, %arg10: memref<4x8x8xf32, #tpu.memory_space<vmem>>, %arg11: memref<4x8x8xf32, #tpu.memory_space<vmem>>, %arg12: memref<64x32xf32, #tpu.memory_space<vmem>>) attributes {dimension_semantics = [#tpu.dimension_semantics<parallel>, #tpu.dimension_semantics<arbitrary>], iteration_bounds = array<i64: 2, 2>, scalar_prefetch = 0 : i64, scratch_operands = 3 : i64, tpu.core_type = #tpu.core_type<tc>, window_params = [{transform_indices = @transform_0, window_bounds = array<i64: 1, 64, 32>}, {pipeline_mode = #tpu.pipeline_mode<synchronous>, transform_indices = @transform_1, window_bounds = array<i64: 32, 128>}, {pipeline_mode = #tpu.pipeline_mode<synchronous>, transform_indices = @transform_2, window_bounds = array<i64: 1, 128>}, {transform_indices = @transform_3, window_bounds = array<i64: 64, 32>}, {transform_indices = @transform_4, window_bounds = array<i64: 64, 32>}, {pipeline_mode = #tpu.pipeline_mode<synchronous>, transform_indices = @transform_5, window_bounds = array<i64: 32, 32>}, {pipeline_mode = #tpu.pipeline_mode<synchronous>, transform_indices = @transform_6, window_bounds = array<i64: 1, 32>}, {transform_indices = @transform_7, window_bounds = array<i64: 1, 64, 32>}]} {
    %c0_i32 = arith.constant 0 : i32
    %0 = arith.cmpi eq, %arg1, %c0_i32 : i32
    %1 = arith.extui %0 : i1 to i32
    %c0_i32_0 = arith.constant 0 : i32
    %2 = arith.cmpi ne, %1, %c0_i32_0 : i32
    scf.if %2 {
      %cst_108 = arith.constant 0.000000e+00 : f32
      %179 = vector.broadcast %cst_108 : f32 to vector<4x8x8xf32>
      %c0_109 = arith.constant 0 : index
      %c0_110 = arith.constant 0 : index
      %c0_111 = arith.constant 0 : index
      %180 = vector.load %arg10[%c0_109, %c0_110, %c0_111] : memref<4x8x8xf32, #tpu.memory_space<vmem>>, vector<4x8x8xf32>
      tpu.vector_store %arg10[%c0_109, %c0_110, %c0_111], %179 {strides = array<i32>} : memref<4x8x8xf32, #tpu.memory_space<vmem>>, vector<4x8x8xf32>,
      %cst_112 = arith.constant 0.000000e+00 : f32
      %181 = vector.broadcast %cst_112 : f32 to vector<4x8x8xf32>
      %c0_113 = arith.constant 0 : index
      %c0_114 = arith.constant 0 : index
      %c0_115 = arith.constant 0 : index
      %182 = vector.load %arg11[%c0_113, %c0_114, %c0_115] : memref<4x8x8xf32, #tpu.memory_space<vmem>>, vector<4x8x8xf32>
      tpu.vector_store %arg11[%c0_113, %c0_114, %c0_115], %181 {strides = array<i32>} : memref<4x8x8xf32, #tpu.memory_space<vmem>>, vector<4x8x8xf32>,
    } else {
    }
    %c0 = arith.constant 0 : index
    %c0_1 = arith.constant 0 : index
    %c0_2 = arith.constant 0 : index
    %3 = vector.load %arg2[%c0, %c0_1, %c0_2] : memref<1x64x32xf32, #tpu.memory_space<vmem>>, vector<1x64x32xf32>
    %4 = vector.shape_cast %3 : vector<1x64x32xf32> to vector<64x32xf32>
    %c0_3 = arith.constant 0 : index
    %c0_4 = arith.constant 0 : index
    %5 = vector.load %arg3[%c0_3, %c0_4] : memref<32x128xf32, #tpu.memory_space<vmem>>, vector<32x128xf32>
    %cst = arith.constant dense<0.000000e+00> : vector<64x128xf32>
    %6 = tpu.matmul %4, %5, %cst {dimension_numbers = #tpu.dot_dimension_numbers<[1], [0], [0], [1], [0, 0, 1, 1], [], []>} : vector<64x32xf32>, vector<32x128xf32>, vector<64x128xf32> -> vector<64x128xf32>
    %c0_5 = arith.constant 0 : index
    %c0_6 = arith.constant 0 : index
    %7 = vector.load %arg4[%c0_5, %c0_6] : memref<1x128xf32, #tpu.memory_space<vmem>>, vector<1x128xf32>
    %8 = vector.shape_cast %7 : vector<1x128xf32> to vector<128xf32>
    %9 = vector.shape_cast %8 : vector<128xf32> to vector<1x128xf32>
    %10 = vector.broadcast %9 : vector<1x128xf32> to vector<64x128xf32>
    %11 = arith.addf %6, %10 : vector<64x128xf32>
    %12 = vector.extract_strided_slice %11 {offsets = [0, 0], sizes = [64, 32], strides = [1, 1]} : vector<64x128xf32> to vector<64x32xf32>
    %13 = vector.extract_strided_slice %11 {offsets = [0, 32], sizes = [64, 32], strides = [1, 1]} : vector<64x128xf32> to vector<64x32xf32>
    %14 = vector.extract_strided_slice %11 {offsets = [0, 64], sizes = [64, 32], strides = [1, 1]} : vector<64x128xf32> to vector<64x32xf32>
    %15 = vector.extract_strided_slice %11 {offsets = [0, 96], sizes = [64, 32], strides = [1, 1]} : vector<64x128xf32> to vector<64x32xf32>
    %16 = arith.negf %12 : vector<64x32xf32>
    %17 = math.exp %16 : vector<64x32xf32>
    %cst_7 = arith.constant 1.000000e+00 : f32
    %18 = vector.broadcast %cst_7 : f32 to vector<64x32xf32>
    %19 = arith.addf %18, %17 : vector<64x32xf32>
    %20 = arith.divf %18, %19 : vector<64x32xf32>
    %21 = arith.mulf %12, %20 : vector<64x32xf32>
    %22 = arith.negf %13 : vector<64x32xf32>
    %23 = math.exp %22 : vector<64x32xf32>
    %cst_8 = arith.constant 1.000000e+00 : f32
    %24 = vector.broadcast %cst_8 : f32 to vector<64x32xf32>
    %25 = arith.addf %24, %23 : vector<64x32xf32>
    %26 = arith.divf %24, %25 : vector<64x32xf32>
    %27 = arith.mulf %13, %26 : vector<64x32xf32>
    %c0_9 = arith.constant 0 : index
    %c0_10 = arith.constant 0 : index
    %28 = vector.load %arg5[%c0_9, %c0_10] : memref<64x32xf32, #tpu.memory_space<vmem>>, vector<64x32xf32>
    %c0_11 = arith.constant 0 : index
    %c0_12 = arith.constant 0 : index
    %29 = vector.load %arg6[%c0_11, %c0_12] : memref<64x32xf32, #tpu.memory_space<vmem>>, vector<64x32xf32>
    %30 = arith.mulf %21, %28 : vector<64x32xf32>
    %31 = arith.mulf %21, %29 : vector<64x32xf32>
    %32 = arith.mulf %27, %28 : vector<64x32xf32>
    %33 = arith.mulf %27, %29 : vector<64x32xf32>
    %34 = tpu.iota {dimensions = array<i32: 0>} : vector<64x64xi32>
    %35 = tpu.iota {dimensions = array<i32: 1>} : vector<64x64xi32>
    %36 = arith.cmpi sge, %34, %35 : vector<64x64xi32>
    %37 = vector.extract_strided_slice %30 {offsets = [0, 0], sizes = [64, 8], strides = [1, 1]} : vector<64x32xf32> to vector<64x8xf32>
    %38 = vector.extract_strided_slice %31 {offsets = [0, 0], sizes = [64, 8], strides = [1, 1]} : vector<64x32xf32> to vector<64x8xf32>
    %39 = vector.extract_strided_slice %32 {offsets = [0, 0], sizes = [64, 8], strides = [1, 1]} : vector<64x32xf32> to vector<64x8xf32>
    %40 = vector.extract_strided_slice %33 {offsets = [0, 0], sizes = [64, 8], strides = [1, 1]} : vector<64x32xf32> to vector<64x8xf32>
    %41 = vector.extract_strided_slice %14 {offsets = [0, 0], sizes = [64, 8], strides = [1, 1]} : vector<64x32xf32> to vector<64x8xf32>
    %c0_13 = arith.constant 0 : index
    %c0_14 = arith.constant 0 : index
    %c0_15 = arith.constant 0 : index
    %42 = vector.load %arg10[%c0_13, %c0_14, %c0_15] : memref<4x8x8xf32, #tpu.memory_space<vmem>>, vector<1x8x8xf32>
    %43 = vector.shape_cast %42 : vector<1x8x8xf32> to vector<8x8xf32>
    %c0_16 = arith.constant 0 : index
    %c0_17 = arith.constant 0 : index
    %c0_18 = arith.constant 0 : index
    %44 = vector.load %arg11[%c0_16, %c0_17, %c0_18] : memref<4x8x8xf32, #tpu.memory_space<vmem>>, vector<1x8x8xf32>
    %45 = vector.shape_cast %44 : vector<1x8x8xf32> to vector<8x8xf32>
    %cst_19 = arith.constant dense<0.000000e+00> : vector<64x8xf32>
    %46 = tpu.matmul %37, %43, %cst_19 {dimension_numbers = #tpu.dot_dimension_numbers<[1], [0], [0], [1], [0, 0, 1, 1], [], []>} : vector<64x8xf32>, vector<8x8xf32>, vector<64x8xf32> -> vector<64x8xf32>
    %cst_20 = arith.constant dense<0.000000e+00> : vector<64x8xf32>
    %47 = tpu.matmul %38, %45, %cst_20 {dimension_numbers = #tpu.dot_dimension_numbers<[1], [0], [0], [1], [0, 0, 1, 1], [], []>} : vector<64x8xf32>, vector<8x8xf32>, vector<64x8xf32> -> vector<64x8xf32>
    %48 = arith.addf %46, %47 : vector<64x8xf32>
    %cst_21 = arith.constant dense<0.000000e+00> : vector<64x64xf32>
    %49 = tpu.matmul %37, %39, %cst_21 {dimension_numbers = #tpu.dot_dimension_numbers<[1], [1], [0], [0], [0, 0, 1, 0], [], []>} : vector<64x8xf32>, vector<64x8xf32>, vector<64x64xf32> -> vector<64x64xf32>
    %cst_22 = arith.constant dense<0.000000e+00> : vector<64x64xf32>
    %50 = tpu.matmul %38, %40, %cst_22 {dimension_numbers = #tpu.dot_dimension_numbers<[1], [1], [0], [0], [0, 0, 1, 0], [], []>} : vector<64x8xf32>, vector<64x8xf32>, vector<64x64xf32> -> vector<64x64xf32>
    %51 = arith.addf %49, %50 : vector<64x64xf32>
    %cst_23 = arith.constant 0.000000e+00 : f32
    %52 = vector.broadcast %cst_23 : f32 to vector<64x64xf32>
    %53 = arith.select %36, %51, %52 : vector<64x64xi1>, vector<64x64xf32>
    %cst_24 = arith.constant dense<0.000000e+00> : vector<64x8xf32>
    %54 = tpu.matmul %53, %41, %cst_24 {dimension_numbers = #tpu.dot_dimension_numbers<[1], [0], [0], [1], [0, 0, 1, 1], [], []>} : vector<64x64xf32>, vector<64x8xf32>, vector<64x8xf32> -> vector<64x8xf32>
    %55 = arith.addf %48, %54 : vector<64x8xf32>
    %c0_25 = arith.constant 0 : index
    %c0_26 = arith.constant 0 : index
    %56 = vector.load %arg12[%c0_25, %c0_26] : memref<64x32xf32, #tpu.memory_space<vmem>>, vector<64x8xf32>
    tpu.vector_store %arg12[%c0_25, %c0_26], %55 {strides = array<i32>} : memref<64x32xf32, #tpu.memory_space<vmem>>, vector<64x8xf32>,
    %cst_27 = arith.constant dense<0.000000e+00> : vector<8x8xf32>
    %57 = tpu.matmul %39, %41, %cst_27 {dimension_numbers = #tpu.dot_dimension_numbers<[0], [0], [1], [1], [0, 1, 1, 1], [], []>} : vector<64x8xf32>, vector<64x8xf32>, vector<8x8xf32> -> vector<8x8xf32>
    %58 = arith.addf %43, %57 : vector<8x8xf32>
    %c0_28 = arith.constant 0 : index
    %c0_29 = arith.constant 0 : index
    %c0_30 = arith.constant 0 : index
    %59 = vector.load %arg10[%c0_28, %c0_29, %c0_30] : memref<4x8x8xf32, #tpu.memory_space<vmem>>, vector<1x8x8xf32>
    %60 = vector.shape_cast %59 : vector<1x8x8xf32> to vector<8x8xf32>
    %61 = vector.shape_cast %58 : vector<8x8xf32> to vector<1x8x8xf32>
    tpu.vector_store %arg10[%c0_28, %c0_29, %c0_30], %61 {strides = array<i32>} : memref<4x8x8xf32, #tpu.memory_space<vmem>>, vector<1x8x8xf32>,
    %cst_31 = arith.constant dense<0.000000e+00> : vector<8x8xf32>
    %62 = tpu.matmul %40, %41, %cst_31 {dimension_numbers = #tpu.dot_dimension_numbers<[0], [0], [1], [1], [0, 1, 1, 1], [], []>} : vector<64x8xf32>, vector<64x8xf32>, vector<8x8xf32> -> vector<8x8xf32>
    %63 = arith.addf %45, %62 : vector<8x8xf32>
    %c0_32 = arith.constant 0 : index
    %c0_33 = arith.constant 0 : index
    %c0_34 = arith.constant 0 : index
    %64 = vector.load %arg11[%c0_32, %c0_33, %c0_34] : memref<4x8x8xf32, #tpu.memory_space<vmem>>, vector<1x8x8xf32>
    %65 = vector.shape_cast %64 : vector<1x8x8xf32> to vector<8x8xf32>
    %66 = vector.shape_cast %63 : vector<8x8xf32> to vector<1x8x8xf32>
    tpu.vector_store %arg11[%c0_32, %c0_33, %c0_34], %66 {strides = array<i32>} : memref<4x8x8xf32, #tpu.memory_space<vmem>>, vector<1x8x8xf32>,
    %67 = vector.extract_strided_slice %30 {offsets = [0, 8], sizes = [64, 8], strides = [1, 1]} : vector<64x32xf32> to vector<64x8xf32>
    %68 = vector.extract_strided_slice %31 {offsets = [0, 8], sizes = [64, 8], strides = [1, 1]} : vector<64x32xf32> to vector<64x8xf32>
    %69 = vector.extract_strided_slice %32 {offsets = [0, 8], sizes = [64, 8], strides = [1, 1]} : vector<64x32xf32> to vector<64x8xf32>
    %70 = vector.extract_strided_slice %33 {offsets = [0, 8], sizes = [64, 8], strides = [1, 1]} : vector<64x32xf32> to vector<64x8xf32>
    %71 = vector.extract_strided_slice %14 {offsets = [0, 8], sizes = [64, 8], strides = [1, 1]} : vector<64x32xf32> to vector<64x8xf32>
    %c1 = arith.constant 1 : index
    %c0_35 = arith.constant 0 : index
    %c0_36 = arith.constant 0 : index
    %72 = vector.load %arg10[%c1, %c0_35, %c0_36] : memref<4x8x8xf32, #tpu.memory_space<vmem>>, vector<1x8x8xf32>
    %73 = vector.shape_cast %72 : vector<1x8x8xf32> to vector<8x8xf32>
    %c1_37 = arith.constant 1 : index
    %c0_38 = arith.constant 0 : index
    %c0_39 = arith.constant 0 : index
    %74 = vector.load %arg11[%c1_37, %c0_38, %c0_39] : memref<4x8x8xf32, #tpu.memory_space<vmem>>, vector<1x8x8xf32>
    %75 = vector.shape_cast %74 : vector<1x8x8xf32> to vector<8x8xf32>
    %cst_40 = arith.constant dense<0.000000e+00> : vector<64x8xf32>
    %76 = tpu.matmul %67, %73, %cst_40 {dimension_numbers = #tpu.dot_dimension_numbers<[1], [0], [0], [1], [0, 0, 1, 1], [], []>} : vector<64x8xf32>, vector<8x8xf32>, vector<64x8xf32> -> vector<64x8xf32>
    %cst_41 = arith.constant dense<0.000000e+00> : vector<64x8xf32>
    %77 = tpu.matmul %68, %75, %cst_41 {dimension_numbers = #tpu.dot_dimension_numbers<[1], [0], [0], [1], [0, 0, 1, 1], [], []>} : vector<64x8xf32>, vector<8x8xf32>, vector<64x8xf32> -> vector<64x8xf32>
    %78 = arith.addf %76, %77 : vector<64x8xf32>
    %cst_42 = arith.constant dense<0.000000e+00> : vector<64x64xf32>
    %79 = tpu.matmul %67, %69, %cst_42 {dimension_numbers = #tpu.dot_dimension_numbers<[1], [1], [0], [0], [0, 0, 1, 0], [], []>} : vector<64x8xf32>, vector<64x8xf32>, vector<64x64xf32> -> vector<64x64xf32>
    %cst_43 = arith.constant dense<0.000000e+00> : vector<64x64xf32>
    %80 = tpu.matmul %68, %70, %cst_43 {dimension_numbers = #tpu.dot_dimension_numbers<[1], [1], [0], [0], [0, 0, 1, 0], [], []>} : vector<64x8xf32>, vector<64x8xf32>, vector<64x64xf32> -> vector<64x64xf32>
    %81 = arith.addf %79, %80 : vector<64x64xf32>
    %cst_44 = arith.constant 0.000000e+00 : f32
    %82 = vector.broadcast %cst_44 : f32 to vector<64x64xf32>
    %83 = arith.select %36, %81, %82 : vector<64x64xi1>, vector<64x64xf32>
    %cst_45 = arith.constant dense<0.000000e+00> : vector<64x8xf32>
    %84 = tpu.matmul %83, %71, %cst_45 {dimension_numbers = #tpu.dot_dimension_numbers<[1], [0], [0], [1], [0, 0, 1, 1], [], []>} : vector<64x64xf32>, vector<64x8xf32>, vector<64x8xf32> -> vector<64x8xf32>
    %85 = arith.addf %78, %84 : vector<64x8xf32>
    %c0_46 = arith.constant 0 : index
    %c8 = arith.constant 8 : index
    %86 = vector.load %arg12[%c0_46, %c8] : memref<64x32xf32, #tpu.memory_space<vmem>>, vector<64x8xf32>
    tpu.vector_store %arg12[%c0_46, %c8], %85 {strides = array<i32>} : memref<64x32xf32, #tpu.memory_space<vmem>>, vector<64x8xf32>,
    %cst_47 = arith.constant dense<0.000000e+00> : vector<8x8xf32>
    %87 = tpu.matmul %69, %71, %cst_47 {dimension_numbers = #tpu.dot_dimension_numbers<[0], [0], [1], [1], [0, 1, 1, 1], [], []>} : vector<64x8xf32>, vector<64x8xf32>, vector<8x8xf32> -> vector<8x8xf32>
    %88 = arith.addf %73, %87 : vector<8x8xf32>
    %c1_48 = arith.constant 1 : index
    %c0_49 = arith.constant 0 : index
    %c0_50 = arith.constant 0 : index
    %89 = vector.load %arg10[%c1_48, %c0_49, %c0_50] : memref<4x8x8xf32, #tpu.memory_space<vmem>>, vector<1x8x8xf32>
    %90 = vector.shape_cast %89 : vector<1x8x8xf32> to vector<8x8xf32>
    %91 = vector.shape_cast %88 : vector<8x8xf32> to vector<1x8x8xf32>
    tpu.vector_store %arg10[%c1_48, %c0_49, %c0_50], %91 {strides = array<i32>} : memref<4x8x8xf32, #tpu.memory_space<vmem>>, vector<1x8x8xf32>,
    %cst_51 = arith.constant dense<0.000000e+00> : vector<8x8xf32>
    %92 = tpu.matmul %70, %71, %cst_51 {dimension_numbers = #tpu.dot_dimension_numbers<[0], [0], [1], [1], [0, 1, 1, 1], [], []>} : vector<64x8xf32>, vector<64x8xf32>, vector<8x8xf32> -> vector<8x8xf32>
    %93 = arith.addf %75, %92 : vector<8x8xf32>
    %c1_52 = arith.constant 1 : index
    %c0_53 = arith.constant 0 : index
    %c0_54 = arith.constant 0 : index
    %94 = vector.load %arg11[%c1_52, %c0_53, %c0_54] : memref<4x8x8xf32, #tpu.memory_space<vmem>>, vector<1x8x8xf32>
    %95 = vector.shape_cast %94 : vector<1x8x8xf32> to vector<8x8xf32>
    %96 = vector.shape_cast %93 : vector<8x8xf32> to vector<1x8x8xf32>
    tpu.vector_store %arg11[%c1_52, %c0_53, %c0_54], %96 {strides = array<i32>} : memref<4x8x8xf32, #tpu.memory_space<vmem>>, vector<1x8x8xf32>,
    %97 = vector.extract_strided_slice %30 {offsets = [0, 16], sizes = [64, 8], strides = [1, 1]} : vector<64x32xf32> to vector<64x8xf32>
    %98 = vector.extract_strided_slice %31 {offsets = [0, 16], sizes = [64, 8], strides = [1, 1]} : vector<64x32xf32> to vector<64x8xf32>
    %99 = vector.extract_strided_slice %32 {offsets = [0, 16], sizes = [64, 8], strides = [1, 1]} : vector<64x32xf32> to vector<64x8xf32>
    %100 = vector.extract_strided_slice %33 {offsets = [0, 16], sizes = [64, 8], strides = [1, 1]} : vector<64x32xf32> to vector<64x8xf32>
    %101 = vector.extract_strided_slice %14 {offsets = [0, 16], sizes = [64, 8], strides = [1, 1]} : vector<64x32xf32> to vector<64x8xf32>
    %c2 = arith.constant 2 : index
    %c0_55 = arith.constant 0 : index
    %c0_56 = arith.constant 0 : index
    %102 = vector.load %arg10[%c2, %c0_55, %c0_56] : memref<4x8x8xf32, #tpu.memory_space<vmem>>, vector<1x8x8xf32>
    %103 = vector.shape_cast %102 : vector<1x8x8xf32> to vector<8x8xf32>
    %c2_57 = arith.constant 2 : index
    %c0_58 = arith.constant 0 : index
    %c0_59 = arith.constant 0 : index
    %104 = vector.load %arg11[%c2_57, %c0_58, %c0_59] : memref<4x8x8xf32, #tpu.memory_space<vmem>>, vector<1x8x8xf32>
    %105 = vector.shape_cast %104 : vector<1x8x8xf32> to vector<8x8xf32>
    %cst_60 = arith.constant dense<0.000000e+00> : vector<64x8xf32>
    %106 = tpu.matmul %97, %103, %cst_60 {dimension_numbers = #tpu.dot_dimension_numbers<[1], [0], [0], [1], [0, 0, 1, 1], [], []>} : vector<64x8xf32>, vector<8x8xf32>, vector<64x8xf32> -> vector<64x8xf32>
    %cst_61 = arith.constant dense<0.000000e+00> : vector<64x8xf32>
    %107 = tpu.matmul %98, %105, %cst_61 {dimension_numbers = #tpu.dot_dimension_numbers<[1], [0], [0], [1], [0, 0, 1, 1], [], []>} : vector<64x8xf32>, vector<8x8xf32>, vector<64x8xf32> -> vector<64x8xf32>
    %108 = arith.addf %106, %107 : vector<64x8xf32>
    %cst_62 = arith.constant dense<0.000000e+00> : vector<64x64xf32>
    %109 = tpu.matmul %97, %99, %cst_62 {dimension_numbers = #tpu.dot_dimension_numbers<[1], [1], [0], [0], [0, 0, 1, 0], [], []>} : vector<64x8xf32>, vector<64x8xf32>, vector<64x64xf32> -> vector<64x64xf32>
    %cst_63 = arith.constant dense<0.000000e+00> : vector<64x64xf32>
    %110 = tpu.matmul %98, %100, %cst_63 {dimension_numbers = #tpu.dot_dimension_numbers<[1], [1], [0], [0], [0, 0, 1, 0], [], []>} : vector<64x8xf32>, vector<64x8xf32>, vector<64x64xf32> -> vector<64x64xf32>
    %111 = arith.addf %109, %110 : vector<64x64xf32>
    %cst_64 = arith.constant 0.000000e+00 : f32
    %112 = vector.broadcast %cst_64 : f32 to vector<64x64xf32>
    %113 = arith.select %36, %111, %112 : vector<64x64xi1>, vector<64x64xf32>
    %cst_65 = arith.constant dense<0.000000e+00> : vector<64x8xf32>
    %114 = tpu.matmul %113, %101, %cst_65 {dimension_numbers = #tpu.dot_dimension_numbers<[1], [0], [0], [1], [0, 0, 1, 1], [], []>} : vector<64x64xf32>, vector<64x8xf32>, vector<64x8xf32> -> vector<64x8xf32>
    %115 = arith.addf %108, %114 : vector<64x8xf32>
    %c0_66 = arith.constant 0 : index
    %c16 = arith.constant 16 : index
    %116 = vector.load %arg12[%c0_66, %c16] : memref<64x32xf32, #tpu.memory_space<vmem>>, vector<64x8xf32>
    tpu.vector_store %arg12[%c0_66, %c16], %115 {strides = array<i32>} : memref<64x32xf32, #tpu.memory_space<vmem>>, vector<64x8xf32>,
    %cst_67 = arith.constant dense<0.000000e+00> : vector<8x8xf32>
    %117 = tpu.matmul %99, %101, %cst_67 {dimension_numbers = #tpu.dot_dimension_numbers<[0], [0], [1], [1], [0, 1, 1, 1], [], []>} : vector<64x8xf32>, vector<64x8xf32>, vector<8x8xf32> -> vector<8x8xf32>
    %118 = arith.addf %103, %117 : vector<8x8xf32>
    %c2_68 = arith.constant 2 : index
    %c0_69 = arith.constant 0 : index
    %c0_70 = arith.constant 0 : index
    %119 = vector.load %arg10[%c2_68, %c0_69, %c0_70] : memref<4x8x8xf32, #tpu.memory_space<vmem>>, vector<1x8x8xf32>
    %120 = vector.shape_cast %119 : vector<1x8x8xf32> to vector<8x8xf32>
    %121 = vector.shape_cast %118 : vector<8x8xf32> to vector<1x8x8xf32>
    tpu.vector_store %arg10[%c2_68, %c0_69, %c0_70], %121 {strides = array<i32>} : memref<4x8x8xf32, #tpu.memory_space<vmem>>, vector<1x8x8xf32>,
    %cst_71 = arith.constant dense<0.000000e+00> : vector<8x8xf32>
    %122 = tpu.matmul %100, %101, %cst_71 {dimension_numbers = #tpu.dot_dimension_numbers<[0], [0], [1], [1], [0, 1, 1, 1], [], []>} : vector<64x8xf32>, vector<64x8xf32>, vector<8x8xf32> -> vector<8x8xf32>
    %123 = arith.addf %105, %122 : vector<8x8xf32>
    %c2_72 = arith.constant 2 : index
    %c0_73 = arith.constant 0 : index
    %c0_74 = arith.constant 0 : index
    %124 = vector.load %arg11[%c2_72, %c0_73, %c0_74] : memref<4x8x8xf32, #tpu.memory_space<vmem>>, vector<1x8x8xf32>
    %125 = vector.shape_cast %124 : vector<1x8x8xf32> to vector<8x8xf32>
    %126 = vector.shape_cast %123 : vector<8x8xf32> to vector<1x8x8xf32>
    tpu.vector_store %arg11[%c2_72, %c0_73, %c0_74], %126 {strides = array<i32>} : memref<4x8x8xf32, #tpu.memory_space<vmem>>, vector<1x8x8xf32>,
    %127 = vector.extract_strided_slice %30 {offsets = [0, 24], sizes = [64, 8], strides = [1, 1]} : vector<64x32xf32> to vector<64x8xf32>
    %128 = vector.extract_strided_slice %31 {offsets = [0, 24], sizes = [64, 8], strides = [1, 1]} : vector<64x32xf32> to vector<64x8xf32>
    %129 = vector.extract_strided_slice %32 {offsets = [0, 24], sizes = [64, 8], strides = [1, 1]} : vector<64x32xf32> to vector<64x8xf32>
    %130 = vector.extract_strided_slice %33 {offsets = [0, 24], sizes = [64, 8], strides = [1, 1]} : vector<64x32xf32> to vector<64x8xf32>
    %131 = vector.extract_strided_slice %14 {offsets = [0, 24], sizes = [64, 8], strides = [1, 1]} : vector<64x32xf32> to vector<64x8xf32>
    %c3 = arith.constant 3 : index
    %c0_75 = arith.constant 0 : index
    %c0_76 = arith.constant 0 : index
    %132 = vector.load %arg10[%c3, %c0_75, %c0_76] : memref<4x8x8xf32, #tpu.memory_space<vmem>>, vector<1x8x8xf32>
    %133 = vector.shape_cast %132 : vector<1x8x8xf32> to vector<8x8xf32>
    %c3_77 = arith.constant 3 : index
    %c0_78 = arith.constant 0 : index
    %c0_79 = arith.constant 0 : index
    %134 = vector.load %arg11[%c3_77, %c0_78, %c0_79] : memref<4x8x8xf32, #tpu.memory_space<vmem>>, vector<1x8x8xf32>
    %135 = vector.shape_cast %134 : vector<1x8x8xf32> to vector<8x8xf32>
    %cst_80 = arith.constant dense<0.000000e+00> : vector<64x8xf32>
    %136 = tpu.matmul %127, %133, %cst_80 {dimension_numbers = #tpu.dot_dimension_numbers<[1], [0], [0], [1], [0, 0, 1, 1], [], []>} : vector<64x8xf32>, vector<8x8xf32>, vector<64x8xf32> -> vector<64x8xf32>
    %cst_81 = arith.constant dense<0.000000e+00> : vector<64x8xf32>
    %137 = tpu.matmul %128, %135, %cst_81 {dimension_numbers = #tpu.dot_dimension_numbers<[1], [0], [0], [1], [0, 0, 1, 1], [], []>} : vector<64x8xf32>, vector<8x8xf32>, vector<64x8xf32> -> vector<64x8xf32>
    %138 = arith.addf %136, %137 : vector<64x8xf32>
    %cst_82 = arith.constant dense<0.000000e+00> : vector<64x64xf32>
    %139 = tpu.matmul %127, %129, %cst_82 {dimension_numbers = #tpu.dot_dimension_numbers<[1], [1], [0], [0], [0, 0, 1, 0], [], []>} : vector<64x8xf32>, vector<64x8xf32>, vector<64x64xf32> -> vector<64x64xf32>
    %cst_83 = arith.constant dense<0.000000e+00> : vector<64x64xf32>
    %140 = tpu.matmul %128, %130, %cst_83 {dimension_numbers = #tpu.dot_dimension_numbers<[1], [1], [0], [0], [0, 0, 1, 0], [], []>} : vector<64x8xf32>, vector<64x8xf32>, vector<64x64xf32> -> vector<64x64xf32>
    %141 = arith.addf %139, %140 : vector<64x64xf32>
    %cst_84 = arith.constant 0.000000e+00 : f32
    %142 = vector.broadcast %cst_84 : f32 to vector<64x64xf32>
    %143 = arith.select %36, %141, %142 : vector<64x64xi1>, vector<64x64xf32>
    %cst_85 = arith.constant dense<0.000000e+00> : vector<64x8xf32>
    %144 = tpu.matmul %143, %131, %cst_85 {dimension_numbers = #tpu.dot_dimension_numbers<[1], [0], [0], [1], [0, 0, 1, 1], [], []>} : vector<64x64xf32>, vector<64x8xf32>, vector<64x8xf32> -> vector<64x8xf32>
    %145 = arith.addf %138, %144 : vector<64x8xf32>
    %c0_86 = arith.constant 0 : index
    %c24 = arith.constant 24 : index
    %146 = vector.load %arg12[%c0_86, %c24] : memref<64x32xf32, #tpu.memory_space<vmem>>, vector<64x8xf32>
    tpu.vector_store %arg12[%c0_86, %c24], %145 {strides = array<i32>} : memref<64x32xf32, #tpu.memory_space<vmem>>, vector<64x8xf32>,
    %cst_87 = arith.constant dense<0.000000e+00> : vector<8x8xf32>
    %147 = tpu.matmul %129, %131, %cst_87 {dimension_numbers = #tpu.dot_dimension_numbers<[0], [0], [1], [1], [0, 1, 1, 1], [], []>} : vector<64x8xf32>, vector<64x8xf32>, vector<8x8xf32> -> vector<8x8xf32>
    %148 = arith.addf %133, %147 : vector<8x8xf32>
    %c3_88 = arith.constant 3 : index
    %c0_89 = arith.constant 0 : index
    %c0_90 = arith.constant 0 : index
    %149 = vector.load %arg10[%c3_88, %c0_89, %c0_90] : memref<4x8x8xf32, #tpu.memory_space<vmem>>, vector<1x8x8xf32>
    %150 = vector.shape_cast %149 : vector<1x8x8xf32> to vector<8x8xf32>
    %151 = vector.shape_cast %148 : vector<8x8xf32> to vector<1x8x8xf32>
    tpu.vector_store %arg10[%c3_88, %c0_89, %c0_90], %151 {strides = array<i32>} : memref<4x8x8xf32, #tpu.memory_space<vmem>>, vector<1x8x8xf32>,
    %cst_91 = arith.constant dense<0.000000e+00> : vector<8x8xf32>
    %152 = tpu.matmul %130, %131, %cst_91 {dimension_numbers = #tpu.dot_dimension_numbers<[0], [0], [1], [1], [0, 1, 1, 1], [], []>} : vector<64x8xf32>, vector<64x8xf32>, vector<8x8xf32> -> vector<8x8xf32>
    %153 = arith.addf %135, %152 : vector<8x8xf32>
    %c3_92 = arith.constant 3 : index
    %c0_93 = arith.constant 0 : index
    %c0_94 = arith.constant 0 : index
    %154 = vector.load %arg11[%c3_92, %c0_93, %c0_94] : memref<4x8x8xf32, #tpu.memory_space<vmem>>, vector<1x8x8xf32>
    %155 = vector.shape_cast %154 : vector<1x8x8xf32> to vector<8x8xf32>
    %156 = vector.shape_cast %153 : vector<8x8xf32> to vector<1x8x8xf32>
    tpu.vector_store %arg11[%c3_92, %c0_93, %c0_94], %156 {strides = array<i32>} : memref<4x8x8xf32, #tpu.memory_space<vmem>>, vector<1x8x8xf32>,
    %c0_95 = arith.constant 0 : index
    %c0_96 = arith.constant 0 : index
    %157 = vector.load %arg12[%c0_95, %c0_96] : memref<64x32xf32, #tpu.memory_space<vmem>>, vector<64x32xf32>
    %158 = arith.mulf %157, %157 : vector<64x32xf32>
    %cst_97 = arith.constant dense<0.000000e+00> : vector<64xf32>
    %159 = vector.multi_reduction <add>, %158, %cst_97 [1] : vector<64x32xf32> to vector<64xf32>
    %160 = vector.shape_cast %159 : vector<64xf32> to vector<64x1xf32>
    %cst_98 = arith.constant 3.200000e+01 : f32
    %161 = vector.broadcast %cst_98 : f32 to vector<64x1xf32>
    %162 = arith.divf %160, %161 : vector<64x1xf32>
    %cst_99 = arith.constant 9.99999997E-7 : f32
    %163 = vector.broadcast %cst_99 : f32 to vector<64x1xf32>
    %164 = arith.addf %162, %163 : vector<64x1xf32>
    %165 = math.rsqrt %164 : vector<64x1xf32>
    %166 = vector.broadcast %165 : vector<64x1xf32> to vector<64x32xf32>
    %167 = arith.mulf %157, %166 : vector<64x32xf32>
    %168 = arith.mulf %15, %167 : vector<64x32xf32>
    %c0_100 = arith.constant 0 : index
    %c0_101 = arith.constant 0 : index
    %169 = vector.load %arg7[%c0_100, %c0_101] : memref<32x32xf32, #tpu.memory_space<vmem>>, vector<32x32xf32>
    %cst_102 = arith.constant dense<0.000000e+00> : vector<64x32xf32>
    %170 = tpu.matmul %168, %169, %cst_102 {dimension_numbers = #tpu.dot_dimension_numbers<[1], [0], [0], [1], [0, 0, 1, 1], [], []>} : vector<64x32xf32>, vector<32x32xf32>, vector<64x32xf32> -> vector<64x32xf32>
    %c0_103 = arith.constant 0 : index
    %c0_104 = arith.constant 0 : index
    %171 = vector.load %arg8[%c0_103, %c0_104] : memref<1x32xf32, #tpu.memory_space<vmem>>, vector<1x32xf32>
    %172 = vector.shape_cast %171 : vector<1x32xf32> to vector<32xf32>
    %173 = vector.shape_cast %172 : vector<32xf32> to vector<1x32xf32>
    %174 = vector.broadcast %173 : vector<1x32xf32> to vector<64x32xf32>
    %175 = arith.addf %170, %174 : vector<64x32xf32>
    %c0_105 = arith.constant 0 : index
    %c0_106 = arith.constant 0 : index
    %c0_107 = arith.constant 0 : index
    %176 = vector.load %arg9[%c0_105, %c0_106, %c0_107] : memref<1x64x32xf32, #tpu.memory_space<vmem>>, vector<1x64x32xf32>
    %177 = vector.shape_cast %176 : vector<1x64x32xf32> to vector<64x32xf32>
    %178 = vector.shape_cast %175 : vector<64x32xf32> to vector<1x64x32xf32>
    tpu.vector_store %arg9[%c0_105, %c0_106, %c0_107], %178 {strides = array<i32>} : memref<1x64x32xf32, #tpu.memory_space<vmem>>, vector<1x64x32xf32>,
    return
  }
  func.func @transform_0(%arg0: i32, %arg1: i32) -> (i32, i32, i32) {
    %c0_i32 = arith.constant 0 : i32
    %c0_i32_0 = arith.constant 0 : i32
    return %arg0, %arg1, %c0_i32 : i32, i32, i32
  }
  func.func @transform_1(%arg0: i32, %arg1: i32) -> (i32, i32) {
    %c0_i32 = arith.constant 0 : i32
    %c0_i32_0 = arith.constant 0 : i32
    %c0_i32_1 = arith.constant 0 : i32
    return %c0_i32, %c0_i32_0 : i32, i32
  }
  func.func @transform_2(%arg0: i32, %arg1: i32) -> (i32, i32) {
    %c0_i32 = arith.constant 0 : i32
    %c0_i32_0 = arith.constant 0 : i32
    %c0_i32_1 = arith.constant 0 : i32
    return %c0_i32, %c0_i32_0 : i32, i32
  }
  func.func @transform_3(%arg0: i32, %arg1: i32) -> (i32, i32) {
    %c0_i32 = arith.constant 0 : i32
    %c0_i32_0 = arith.constant 0 : i32
    return %arg1, %c0_i32 : i32, i32
  }
  func.func @transform_4(%arg0: i32, %arg1: i32) -> (i32, i32) {
    %c0_i32 = arith.constant 0 : i32
    %c0_i32_0 = arith.constant 0 : i32
    return %arg1, %c0_i32 : i32, i32
  }
  func.func @transform_5(%arg0: i32, %arg1: i32) -> (i32, i32) {
    %c0_i32 = arith.constant 0 : i32
    %c0_i32_0 = arith.constant 0 : i32
    %c0_i32_1 = arith.constant 0 : i32
    return %c0_i32, %c0_i32_0 : i32, i32
  }
  func.func @transform_6(%arg0: i32, %arg1: i32) -> (i32, i32) {
    %c0_i32 = arith.constant 0 : i32
    %c0_i32_0 = arith.constant 0 : i32
    %c0_i32_1 = arith.constant 0 : i32
    return %c0_i32, %c0_i32_0 : i32, i32
  }
  func.func @transform_7(%arg0: i32, %arg1: i32) -> (i32, i32, i32) {
    %c0_i32 = arith.constant 0 : i32
    %c0_i32_0 = arith.constant 0 : i32
    return %arg0, %arg1, %c0_i32 : i32, i32, i32
  }
}

</mosaic_0001>

<llo_original>
// kernel: tpu_custom_call.1
$region0: #{tpu_custom_call.1}
  #allocation0 [shape = 'u32[]', space=smem, size = 0x4, offset = 0x4, fixed_abs, tag = 'smem constant byte address 0x4 - core index']
  #allocation1 [shape = 'u32[144,128]{1,0:T(1,128)}', space=vmem, size = 0x12000, scoped, tag = 'internal scratch']
  #allocation2 [shape = 'f32[4,8,8]{2,1,0:T(8,128)}', space=vmem, size = 0x4000, scoped, tag = 'scratch operand']
  #allocation3 [shape = 'f32[4,8,8]{2,1,0:T(8,128)}', space=vmem, size = 0x4000, scoped, tag = 'scratch operand']
  #allocation4 [shape = 'f32[64,32]{1,0:T(8,128)}', space=vmem, size = 0x8000, scoped, tag = 'scratch operand']
  %s0 = inlined_call_operand.vmem [shape: f32[2,128,32], index: 0, kind: input, shape index: {}]
  %s1 = inlined_call_operand.vmem [shape: f32[32,128], index: 1, kind: input, shape index: {}]
  %s2 = inlined_call_operand.vmem [shape: f32[1,128], index: 2, kind: input, shape index: {}]
  %s3 = inlined_call_operand.vmem [shape: f32[128,32], index: 3, kind: input, shape index: {}]
  %s4 = inlined_call_operand.vmem [shape: f32[128,32], index: 4, kind: input, shape index: {}]
  %s5 = inlined_call_operand.vmem [shape: f32[32,32], index: 5, kind: input, shape index: {}]
  %s6 = inlined_call_operand.vmem [shape: f32[1,32], index: 6, kind: input, shape index: {}]
  %s7 = inlined_call_operand.vmem [shape: f32[2,128,32], index: 7, kind: output, shape index: {}]
  %s8 = sld [smem:[#allocation0]]
  $region65: #{tpu_custom_call.1} parent=0
    _
  %s10 = ssub.s32 1, %s8
  %s11 = scalar_select 0, %s10, %s8
  loop: start=0, step=1, limit=6
  $region2: #{tpu_custom_call.1} parent=0 // loop_pre_header
    _
  $region3: #{tpu_custom_call.1} parent=0 // loop_header
    %s13 = sphi 0, %s17
    %p14 = scmp.ge.s32.totalorder %s13, 6
    %s20 = sphi 0, %s32
    %s21 = sphi 0, %s28
    %s22 = sphi 0, %s20
    %s23 = sphi 0, %s21
    %s24 = sphi 0, %s22
    %s25 = sphi 0, %s23
    %s37 = sphi 0, %s39
    %s40 = sphi 0, %s37
    %s41 = sphi 0, %s40
    %s57 = sphi 0, %s41
    %s61 = sphi 0, %s61
    %s63 = sphi 0, %s61
    %s64 = sphi 0, %s63
    %s78 = sphi 0, %s64
    %s82 = sphi 0, %s82
    %s84 = sphi 0, %s82
    %s85 = sphi 0, %s84
    %s99 = sphi 0, %s85
    %s105 = sphi 0, %s107
    %s108 = sphi 0, %s105
    %s109 = sphi 0, %s108
    %s125 = sphi 0, %s109
    %s131 = sphi 0, %s133
    %s134 = sphi 0, %s131
    %s135 = sphi 0, %s134
    %s151 = sphi 0, %s135
    %s155 = sphi 0, %s155
    %s157 = sphi 0, %s155
    %s158 = sphi 0, %s157
    %s172 = sphi 0, %s158
    %s176 = sphi 0, %s176
    %s178 = sphi 0, %s176
    %s179 = sphi 0, %s178
    %s193 = sphi 0, %s179
    %s201 = sphi 0, %s203
    %s204 = sphi 0, %s201
    %s205 = sphi 0, %s204
    %s221 = sphi 0, %s205
  $region4: #{tpu_custom_call.1} parent=0 // loop_header_branch
    %16 = sbr.rel (%p14) target = $region8
  $region5: #{tpu_custom_call.1} parent=0 // loop_body
    %s18 = ssub.s32 %s13, 1
    %s19 = ssub.s32 %s13, 2
    %s26 = sadd.s32 1, %s21
    %p27 = scmp.ge.s32.totalorder %s26, 2
    %s28 = scalar_select %p27, 0, %s26
    %s29 = sadd.s32 1, %s20
    %s30 = scalar_select %p27, %s29, %s20
    %p31 = scmp.ge.s32.totalorder %s30, 2
    %s32 = scalar_select %p31, 0, %s30
    %s33 = ssub.s32 %s20, %s32
    %s34 = ssub.s32 %s21, %s28
    %s35 = sor.u32 %s33, %s34
    %p36 = scmp.eq.s32.totalorder %s35, 0
    %s38 = sadd.s32 %s37, 1
    %s39 = scalar_select %p36, %s37, %s38
    %p42 = pneg %p36
    %p43 = scmp.eq.s32.totalorder %s13, 3
    %p44 = por %p42, %p43
    %p45 = scmp.ne.s32.totalorder %s37, %s40
    %p46 = scmp.eq.s32.totalorder %s13, 0
    %p47 = por %p45, %p46
    %p48 = scmp.ne.s32.totalorder %s37, %s40
    %p49 = scmp.eq.s32.totalorder %s18, 3
    %p50 = por %p48, %p49
    %p51 = scmp.ne.s32.totalorder %s40, %s41
    %p52 = scmp.eq.s32.totalorder %s18, 0
    %p53 = por %p51, %p52
    %p54 = scmp.ne.s32.totalorder %s40, %s41
    %p55 = scmp.eq.s32.totalorder %s19, 3
    %p56 = por %p54, %p55
    %p58 = scmp.ne.s32.totalorder %s41, %s57
    %p59 = scmp.eq.s32.totalorder %s19, 0
    %p60 = por %p58, %p59
    %s62 = sadd.s32 %s61, 1
    %p65 = scmp.eq.s32.totalorder %s13, 3
    %p66 = scmp.ne.s32.totalorder %s61, %s63
    %p67 = scmp.eq.s32.totalorder %s13, 0
    %p68 = por %p66, %p67
    %p69 = scmp.ne.s32.totalorder %s61, %s63
    %p70 = scmp.eq.s32.totalorder %s18, 3
    %p71 = por %p69, %p70
    %p72 = scmp.ne.s32.totalorder %s63, %s64
    %p73 = scmp.eq.s32.totalorder %s18, 0
    %p74 = por %p72, %p73
    %p75 = scmp.ne.s32.totalorder %s63, %s64
    %p76 = scmp.eq.s32.totalorder %s19, 3
    %p77 = por %p75, %p76
    %p79 = scmp.ne.s32.totalorder %s64, %s78
    %p80 = scmp.eq.s32.totalorder %s19, 0
    %p81 = por %p79, %p80
    %s83 = sadd.s32 %s82, 1
    %p86 = scmp.eq.s32.totalorder %s13, 3
    %p87 = scmp.ne.s32.totalorder %s82, %s84
    %p88 = scmp.eq.s32.totalorder %s13, 0
    %p89 = por %p87, %p88
    %p90 = scmp.ne.s32.totalorder %s82, %s84
    %p91 = scmp.eq.s32.totalorder %s18, 3
    %p92 = por %p90, %p91
    %p93 = scmp.ne.s32.totalorder %s84, %s85
    %p94 = scmp.eq.s32.totalorder %s18, 0
    %p95 = por %p93, %p94
    %p96 = scmp.ne.s32.totalorder %s84, %s85
    %p97 = scmp.eq.s32.totalorder %s19, 3
    %p98 = por %p96, %p97
    %p100 = scmp.ne.s32.totalorder %s85, %s99
    %p101 = scmp.eq.s32.totalorder %s19, 0
    %p102 = por %p100, %p101
    %s103 = ssub.s32 %s21, %s28
    %p104 = scmp.eq.s32.totalorder %s103, 0
    %s106 = sadd.s32 %s105, 1
    %s107 = scalar_select %p104, %s105, %s106
    %p110 = pneg %p104
    %p111 = scmp.eq.s32.totalorder %s13, 3
    %p112 = por %p110, %p111
    %p113 = scmp.ne.s32.totalorder %s105, %s108
    %p114 = scmp.eq.s32.totalorder %s13, 0
    %p115 = por %p113, %p114
    %p116 = scmp.ne.s32.totalorder %s105, %s108
    %p117 = scmp.eq.s32.totalorder %s18, 3
    %p118 = por %p116, %p117
    %p119 = scmp.ne.s32.totalorder %s108, %s109
    %p120 = scmp.eq.s32.totalorder %s18, 0
    %p121 = por %p119, %p120
    %p122 = scmp.ne.s32.totalorder %s108, %s109
    %p123 = scmp.eq.s32.totalorder %s19, 3
    %p124 = por %p122, %p123
    %p126 = scmp.ne.s32.totalorder %s109, %s125
    %p127 = scmp.eq.s32.totalorder %s19, 0
    %p128 = por %p126, %p127
    %s129 = ssub.s32 %s21, %s28
    %p130 = scmp.eq.s32.totalorder %s129, 0
    %s132 = sadd.s32 %s131, 1
    %s133 = scalar_select %p130, %s131, %s132
    %p136 = pneg %p130
    %p137 = scmp.eq.s32.totalorder %s13, 3
    %p138 = por %p136, %p137
    %p139 = scmp.ne.s32.totalorder %s131, %s134
    %p140 = scmp.eq.s32.totalorder %s13, 0
    %p141 = por %p139, %p140
    %p142 = scmp.ne.s32.totalorder %s131, %s134
    %p143 = scmp.eq.s32.totalorder %s18, 3
    %p144 = por %p142, %p143
    %p145 = scmp.ne.s32.totalorder %s134, %s135
    %p146 = scmp.eq.s32.totalorder %s18, 0
    %p147 = por %p145, %p146
    %p148 = scmp.ne.s32.totalorder %s134, %s135
    %p149 = scmp.eq.s32.totalorder %s19, 3
    %p150 = por %p148, %p149
    %p152 = scmp.ne.s32.totalorder %s135, %s151
    %p153 = scmp.eq.s32.totalorder %s19, 0
    %p154 = por %p152, %p153
    %s156 = sadd.s32 %s155, 1
    %p159 = scmp.eq.s32.totalorder %s13, 3
    %p160 = scmp.ne.s32.totalorder %s155, %s157
    %p161 = scmp.eq.s32.totalorder %s13, 0
    %p162 = por %p160, %p161
    %p163 = scmp.ne.s32.totalorder %s155, %s157
    %p164 = scmp.eq.s32.totalorder %s18, 3
    %p165 = por %p163, %p164
    %p166 = scmp.ne.s32.totalorder %s157, %s158
    %p167 = scmp.eq.s32.totalorder %s18, 0
    %p168 = por %p166, %p167
    %p169 = scmp.ne.s32.totalorder %s157, %s158
    %p170 = scmp.eq.s32.totalorder %s19, 3
    %p171 = por %p169, %p170
    %p173 = scmp.ne.s32.totalorder %s158, %s172
    %p174 = scmp.eq.s32.totalorder %s19, 0
    %p175 = por %p173, %p174
    %s177 = sadd.s32 %s176, 1
    %p180 = scmp.eq.s32.totalorder %s13, 3
    %p181 = scmp.ne.s32.totalorder %s176, %s178
    %p182 = scmp.eq.s32.totalorder %s13, 0
    %p183 = por %p181, %p182
    %p184 = scmp.ne.s32.totalorder %s176, %s178
    %p185 = scmp.eq.s32.totalorder %s18, 3
    %p186 = por %p184, %p185
    %p187 = scmp.ne.s32.totalorder %s178, %s179
    %p188 = scmp.eq.s32.totalorder %s18, 0
    %p189 = por %p187, %p188
    %p190 = scmp.ne.s32.totalorder %s178, %s179
    %p191 = scmp.eq.s32.totalorder %s19, 3
    %p192 = por %p190, %p191
    %p194 = scmp.ne.s32.totalorder %s179, %s193
    %p195 = scmp.eq.s32.totalorder %s19, 0
    %p196 = por %p194, %p195
    %s197 = ssub.s32 %s20, %s32
    %s198 = ssub.s32 %s21, %s28
    %s199 = sor.u32 %s197, %s198
    %p200 = scmp.eq.s32.totalorder %s199, 0
    %s202 = sadd.s32 %s201, 1
    %s203 = scalar_select %p200, %s201, %s202
    %p206 = pneg %p200
    %p207 = scmp.eq.s32.totalorder %s13, 3
    %p208 = por %p206, %p207
    %p209 = scmp.ne.s32.totalorder %s201, %s204
    %p210 = scmp.eq.s32.totalorder %s13, 0
    %p211 = por %p209, %p210
    %p212 = scmp.ne.s32.totalorder %s201, %s204
    %p213 = scmp.eq.s32.totalorder %s18, 3
    %p214 = por %p212, %p213
    %p215 = scmp.ne.s32.totalorder %s204, %s205
    %p216 = scmp.eq.s32.totalorder %s18, 0
    %p217 = por %p215, %p216
    %p218 = scmp.ne.s32.totalorder %s204, %s205
    %p219 = scmp.eq.s32.totalorder %s19, 3
    %p220 = por %p218, %p219
    %p222 = scmp.ne.s32.totalorder %s205, %s221
    %p223 = scmp.eq.s32.totalorder %s19, 0
    %p224 = por %p222, %p223
    %p225 = scmp.le.s32.totalorder 1, %s13
    %p226 = scmp.lt.s32.totalorder %s13, 5
    %p227 = pnand %p225, %p226
    %p228 = pneg %p227
    // Predicated region
    $region9: #{tpu_custom_call.1} parent=5 // pred_check
      _
    $region10: #{tpu_custom_call.1} parent=5 // pred_check_branch
      %230 = sbr.rel (%p227) target = $region12
    $region11: #{tpu_custom_call.1} parent=5 // pred_region
      %s231 = ssub.s32 %s13, 1
      // Predicated region
      $region13: #{tpu_custom_call.1} parent=11 // pred_check
        %p232 = pneg %p74
      $region14: #{tpu_custom_call.1} parent=11 // pred_check_branch
        %234 = sbr.rel (%p232) target = $region16
      $region15: #{tpu_custom_call.1} parent=11 // pred_region
        _
      $region16: #{tpu_custom_call.1} parent=11 // pred_fallthru
        _
      // Predicated region
      $region17: #{tpu_custom_call.1} parent=11 // pred_check
        %p235 = pneg %p95
      $region18: #{tpu_custom_call.1} parent=11 // pred_check_branch
        %237 = sbr.rel (%p235) target = $region20
      $region19: #{tpu_custom_call.1} parent=11 // pred_region
        _
      $region20: #{tpu_custom_call.1} parent=11 // pred_fallthru
        _
      // Predicated region
      $region21: #{tpu_custom_call.1} parent=11 // pred_check
        %p238 = pneg %p168
      $region22: #{tpu_custom_call.1} parent=11 // pred_check_branch
        %240 = sbr.rel (%p238) target = $region24
      $region23: #{tpu_custom_call.1} parent=11 // pred_region
        _
      $region24: #{tpu_custom_call.1} parent=11 // pred_fallthru
        _
      // Predicated region
      $region25: #{tpu_custom_call.1} parent=11 // pred_check
        %p241 = pneg %p189
      $region26: #{tpu_custom_call.1} parent=11 // pred_check_branch
        %243 = sbr.rel (%p241) target = $region28
      $region27: #{tpu_custom_call.1} parent=11 // pred_region
        _
      $region28: #{tpu_custom_call.1} parent=11 // pred_fallthru
        _
    $region12: #{tpu_custom_call.1} parent=5 // pred_fallthru
      _
    %p244 = scmp.lt.s32.totalorder %s13, 4
    // Predicated region
    $region29: #{tpu_custom_call.1} parent=5 // pred_check
      %p245 = pneg %p244
    $region30: #{tpu_custom_call.1} parent=5 // pred_check_branch
      %247 = sbr.rel (%p245) target = $region32
    $region31: #{tpu_custom_call.1} parent=5 // pred_region
      // Predicated region
      $region33: #{tpu_custom_call.1} parent=31 // pred_check
        %p248 = pneg %p47
      $region34: #{tpu_custom_call.1} parent=31 // pred_check_branch
        %250 = sbr.rel (%p248) target = $region36
      $region35: #{tpu_custom_call.1} parent=31 // pred_region
        %s251 = smul.u32 8, %s21
        %p252 = scmp.lt.s32.totalorder %s20, 1
        %s253 = scalar_select %p252, %s20, 1
        %p254 = scmp.lt.s32.totalorder %s251, 15
        %s255 = scalar_select %p254, %s251, 15
        %s256 = smul.addr %s253, 16
        %s257 = sadd.s32 %s255, %s256
        %s258 = smul.addr %s257, 8
        %s259 = scalar_lea.vmem %s0, %s258
        %s260 = smul.u32 8, %s21
      $region36: #{tpu_custom_call.1} parent=31 // pred_fallthru
        _
      // Predicated region
      $region37: #{tpu_custom_call.1} parent=31 // pred_check
        %p261 = pneg %p115
      $region38: #{tpu_custom_call.1} parent=31 // pred_check_branch
        %263 = sbr.rel (%p261) target = $region40
      $region39: #{tpu_custom_call.1} parent=31 // pred_region
        %s264 = smul.u32 8, %s21
        %p265 = scmp.lt.s32.totalorder %s264, 15
        %s266 = scalar_select %p265, %s264, 15
        %s267 = smul.addr %s266, 8
        %s268 = scalar_lea.vmem %s3, %s267
        %s269 = smul.u32 8, %s21
      $region40: #{tpu_custom_call.1} parent=31 // pred_fallthru
        _
      // Predicated region
      $region41: #{tpu_custom_call.1} parent=31 // pred_check
        %p270 = pneg %p141
      $region42: #{tpu_custom_call.1} parent=31 // pred_check_branch
        %272 = sbr.rel (%p270) target = $region44
      $region43: #{tpu_custom_call.1} parent=31 // pred_region
        %s273 = smul.u32 8, %s21
        %p274 = scmp.lt.s32.totalorder %s273, 15
        %s275 = scalar_select %p274, %s273, 15
        %s276 = smul.addr %s275, 8
        %s277 = scalar_lea.vmem %s4, %s276
        %s278 = smul.u32 8, %s21
      $region44: #{tpu_custom_call.1} parent=31 // pred_fallthru
        _
    $region32: #{tpu_custom_call.1} parent=5 // pred_fallthru
      _
    %p279 = scmp.le.s32.totalorder 1, %s13
    %p280 = scmp.lt.s32.totalorder %s13, 5
    %p281 = pnand %p279, %p280
    %p282 = pneg %p281
    // Predicated region
    $region45: #{tpu_custom_call.1} parent=5 // pred_check
      _
    $region46: #{tpu_custom_call.1} parent=5 // pred_check_branch
      %284 = sbr.rel (%p281) target = $region48
    $region47: #{tpu_custom_call.1} parent=5 // pred_region
      %s285 = ssub.s32 %s13, 1
      %s286 = smul.u32 8, %s23
      %p287 = scmp.lt.s32.totalorder %s22, 1
      %s288 = scalar_select %p287, %s22, 1
      %p289 = scmp.lt.s32.totalorder %s286, 15
      %s290 = scalar_select %p289, %s286, 15
      %s291 = smul.addr %s288, 16
      %s292 = sadd.s32 %s290, %s291
      %s293 = smul.addr %s292, 8
      %s294 = scalar_lea.vmem %s0, %s293
      %p295 = pneg %p53
      %p296 = pneg %p50
      %p297 = pneg %p74
      %p298 = pneg %p71
      %p299 = pneg %p95
      %p300 = pneg %p92
      %s301 = smul.u32 8, %s23
      %p302 = scmp.lt.s32.totalorder %s301, 15
      %s303 = scalar_select %p302, %s301, 15
      %s304 = smul.addr %s303, 8
      %s305 = scalar_lea.vmem %s3, %s304
      %p306 = pneg %p121
      %p307 = pneg %p118
      %s308 = smul.u32 8, %s23
      %p309 = scmp.lt.s32.totalorder %s308, 15
      %s310 = scalar_select %p309, %s308, 15
      %s311 = smul.addr %s310, 8
      %s312 = scalar_lea.vmem %s4, %s311
      %p313 = pneg %p147
      %p314 = pneg %p144
      %p315 = pneg %p168
      %p316 = pneg %p165
      %p317 = pneg %p189
      %p318 = pneg %p186
      %p319 = pneg %p217
      %p320 = pneg %p214
      %s321 = smul.u32 8, %s23
      %p322 = scmp.lt.s32.totalorder %s22, 1
      %s323 = scalar_select %p322, %s22, 1
      %p324 = scmp.lt.s32.totalorder %s321, 15
      %s325 = scalar_select %p324, %s321, 15
      %s326 = smul.addr %s323, 16
      %s327 = sadd.s32 %s325, %s326
      %s328 = smul.addr %s327, 8
      %s329 = scalar_lea.vmem %s7, %s328
      %s330 = smul.u32 8, %s23
      %p331 = scmp.lt.s32.totalorder %s22, 1
      %s332 = scalar_select %p331, %s22, 1
      %p333 = scmp.lt.s32.totalorder %s330, 15
      %s334 = scalar_select %p333, %s330, 15
      %s335 = smul.addr %s332, 16
      %s336 = sadd.s32 %s334, %s335
      %s337 = smul.addr %s336, 8
      %s338 = scalar_lea.vmem %s0, %s337
      %s339 = smul.u32 8, %s23
      %s340 = smul.u32 8, %s23
      %p341 = scmp.lt.s32.totalorder %s340, 15
      %s342 = scalar_select %p341, %s340, 15
      %s343 = smul.addr %s342, 8
      %s344 = scalar_lea.vmem %s3, %s343
      %s345 = smul.u32 8, %s23
      %s346 = smul.u32 8, %s23
      %p347 = scmp.lt.s32.totalorder %s346, 15
      %s348 = scalar_select %p347, %s346, 15
      %s349 = smul.addr %s348, 8
      %s350 = scalar_lea.vmem %s4, %s349
      %s351 = smul.u32 8, %s23
      %s352 = smul.u32 8, %s23
      %p353 = scmp.lt.s32.totalorder %s22, 1
      %s354 = scalar_select %p353, %s22, 1
      %p355 = scmp.lt.s32.totalorder %s352, 15
      %s356 = scalar_select %p355, %s352, 15
      %s357 = smul.addr %s354, 16
      %s358 = sadd.s32 %s356, %s357
      %s359 = smul.addr %s358, 8
      %s360 = scalar_lea.vmem %s7, %s359
      %s361 = smul.u32 8, %s23
      %p362 = scmp.eq.s32.totalorder %s23, 0
      // Predicated region
      $region49: #{tpu_custom_call.1} parent=47 // pred_check
        %p363 = pneg %p362
      $region50: #{tpu_custom_call.1} parent=47 // pred_check_branch
        %365 = sbr.rel (%p363) target = $region52
      $region51: #{tpu_custom_call.1} parent=47 // pred_region
        %vm366 = vcmask 64512
        %367 = vst.msk [vmem:[#allocation2] sm:$0xff] %vm366, 0.0
        %368 = vst.msk [vmem:[#allocation2 + $0x8] sm:$0xff] %vm366, 0.0
        %369 = vst.msk [vmem:[#allocation2 + $0x10] sm:$0xff] %vm366, 0.0
        %370 = vst.msk [vmem:[#allocation2 + $0x18] sm:$0xff] %vm366, 0.0
        %371 = vst.msk [vmem:[#allocation3] sm:$0xff] %vm366, 0.0
        %372 = vst.msk [vmem:[#allocation3 + $0x8] sm:$0xff] %vm366, 0.0
        %373 = vst.msk [vmem:[#allocation3 + $0x10] sm:$0xff] %vm366, 0.0
        %374 = vst.msk [vmem:[#allocation3 + $0x18] sm:$0xff] %vm366, 0.0
      $region52: #{tpu_custom_call.1} parent=47 // pred_fallthru
        _
      %v375 = vld [vmem:[%s338] sm:$0xff]
      %v376 = vld [vmem:[%s338 + $0x8] sm:$0xff]
      %v377 = vld [vmem:[%s338 + $0x10] sm:$0xff]
      %v378 = vld [vmem:[%s338 + $0x18] sm:$0xff]
      %v379 = vld [vmem:[%s338 + $0x20] sm:$0xff]
      %v380 = vld [vmem:[%s338 + $0x28] sm:$0xff]
      %v381 = vld [vmem:[%s338 + $0x30] sm:$0xff]
      %v382 = vld [vmem:[%s338 + $0x38] sm:$0xff]
      %v383 = vld [vmem:[%s1] sm:$0xff]
      %v384 = vld [vmem:[%s1 + $0x8] sm:$0xff]
      %v385 = vld [vmem:[%s1 + $0x10] sm:$0xff]
      %v386 = vld [vmem:[%s1 + $0x18] sm:$0xff]
      %v387 = vld [vmem:[%s2] sm:$0x1]
      %v389 = vlaneseq
      %v390 = vshrl.u32 %v389, 7
      %v391 = vsub.s32 0, %v390
      %v392 = vrot.slane %v387, %v391
      %vm394 = vcmask 261120
      %v396 = vsel %vm394, %v375, 0
      %v399 = vsel %vm394, %v376, 0
      %v402 = vsel %vm394, %v377, 0
      %v405 = vsel %vm394, %v378, 0
      %v408 = vsel %vm394, %v379, 0
      %v411 = vsel %vm394, %v380, 0
      %v414 = vsel %vm394, %v381, 0
      %v417 = vsel %vm394, %v382, 0
      %419 = vmatprep.subr.mxu0 0.0
      %420 = vmatpush1.msra.mxu0 0.0
      %421 = vmatprep.subr.mxu0 0.0
      %422 = vmatpush1.msra.mxu0 0.0
      %423 = vmatprep.subr.mxu0 0.0
      %424 = vmatpush1.msra.mxu0 0.0
      %425 = vmatprep.subr.mxu0 0.0
      %426 = vmatpush1.msra.mxu0 0.0
      %427 = vmatprep.subr.mxu0 0.0
      %428 = vmatpush1.msra.mxu0 0.0
      %429 = vmatprep.subr.mxu0 0.0
      %430 = vmatpush1.msra.mxu0 0.0
      %431 = vmatprep.subr.mxu0 0.0
      %432 = vmatpush1.msra.mxu0 0.0
      %433 = vmatprep.subr.mxu0 0.0
      %434 = vmatpush1.msra.mxu0 0.0
      %435 = vmatprep.subr.mxu0 0.0
      %436 = vmatpush1.msra.mxu0 0.0
      %437 = vmatprep.subr.mxu0 0.0
      %438 = vmatpush1.msra.mxu0 0.0
      %439 = vmatprep.subr.mxu0 0.0
      %440 = vmatpush1.msra.mxu0 0.0
      %441 = vmatprep.subr.mxu0 0.0
      %442 = vmatpush1.msra.mxu0 0.0
      %443 = vmatprep.subr.mxu0 0.0
      %444 = vmatpush1.msra.mxu0 %v386
      %445 = vmatprep.subr.mxu0 0.0
      %446 = vmatpush1.msra.mxu0 %v385
      %447 = vmatprep.subr.mxu0 0.0
      %448 = vmatpush1.msra.mxu0 %v384
      %449 = vmatprep.subr.mxu0 0.0
      %450 = vmatpush1.msra.mxu0 %v383
      %451 = vmatprep.subr.mxu0 0.0
      %452 = vmatpush2.msra.mxu0 0.0
      %453 = vmatprep.subr.mxu0 0.0
      %454 = vmatpush2.msra.mxu0 0.0
      %455 = vmatprep.subr.mxu0 0.0
      %456 = vmatpush2.msra.mxu0 0.0
      %457 = vmatprep.subr.mxu0 0.0
      %458 = vmatpush2.msra.mxu0 0.0
      %459 = vmatprep.subr.mxu0 0.0
      %460 = vmatpush2.msra.mxu0 0.0
      %461 = vmatprep.subr.mxu0 0.0
      %462 = vmatpush2.msra.mxu0 0.0
      %463 = vmatprep.subr.mxu0 0.0
      %464 = vmatpush2.msra.mxu0 0.0
      %465 = vmatprep.subr.mxu0 0.0
      %466 = vmatpush2.msra.mxu0 0.0
      %467 = vmatprep.subr.mxu0 0.0
      %468 = vmatpush2.msra.mxu0 0.0
      %469 = vmatprep.subr.mxu0 0.0
      %470 = vmatpush2.msra.mxu0 0.0
      %471 = vmatprep.subr.mxu0 0.0
      %472 = vmatpush2.msra.mxu0 0.0
      %473 = vmatprep.subr.mxu0 0.0
      %474 = vmatpush2.msra.mxu0 0.0
      %475 = vmatprep.subr.mxu0 0.0
      %476 = vmatpush2.msra.mxu0 0.0
      %477 = vmatprep.subr.mxu0 0.0
      %478 = vmatpush2.msra.mxu0 0.0
      %479 = vmatprep.subr.mxu0 0.0
      %480 = vmatpush2.msra.mxu0 0.0
      %481 = vmatprep.subr.mxu0 0.0
      %482 = vmatpush2.msra.mxu0 0.0
      %483 = vmatprep.mubr.f32.mxu0 0.0
      %484 = vmatmul.mubr.f32.gmra.mxu0 %v396
      %v485 = vpop.f32.mrf.mxu0
      %v486 = vadd.f32 %v392, %v485
      %v487 = vpop.f32.mrf.mxu0
      %488 = vmatprep.mubr.f32.mxu0 0.0
      %489 = vmatmul.mubr.f32.gmra.mxu0 %v399
      %v490 = vpop.f32.mrf.mxu0
      %v491 = vadd.f32 %v392, %v490
      %v492 = vpop.f32.mrf.mxu0
      %493 = vmatprep.mubr.f32.mxu0 0.0
      %494 = vmatmul.mubr.f32.gmra.mxu0 %v402
      %v495 = vpop.f32.mrf.mxu0
      %v496 = vadd.f32 %v392, %v495
      %v497 = vpop.f32.mrf.mxu0
      %498 = vmatprep.mubr.f32.mxu0 0.0
      %499 = vmatmul.mubr.f32.gmra.mxu0 %v405
      %v500 = vpop.f32.mrf.mxu0
      %v501 = vadd.f32 %v392, %v500
      %v502 = vpop.f32.mrf.mxu0
      %503 = vmatprep.mubr.f32.mxu0 0.0
      %504 = vmatmul.mubr.f32.gmra.mxu0 %v408
      %v505 = vpop.f32.mrf.mxu0
      %v506 = vadd.f32 %v392, %v505
      %v507 = vpop.f32.mrf.mxu0
      %508 = vmatprep.mubr.f32.mxu0 0.0
      %509 = vmatmul.mubr.f32.gmra.mxu0 %v411
      %v510 = vpop.f32.mrf.mxu0
      %v511 = vadd.f32 %v392, %v510
      %v512 = vpop.f32.mrf.mxu0
      %513 = vmatprep.mubr.f32.mxu0 0.0
      %514 = vmatmul.mubr.f32.gmra.mxu0 %v414
      %v515 = vpop.f32.mrf.mxu0
      %v516 = vadd.f32 %v392, %v515
      %v517 = vpop.f32.mrf.mxu0
      %518 = vmatprep.mubr.f32.mxu0 0.0
      %519 = vmatmul.mubr.f32.gmra.mxu0 %v417
      %v520 = vpop.f32.mrf.mxu0
      %v521 = vadd.f32 %v392, %v520
      %v522 = vpop.f32.mrf.mxu0
      %523 = vdwg.mxu0
      %v524 = vxor.u32 %v486, 2147483648
      %v525 = vxor.u32 %v491, 2147483648
      %v526 = vxor.u32 %v496, 2147483648
      %v527 = vxor.u32 %v501, 2147483648
      %v528 = vxor.u32 %v506, 2147483648
      %v529 = vxor.u32 %v511, 2147483648
      %v530 = vxor.u32 %v516, 2147483648
      %v531 = vxor.u32 %v521, 2147483648
      %v532 = vmul.f32 %v524, 1.442695
      %v533 = vpow.pop %v532
      %v534 = vmul.f32 %v525, 1.442695
      %v535 = vpow.pop %v534
      %v536 = vmul.f32 %v526, 1.442695
      %v537 = vpow.pop %v536
      %v538 = vmul.f32 %v527, 1.442695
      %v539 = vpow.pop %v538
      %v540 = vmul.f32 %v528, 1.442695
      %v541 = vpow.pop %v540
      %v542 = vmul.f32 %v529, 1.442695
      %v543 = vpow.pop %v542
      %v544 = vmul.f32 %v530, 1.442695
      %v545 = vpow.pop %v544
      %v546 = vmul.f32 %v531, 1.442695
      %v547 = vpow.pop %v546
      %v548 = vadd.f32 %v533, 1.0
      %v549 = vadd.f32 %v535, 1.0
      %v550 = vadd.f32 %v537, 1.0
      %v551 = vadd.f32 %v539, 1.0
      %v552 = vadd.f32 %v541, 1.0
      %v553 = vadd.f32 %v543, 1.0
      %v554 = vadd.f32 %v545, 1.0
      %v555 = vadd.f32 %v547, 1.0
      %v556 = vrcp.pop %v548
      %v557 = vmul.f32 1.0, %v556
      %v558 = vrcp.pop %v549
      %v559 = vmul.f32 1.0, %v558
      %v560 = vrcp.pop %v550
      %v561 = vmul.f32 1.0, %v560
      %v562 = vrcp.pop %v551
      %v563 = vmul.f32 1.0, %v562
      %v564 = vrcp.pop %v552
      %v565 = vmul.f32 1.0, %v564
      %v566 = vrcp.pop %v553
      %v567 = vmul.f32 1.0, %v566
      %v568 = vrcp.pop %v554
      %v569 = vmul.f32 1.0, %v568
      %v570 = vrcp.pop %v555
      %v571 = vmul.f32 1.0, %v570
      %v572 = vmul.f32 %v486, %v557
      %v573 = vmul.f32 %v491, %v559
      %v574 = vmul.f32 %v496, %v561
      %v575 = vmul.f32 %v501, %v563
      %v576 = vmul.f32 %v506, %v565
      %v577 = vmul.f32 %v511, %v567
      %v578 = vmul.f32 %v516, %v569
      %v579 = vmul.f32 %v521, %v571
      %v580 = vld [vmem:[%s344] sm:$0xff]
      %v581 = vld [vmem:[%s344 + $0x8] sm:$0xff]
      %v582 = vld [vmem:[%s344 + $0x10] sm:$0xff]
      %v583 = vld [vmem:[%s344 + $0x18] sm:$0xff]
      %v584 = vld [vmem:[%s344 + $0x20] sm:$0xff]
      %v585 = vld [vmem:[%s344 + $0x28] sm:$0xff]
      %v586 = vld [vmem:[%s344 + $0x30] sm:$0xff]
      %v587 = vld [vmem:[%s344 + $0x38] sm:$0xff]
      %v588 = vld [vmem:[%s350] sm:$0xff]
      %v589 = vld [vmem:[%s350 + $0x8] sm:$0xff]
      %v590 = vld [vmem:[%s350 + $0x10] sm:$0xff]
      %v591 = vld [vmem:[%s350 + $0x18] sm:$0xff]
      %v592 = vld [vmem:[%s350 + $0x20] sm:$0xff]
      %v593 = vld [vmem:[%s350 + $0x28] sm:$0xff]
      %v594 = vld [vmem:[%s350 + $0x30] sm:$0xff]
      %v595 = vld [vmem:[%s350 + $0x38] sm:$0xff]
      %v596 = vmul.f32 %v572, %v580
      %v597 = vmul.f32 %v573, %v581
      %v598 = vmul.f32 %v574, %v582
      %v599 = vmul.f32 %v575, %v583
      %v600 = vmul.f32 %v576, %v584
      %v601 = vmul.f32 %v577, %v585
      %v602 = vmul.f32 %v578, %v586
      %v603 = vmul.f32 %v579, %v587
      %v604 = vmul.f32 %v572, %v588
      %v605 = vmul.f32 %v573, %v589
      %v606 = vmul.f32 %v574, %v590
      %v607 = vmul.f32 %v575, %v591
      %v608 = vmul.f32 %v576, %v592
      %v609 = vmul.f32 %v577, %v593
      %v610 = vmul.f32 %v578, %v594
      %v611 = vmul.f32 %v579, %v595
      %620 = vrot.lane.b32.xlu0 %v580, 32
      %v621 = vpop.permute.xlu0 %620
      %622 = vrot.lane.b32.xlu0 %v581, 32
      %v623 = vpop.permute.xlu0 %622
      %624 = vrot.lane.b32.xlu0 %v582, 32
      %v625 = vpop.permute.xlu0 %624
      %626 = vrot.lane.b32.xlu0 %v583, 32
      %v627 = vpop.permute.xlu0 %626
      %628 = vrot.lane.b32.xlu0 %v584, 32
      %v629 = vpop.permute.xlu0 %628
      %630 = vrot.lane.b32.xlu0 %v585, 32
      %v631 = vpop.permute.xlu0 %630
      %632 = vrot.lane.b32.xlu0 %v586, 32
      %v633 = vpop.permute.xlu0 %632
      %634 = vrot.lane.b32.xlu0 %v587, 32
      %v635 = vpop.permute.xlu0 %634
      %v644 = vmul.f32 %v572, %v621
      %v645 = vmul.f32 %v573, %v623
      %v646 = vmul.f32 %v574, %v625
      %v647 = vmul.f32 %v575, %v627
      %v648 = vmul.f32 %v576, %v629
      %v649 = vmul.f32 %v577, %v631
      %v650 = vmul.f32 %v578, %v633
      %v651 = vmul.f32 %v579, %v635
      %660 = vrot.lane.b32.xlu0 %v588, 32
      %v661 = vpop.permute.xlu0 %660
      %662 = vrot.lane.b32.xlu0 %v589, 32
      %v663 = vpop.permute.xlu0 %662
      %664 = vrot.lane.b32.xlu0 %v590, 32
      %v665 = vpop.permute.xlu0 %664
      %666 = vrot.lane.b32.xlu0 %v591, 32
      %v667 = vpop.permute.xlu0 %666
      %668 = vrot.lane.b32.xlu0 %v592, 32
      %v669 = vpop.permute.xlu0 %668
      %670 = vrot.lane.b32.xlu0 %v593, 32
      %v671 = vpop.permute.xlu0 %670
      %672 = vrot.lane.b32.xlu0 %v594, 32
      %v673 = vpop.permute.xlu0 %672
      %674 = vrot.lane.b32.xlu0 %v595, 32
      %v675 = vpop.permute.xlu0 %674
      %v684 = vmul.f32 %v572, %v661
      %v685 = vmul.f32 %v573, %v663
      %v686 = vmul.f32 %v574, %v665
      %v687 = vmul.f32 %v575, %v667
      %v688 = vmul.f32 %v576, %v669
      %v689 = vmul.f32 %v577, %v671
      %v690 = vmul.f32 %v578, %v673
      %v691 = vmul.f32 %v579, %v675
      %v692 = vlaneseq
      %v693 = vshrl.u32 %v692, 7
      %v694 = vadd.s32 %v693, 8
      %v695 = vadd.s32 %v693, 16
      %v696 = vadd.s32 %v693, 24
      %v697 = vadd.s32 %v693, 32
      %v698 = vadd.s32 %v693, 40
      %v699 = vadd.s32 %v693, 48
      %v700 = vadd.s32 %v693, 56
      %v701 = vlaneseq
      %v702 = vand.u32 %v701, 127
      %vm703 = vcmp.ge.s32.totalorder %v693, %v702
      %vm704 = vcmp.ge.s32.totalorder %v694, %v702
      %vm705 = vcmp.ge.s32.totalorder %v695, %v702
      %vm706 = vcmp.ge.s32.totalorder %v696, %v702
      %vm707 = vcmp.ge.s32.totalorder %v697, %v702
      %vm708 = vcmp.ge.s32.totalorder %v698, %v702
      %vm709 = vcmp.ge.s32.totalorder %v699, %v702
      %vm710 = vcmp.ge.s32.totalorder %v700, %v702
      %v711 = vld [vmem:[#allocation2] sm:$0xff]
      %v712 = vld [vmem:[#allocation3] sm:$0xff]
      %vm713 = vcmask 64512
      %v715 = vsel %vm713, %v604, 0
      %v718 = vsel %vm713, %v605, 0
      %v721 = vsel %vm713, %v606, 0
      %v724 = vsel %vm713, %v607, 0
      %v727 = vsel %vm713, %v608, 0
      %v730 = vsel %vm713, %v609, 0
      %v733 = vsel %vm713, %v610, 0
      %v736 = vsel %vm713, %v611, 0
      %738 = vmatprep.subr.mxu0 0.0
      %739 = vmatpush1.msra.mxu0 0.0
      %740 = vmatprep.subr.mxu0 0.0
      %741 = vmatpush1.msra.mxu0 0.0
      %742 = vmatprep.subr.mxu0 0.0
      %743 = vmatpush1.msra.mxu0 0.0
      %744 = vmatprep.subr.mxu0 0.0
      %745 = vmatpush1.msra.mxu0 0.0
      %746 = vmatprep.subr.mxu0 0.0
      %747 = vmatpush1.msra.mxu0 0.0
      %748 = vmatprep.subr.mxu0 0.0
      %749 = vmatpush1.msra.mxu0 0.0
      %750 = vmatprep.subr.mxu0 0.0
      %751 = vmatpush1.msra.mxu0 0.0
      %752 = vmatprep.subr.mxu0 0.0
      %753 = vmatpush1.msra.mxu0 0.0
      %754 = vmatprep.subr.mxu0 0.0
      %755 = vmatpush1.msra.mxu0 0.0
      %756 = vmatprep.subr.mxu0 0.0
      %757 = vmatpush1.msra.mxu0 0.0
      %758 = vmatprep.subr.mxu0 0.0
      %759 = vmatpush1.msra.mxu0 0.0
      %760 = vmatprep.subr.mxu0 0.0
      %761 = vmatpush1.msra.mxu0 0.0
      %762 = vmatprep.subr.mxu0 0.0
      %763 = vmatpush1.msra.mxu0 0.0
      %764 = vmatprep.subr.mxu0 0.0
      %765 = vmatpush1.msra.mxu0 0.0
      %766 = vmatprep.subr.mxu0 0.0
      %767 = vmatpush1.msra.mxu0 0.0
      %768 = vmatprep.subr.mxu0 0.0
      %769 = vmatpush1.msra.mxu0 %v712
      %770 = vmatprep.subr.mxu0 0.0
      %771 = vmatpush2.msra.mxu0 0.0
      %772 = vmatprep.subr.mxu0 0.0
      %773 = vmatpush2.msra.mxu0 0.0
      %774 = vmatprep.subr.mxu0 0.0
      %775 = vmatpush2.msra.mxu0 0.0
      %776 = vmatprep.subr.mxu0 0.0
      %777 = vmatpush2.msra.mxu0 0.0
      %778 = vmatprep.subr.mxu0 0.0
      %779 = vmatpush2.msra.mxu0 0.0
      %780 = vmatprep.subr.mxu0 0.0
      %781 = vmatpush2.msra.mxu0 0.0
      %782 = vmatprep.subr.mxu0 0.0
      %783 = vmatpush2.msra.mxu0 0.0
      %784 = vmatprep.subr.mxu0 0.0
      %785 = vmatpush2.msra.mxu0 0.0
      %786 = vmatprep.subr.mxu0 0.0
      %787 = vmatpush2.msra.mxu0 0.0
      %788 = vmatprep.subr.mxu0 0.0
      %789 = vmatpush2.msra.mxu0 0.0
      %790 = vmatprep.subr.mxu0 0.0
      %791 = vmatpush2.msra.mxu0 0.0
      %792 = vmatprep.subr.mxu0 0.0
      %793 = vmatpush2.msra.mxu0 0.0
      %794 = vmatprep.subr.mxu0 0.0
      %795 = vmatpush2.msra.mxu0 0.0
      %796 = vmatprep.subr.mxu0 0.0
      %797 = vmatpush2.msra.mxu0 0.0
      %798 = vmatprep.subr.mxu0 0.0
      %799 = vmatpush2.msra.mxu0 0.0
      %800 = vmatprep.subr.mxu0 0.0
      %801 = vmatpush2.msra.mxu0 0.0
      %802 = vmatprep.mubr.f32.mxu0 0.0
      %803 = vmatmul.mubr.f32.gmra.mxu0 %v715
      %v804 = vpop.f32.mrf.mxu0
      %v805 = vadd.f32 0.0, %v804
      %v806 = vpop.f32.mrf.mxu0
      %807 = vmatprep.mubr.f32.mxu0 0.0
      %808 = vmatmul.mubr.f32.gmra.mxu0 %v718
      %v809 = vpop.f32.mrf.mxu0
      %v810 = vadd.f32 0.0, %v809
      %v811 = vpop.f32.mrf.mxu0
      %812 = vmatprep.mubr.f32.mxu0 0.0
      %813 = vmatmul.mubr.f32.gmra.mxu0 %v721
      %v814 = vpop.f32.mrf.mxu0
      %v815 = vadd.f32 0.0, %v814
      %v816 = vpop.f32.mrf.mxu0
      %817 = vmatprep.mubr.f32.mxu0 0.0
      %818 = vmatmul.mubr.f32.gmra.mxu0 %v724
      %v819 = vpop.f32.mrf.mxu0
      %v820 = vadd.f32 0.0, %v819
      %v821 = vpop.f32.mrf.mxu0
      %822 = vmatprep.mubr.f32.mxu0 0.0
      %823 = vmatmul.mubr.f32.gmra.mxu0 %v727
      %v824 = vpop.f32.mrf.mxu0
      %v825 = vadd.f32 0.0, %v824
      %v826 = vpop.f32.mrf.mxu0
      %827 = vmatprep.mubr.f32.mxu0 0.0
      %828 = vmatmul.mubr.f32.gmra.mxu0 %v730
      %v829 = vpop.f32.mrf.mxu0
      %v830 = vadd.f32 0.0, %v829
      %v831 = vpop.f32.mrf.mxu0
      %832 = vmatprep.mubr.f32.mxu0 0.0
      %833 = vmatmul.mubr.f32.gmra.mxu0 %v733
      %v834 = vpop.f32.mrf.mxu0
      %v835 = vadd.f32 0.0, %v834
      %v836 = vpop.f32.mrf.mxu0
      %837 = vmatprep.mubr.f32.mxu0 0.0
      %838 = vmatmul.mubr.f32.gmra.mxu0 %v736
      %v839 = vpop.f32.mrf.mxu0
      %v840 = vadd.f32 0.0, %v839
      %v841 = vpop.f32.mrf.mxu0
      %842 = vdwg.mxu0
      %v844 = vsel %vm713, %v596, 0
      %v847 = vsel %vm713, %v597, 0
      %v850 = vsel %vm713, %v598, 0
      %v853 = vsel %vm713, %v599, 0
      %v856 = vsel %vm713, %v600, 0
      %v859 = vsel %vm713, %v601, 0
      %v862 = vsel %vm713, %v602, 0
      %v865 = vsel %vm713, %v603, 0
      %867 = vmatprep.subr.mxu0 0.0
      %868 = vmatpush1.msra.mxu0 0.0
      %869 = vmatprep.subr.mxu0 0.0
      %870 = vmatpush1.msra.mxu0 0.0
      %871 = vmatprep.subr.mxu0 0.0
      %872 = vmatpush1.msra.mxu0 0.0
      %873 = vmatprep.subr.mxu0 0.0
      %874 = vmatpush1.msra.mxu0 0.0
      %875 = vmatprep.subr.mxu0 0.0
      %876 = vmatpush1.msra.mxu0 0.0
      %877 = vmatprep.subr.mxu0 0.0
      %878 = vmatpush1.msra.mxu0 0.0
      %879 = vmatprep.subr.mxu0 0.0
      %880 = vmatpush1.msra.mxu0 0.0
      %881 = vmatprep.subr.mxu0 0.0
      %882 = vmatpush1.msra.mxu0 0.0
      %883 = vmatprep.subr.mxu0 0.0
      %884 = vmatpush1.msra.mxu0 0.0
      %885 = vmatprep.subr.mxu0 0.0
      %886 = vmatpush1.msra.mxu0 0.0
      %887 = vmatprep.subr.mxu0 0.0
      %888 = vmatpush1.msra.mxu0 0.0
      %889 = vmatprep.subr.mxu0 0.0
      %890 = vmatpush1.msra.mxu0 0.0
      %891 = vmatprep.subr.mxu0 0.0
      %892 = vmatpush1.msra.mxu0 0.0
      %893 = vmatprep.subr.mxu0 0.0
      %894 = vmatpush1.msra.mxu0 0.0
      %895 = vmatprep.subr.mxu0 0.0
      %896 = vmatpush1.msra.mxu0 0.0
      %897 = vmatprep.subr.mxu0 0.0
      %898 = vmatpush1.msra.mxu0 %v711
      %899 = vmatprep.subr.mxu0 0.0
      %900 = vmatpush2.msra.mxu0 0.0
      %901 = vmatprep.subr.mxu0 0.0
      %902 = vmatpush2.msra.mxu0 0.0
      %903 = vmatprep.subr.mxu0 0.0
      %904 = vmatpush2.msra.mxu0 0.0
      %905 = vmatprep.subr.mxu0 0.0
      %906 = vmatpush2.msra.mxu0 0.0
      %907 = vmatprep.subr.mxu0 0.0
      %908 = vmatpush2.msra.mxu0 0.0
      %909 = vmatprep.subr.mxu0 0.0
      %910 = vmatpush2.msra.mxu0 0.0
      %911 = vmatprep.subr.mxu0 0.0
      %912 = vmatpush2.msra.mxu0 0.0
      %913 = vmatprep.subr.mxu0 0.0
      %914 = vmatpush2.msra.mxu0 0.0
      %915 = vmatprep.subr.mxu0 0.0
      %916 = vmatpush2.msra.mxu0 0.0
      %917 = vmatprep.subr.mxu0 0.0
      %918 = vmatpush2.msra.mxu0 0.0
      %919 = vmatprep.subr.mxu0 0.0
      %920 = vmatpush2.msra.mxu0 0.0
      %921 = vmatprep.subr.mxu0 0.0
      %922 = vmatpush2.msra.mxu0 0.0
      %923 = vmatprep.subr.mxu0 0.0
      %924 = vmatpush2.msra.mxu0 0.0
      %925 = vmatprep.subr.mxu0 0.0
      %926 = vmatpush2.msra.mxu0 0.0
      %927 = vmatprep.subr.mxu0 0.0
      %928 = vmatpush2.msra.mxu0 0.0
      %929 = vmatprep.subr.mxu0 0.0
      %930 = vmatpush2.msra.mxu0 0.0
      %931 = vmatprep.mubr.f32.mxu0 0.0
      %932 = vmatmul.mubr.f32.gmra.mxu0 %v844
      %v933 = vpop.f32.mrf.mxu0
      %v934 = vadd.f32 %v805, %v933
      %v935 = vpop.f32.mrf.mxu0
      %936 = vmatprep.mubr.f32.mxu0 0.0
      %937 = vmatmul.mubr.f32.gmra.mxu0 %v847
      %v938 = vpop.f32.mrf.mxu0
      %v939 = vadd.f32 %v810, %v938
      %v940 = vpop.f32.mrf.mxu0
      %941 = vmatprep.mubr.f32.mxu0 0.0
      %942 = vmatmul.mubr.f32.gmra.mxu0 %v850
      %v943 = vpop.f32.mrf.mxu0
      %v944 = vadd.f32 %v815, %v943
      %v945 = vpop.f32.mrf.mxu0
      %946 = vmatprep.mubr.f32.mxu0 0.0
      %947 = vmatmul.mubr.f32.gmra.mxu0 %v853
      %v948 = vpop.f32.mrf.mxu0
      %v949 = vadd.f32 %v820, %v948
      %v950 = vpop.f32.mrf.mxu0
      %951 = vmatprep.mubr.f32.mxu0 0.0
      %952 = vmatmul.mubr.f32.gmra.mxu0 %v856
      %v953 = vpop.f32.mrf.mxu0
      %v954 = vadd.f32 %v825, %v953
      %v955 = vpop.f32.mrf.mxu0
      %956 = vmatprep.mubr.f32.mxu0 0.0
      %957 = vmatmul.mubr.f32.gmra.mxu0 %v859
      %v958 = vpop.f32.mrf.mxu0
      %v959 = vadd.f32 %v830, %v958
      %v960 = vpop.f32.mrf.mxu0
      %961 = vmatprep.mubr.f32.mxu0 0.0
      %962 = vmatmul.mubr.f32.gmra.mxu0 %v862
      %v963 = vpop.f32.mrf.mxu0
      %v964 = vadd.f32 %v835, %v963
      %v965 = vpop.f32.mrf.mxu0
      %966 = vmatprep.mubr.f32.mxu0 0.0
      %967 = vmatmul.mubr.f32.gmra.mxu0 %v865
      %v968 = vpop.f32.mrf.mxu0
      %v969 = vadd.f32 %v840, %v968
      %v970 = vpop.f32.mrf.mxu0
      %971 = vdwg.mxu0
      %980 = vrot.lane.b32.xlu0 %v684, 96
      %v981 = vpop.permute.xlu0 %980
      %982 = vrot.lane.b32.xlu0 %v685, 96
      %v983 = vpop.permute.xlu0 %982
      %984 = vrot.lane.b32.xlu0 %v686, 96
      %v985 = vpop.permute.xlu0 %984
      %986 = vrot.lane.b32.xlu0 %v687, 96
      %v987 = vpop.permute.xlu0 %986
      %988 = vrot.lane.b32.xlu0 %v688, 96
      %v989 = vpop.permute.xlu0 %988
      %990 = vrot.lane.b32.xlu0 %v689, 96
      %v991 = vpop.permute.xlu0 %990
      %992 = vrot.lane.b32.xlu0 %v690, 96
      %v993 = vpop.permute.xlu0 %992
      %994 = vrot.lane.b32.xlu0 %v691, 96
      %v995 = vpop.permute.xlu0 %994
      %v996 = vsel %vm713, %v981, 0
      %v998 = vsel %vm713, %v983, 0
      %v1000 = vsel %vm713, %v985, 0
      %v1002 = vsel %vm713, %v987, 0
      %v1004 = vsel %vm713, %v989, 0
      %v1006 = vsel %vm713, %v991, 0
      %v1008 = vsel %vm713, %v993, 0
      %v1010 = vsel %vm713, %v995, 0
      %1012 = vmatprep.subr.mxu0 0.0
      %1013 = vmatpush1.xpose.msra.mxu0 0.0
      %1014 = vmatprep.subr.mxu0 0.0
      %1015 = vmatpush1.xpose.msra.mxu0 0.0
      %1016 = vmatprep.subr.mxu0 0.0
      %1017 = vmatpush1.xpose.msra.mxu0 0.0
      %1018 = vmatprep.subr.mxu0 0.0
      %1019 = vmatpush1.xpose.msra.mxu0 0.0
      %1020 = vmatprep.subr.mxu0 0.0
      %1021 = vmatpush1.xpose.msra.mxu0 0.0
      %1022 = vmatprep.subr.mxu0 0.0
      %1023 = vmatpush1.xpose.msra.mxu0 0.0
      %1024 = vmatprep.subr.mxu0 0.0
      %1025 = vmatpush1.xpose.msra.mxu0 0.0
      %1026 = vmatprep.subr.mxu0 0.0
      %1027 = vmatpush1.xpose.msra.mxu0 0.0
      %1028 = vmatprep.subr.mxu0 0.0
      %1029 = vmatpush1.xpose.msra.mxu0 %v1010
      %1030 = vmatprep.subr.mxu0 0.0
      %1031 = vmatpush1.xpose.msra.mxu0 %v1008
      %1032 = vmatprep.subr.mxu0 0.0
      %1033 = vmatpush1.xpose.msra.mxu0 %v1006
      %1034 = vmatprep.subr.mxu0 0.0
      %1035 = vmatpush1.xpose.msra.mxu0 %v1004
      %1036 = vmatprep.subr.mxu0 0.0
      %1037 = vmatpush1.xpose.msra.mxu0 %v1002
      %1038 = vmatprep.subr.mxu0 0.0
      %1039 = vmatpush1.xpose.msra.mxu0 %v1000
      %1040 = vmatprep.subr.mxu0 0.0
      %1041 = vmatpush1.xpose.msra.mxu0 %v998
      %1042 = vmatprep.subr.mxu0 0.0
      %1043 = vmatpush1.xpose.msra.mxu0 %v996
      %1044 = vmatprep.subr.mxu0 0.0
      %1045 = vmatpush2.xpose.msra.mxu0 0.0
      %1046 = vmatprep.subr.mxu0 0.0
      %1047 = vmatpush2.xpose.msra.mxu0 0.0
      %1048 = vmatprep.subr.mxu0 0.0
      %1049 = vmatpush2.xpose.msra.mxu0 0.0
      %1050 = vmatprep.subr.mxu0 0.0
      %1051 = vmatpush2.xpose.msra.mxu0 0.0
      %1052 = vmatprep.subr.mxu0 0.0
      %1053 = vmatpush2.xpose.msra.mxu0 0.0
      %1054 = vmatprep.subr.mxu0 0.0
      %1055 = vmatpush2.xpose.msra.mxu0 0.0
      %1056 = vmatprep.subr.mxu0 0.0
      %1057 = vmatpush2.xpose.msra.mxu0 0.0
      %1058 = vmatprep.subr.mxu0 0.0
      %1059 = vmatpush2.xpose.msra.mxu0 0.0
      %1060 = vmatprep.subr.mxu0 0.0
      %1061 = vmatpush2.xpose.msra.mxu0 0.0
      %1062 = vmatprep.subr.mxu0 0.0
      %1063 = vmatpush2.xpose.msra.mxu0 0.0
      %1064 = vmatprep.subr.mxu0 0.0
      %1065 = vmatpush2.xpose.msra.mxu0 0.0
      %1066 = vmatprep.subr.mxu0 0.0
      %1067 = vmatpush2.xpose.msra.mxu0 0.0
      %1068 = vmatprep.subr.mxu0 0.0
      %1069 = vmatpush2.xpose.msra.mxu0 0.0
      %1070 = vmatprep.subr.mxu0 0.0
      %1071 = vmatpush2.xpose.msra.mxu0 0.0
      %1072 = vmatprep.subr.mxu0 0.0
      %1073 = vmatpush2.xpose.msra.mxu0 0.0
      %1074 = vmatprep.subr.mxu0 0.0
      %1075 = vmatpush2.xpose.msra.mxu0 0.0
      %1076 = vmatprep.mubr.f32.mxu0 0.0
      %1077 = vmatmul.mubr.f32.gmra.mxu0 %v715
      %v1078 = vpop.f32.mrf.mxu0
      %v1079 = vadd.f32 0.0, %v1078
      %v1080 = vpop.f32.mrf.mxu0
      %1081 = vmatprep.mubr.f32.mxu0 0.0
      %1082 = vmatmul.mubr.f32.gmra.mxu0 %v718
      %v1083 = vpop.f32.mrf.mxu0
      %v1084 = vadd.f32 0.0, %v1083
      %v1085 = vpop.f32.mrf.mxu0
      %1086 = vmatprep.mubr.f32.mxu0 0.0
      %1087 = vmatmul.mubr.f32.gmra.mxu0 %v721
      %v1088 = vpop.f32.mrf.mxu0
      %v1089 = vadd.f32 0.0, %v1088
      %v1090 = vpop.f32.mrf.mxu0
      %1091 = vmatprep.mubr.f32.mxu0 0.0
      %1092 = vmatmul.mubr.f32.gmra.mxu0 %v724
      %v1093 = vpop.f32.mrf.mxu0
      %v1094 = vadd.f32 0.0, %v1093
      %v1095 = vpop.f32.mrf.mxu0
      %1096 = vmatprep.mubr.f32.mxu0 0.0
      %1097 = vmatmul.mubr.f32.gmra.mxu0 %v727
      %v1098 = vpop.f32.mrf.mxu0
      %v1099 = vadd.f32 0.0, %v1098
      %v1100 = vpop.f32.mrf.mxu0
      %1101 = vmatprep.mubr.f32.mxu0 0.0
      %1102 = vmatmul.mubr.f32.gmra.mxu0 %v730
      %v1103 = vpop.f32.mrf.mxu0
      %v1104 = vadd.f32 0.0, %v1103
      %v1105 = vpop.f32.mrf.mxu0
      %1106 = vmatprep.mubr.f32.mxu0 0.0
      %1107 = vmatmul.mubr.f32.gmra.mxu0 %v733
      %v1108 = vpop.f32.mrf.mxu0
      %v1109 = vadd.f32 0.0, %v1108
      %v1110 = vpop.f32.mrf.mxu0
      %1111 = vmatprep.mubr.f32.mxu0 0.0
      %1112 = vmatmul.mubr.f32.gmra.mxu0 %v736
      %v1113 = vpop.f32.mrf.mxu0
      %v1114 = vadd.f32 0.0, %v1113
      %v1115 = vpop.f32.mrf.mxu0
      %1116 = vdwg.mxu0
      %1125 = vrot.lane.b32.xlu0 %v644, 96
      %v1126 = vpop.permute.xlu0 %1125
      %1127 = vrot.lane.b32.xlu0 %v645, 96
      %v1128 = vpop.permute.xlu0 %1127
      %1129 = vrot.lane.b32.xlu0 %v646, 96
      %v1130 = vpop.permute.xlu0 %1129
      %1131 = vrot.lane.b32.xlu0 %v647, 96
      %v1132 = vpop.permute.xlu0 %1131
      %1133 = vrot.lane.b32.xlu0 %v648, 96
      %v1134 = vpop.permute.xlu0 %1133
      %1135 = vrot.lane.b32.xlu0 %v649, 96
      %v1136 = vpop.permute.xlu0 %1135
      %1137 = vrot.lane.b32.xlu0 %v650, 96
      %v1138 = vpop.permute.xlu0 %1137
      %1139 = vrot.lane.b32.xlu0 %v651, 96
      %v1140 = vpop.permute.xlu0 %1139
      %v1141 = vsel %vm713, %v1126, 0
      %v1143 = vsel %vm713, %v1128, 0
      %v1145 = vsel %vm713, %v1130, 0
      %v1147 = vsel %vm713, %v1132, 0
      %v1149 = vsel %vm713, %v1134, 0
      %v1151 = vsel %vm713, %v1136, 0
      %v1153 = vsel %vm713, %v1138, 0
      %v1155 = vsel %vm713, %v1140, 0
      %1157 = vmatprep.subr.mxu0 0.0
      %1158 = vmatpush1.xpose.msra.mxu0 0.0
      %1159 = vmatprep.subr.mxu0 0.0
      %1160 = vmatpush1.xpose.msra.mxu0 0.0
      %1161 = vmatprep.subr.mxu0 0.0
      %1162 = vmatpush1.xpose.msra.mxu0 0.0
      %1163 = vmatprep.subr.mxu0 0.0
      %1164 = vmatpush1.xpose.msra.mxu0 0.0
      %1165 = vmatprep.subr.mxu0 0.0
      %1166 = vmatpush1.xpose.msra.mxu0 0.0
      %1167 = vmatprep.subr.mxu0 0.0
      %1168 = vmatpush1.xpose.msra.mxu0 0.0
      %1169 = vmatprep.subr.mxu0 0.0
      %1170 = vmatpush1.xpose.msra.mxu0 0.0
      %1171 = vmatprep.subr.mxu0 0.0
      %1172 = vmatpush1.xpose.msra.mxu0 0.0
      %1173 = vmatprep.subr.mxu0 0.0
      %1174 = vmatpush1.xpose.msra.mxu0 %v1155
      %1175 = vmatprep.subr.mxu0 0.0
      %1176 = vmatpush1.xpose.msra.mxu0 %v1153
      %1177 = vmatprep.subr.mxu0 0.0
      %1178 = vmatpush1.xpose.msra.mxu0 %v1151
      %1179 = vmatprep.subr.mxu0 0.0
      %1180 = vmatpush1.xpose.msra.mxu0 %v1149
      %1181 = vmatprep.subr.mxu0 0.0
      %1182 = vmatpush1.xpose.msra.mxu0 %v1147
      %1183 = vmatprep.subr.mxu0 0.0
      %1184 = vmatpush1.xpose.msra.mxu0 %v1145
      %1185 = vmatprep.subr.mxu0 0.0
      %1186 = vmatpush1.xpose.msra.mxu0 %v1143
      %1187 = vmatprep.subr.mxu0 0.0
      %1188 = vmatpush1.xpose.msra.mxu0 %v1141
      %1189 = vmatprep.subr.mxu0 0.0
      %1190 = vmatpush2.xpose.msra.mxu0 0.0
      %1191 = vmatprep.subr.mxu0 0.0
      %1192 = vmatpush2.xpose.msra.mxu0 0.0
      %1193 = vmatprep.subr.mxu0 0.0
      %1194 = vmatpush2.xpose.msra.mxu0 0.0
      %1195 = vmatprep.subr.mxu0 0.0
      %1196 = vmatpush2.xpose.msra.mxu0 0.0
      %1197 = vmatprep.subr.mxu0 0.0
      %1198 = vmatpush2.xpose.msra.mxu0 0.0
      %1199 = vmatprep.subr.mxu0 0.0
      %1200 = vmatpush2.xpose.msra.mxu0 0.0
      %1201 = vmatprep.subr.mxu0 0.0
      %1202 = vmatpush2.xpose.msra.mxu0 0.0
      %1203 = vmatprep.subr.mxu0 0.0
      %1204 = vmatpush2.xpose.msra.mxu0 0.0
      %1205 = vmatprep.subr.mxu0 0.0
      %1206 = vmatpush2.xpose.msra.mxu0 0.0
      %1207 = vmatprep.subr.mxu0 0.0
      %1208 = vmatpush2.xpose.msra.mxu0 0.0
      %1209 = vmatprep.subr.mxu0 0.0
      %1210 = vmatpush2.xpose.msra.mxu0 0.0
      %1211 = vmatprep.subr.mxu0 0.0
      %1212 = vmatpush2.xpose.msra.mxu0 0.0
      %1213 = vmatprep.subr.mxu0 0.0
      %1214 = vmatpush2.xpose.msra.mxu0 0.0
      %1215 = vmatprep.subr.mxu0 0.0
      %1216 = vmatpush2.xpose.msra.mxu0 0.0
      %1217 = vmatprep.subr.mxu0 0.0
      %1218 = vmatpush2.xpose.msra.mxu0 0.0
      %1219 = vmatprep.subr.mxu0 0.0
      %1220 = vmatpush2.xpose.msra.mxu0 0.0
      %1221 = vmatprep.mubr.f32.mxu0 0.0
      %1222 = vmatmul.mubr.f32.gmra.mxu0 %v844
      %v1223 = vpop.f32.mrf.mxu0
      %v1224 = vadd.f32 %v1079, %v1223
      %v1225 = vpop.f32.mrf.mxu0
      %1226 = vmatprep.mubr.f32.mxu0 0.0
      %1227 = vmatmul.mubr.f32.gmra.mxu0 %v847
      %v1228 = vpop.f32.mrf.mxu0
      %v1229 = vadd.f32 %v1084, %v1228
      %v1230 = vpop.f32.mrf.mxu0
      %1231 = vmatprep.mubr.f32.mxu0 0.0
      %1232 = vmatmul.mubr.f32.gmra.mxu0 %v850
      %v1233 = vpop.f32.mrf.mxu0
      %v1234 = vadd.f32 %v1089, %v1233
      %v1235 = vpop.f32.mrf.mxu0
      %1236 = vmatprep.mubr.f32.mxu0 0.0
      %1237 = vmatmul.mubr.f32.gmra.mxu0 %v853
      %v1238 = vpop.f32.mrf.mxu0
      %v1239 = vadd.f32 %v1094, %v1238
      %v1240 = vpop.f32.mrf.mxu0
      %1241 = vmatprep.mubr.f32.mxu0 0.0
      %1242 = vmatmul.mubr.f32.gmra.mxu0 %v856
      %v1243 = vpop.f32.mrf.mxu0
      %v1244 = vadd.f32 %v1099, %v1243
      %v1245 = vpop.f32.mrf.mxu0
      %1246 = vmatprep.mubr.f32.mxu0 0.0
      %1247 = vmatmul.mubr.f32.gmra.mxu0 %v859
      %v1248 = vpop.f32.mrf.mxu0
      %v1249 = vadd.f32 %v1104, %v1248
      %v1250 = vpop.f32.mrf.mxu0
      %1251 = vmatprep.mubr.f32.mxu0 0.0
      %1252 = vmatmul.mubr.f32.gmra.mxu0 %v862
      %v1253 = vpop.f32.mrf.mxu0
      %v1254 = vadd.f32 %v1109, %v1253
      %v1255 = vpop.f32.mrf.mxu0
      %1256 = vmatprep.mubr.f32.mxu0 0.0
      %1257 = vmatmul.mubr.f32.gmra.mxu0 %v865
      %v1258 = vpop.f32.mrf.mxu0
      %v1259 = vadd.f32 %v1114, %v1258
      %v1260 = vpop.f32.mrf.mxu0
      %1261 = vdwg.mxu0
      %v1262 = vsel %vm703, %v1224, 0.0
      %v1263 = vsel %vm704, %v1229, 0.0
      %v1264 = vsel %vm705, %v1234, 0.0
      %v1265 = vsel %vm706, %v1239, 0.0
      %v1266 = vsel %vm707, %v1244, 0.0
      %v1267 = vsel %vm708, %v1249, 0.0
      %v1268 = vsel %vm709, %v1254, 0.0
      %v1269 = vsel %vm710, %v1259, 0.0
      %1278 = vrot.lane.b32.xlu0 %v486, 64
      %v1279 = vpop.permute.xlu0 %1278
      %1280 = vrot.lane.b32.xlu0 %v491, 64
      %v1281 = vpop.permute.xlu0 %1280
      %1282 = vrot.lane.b32.xlu0 %v496, 64
      %v1283 = vpop.permute.xlu0 %1282
      %1284 = vrot.lane.b32.xlu0 %v501, 64
      %v1285 = vpop.permute.xlu0 %1284
      %1286 = vrot.lane.b32.xlu0 %v506, 64
      %v1287 = vpop.permute.xlu0 %1286
      %1288 = vrot.lane.b32.xlu0 %v511, 64
      %v1289 = vpop.permute.xlu0 %1288
      %1290 = vrot.lane.b32.xlu0 %v516, 64
      %v1291 = vpop.permute.xlu0 %1290
      %1292 = vrot.lane.b32.xlu0 %v521, 64
      %v1293 = vpop.permute.xlu0 %1292
      %vm1302 = vcmask 523264
      %v1304 = vsel %vm1302, %v1262, 0
      %v1307 = vsel %vm1302, %v1263, 0
      %v1310 = vsel %vm1302, %v1264, 0
      %v1313 = vsel %vm1302, %v1265, 0
      %v1316 = vsel %vm1302, %v1266, 0
      %v1319 = vsel %vm1302, %v1267, 0
      %v1322 = vsel %vm1302, %v1268, 0
      %v1325 = vsel %vm1302, %v1269, 0
      %1327 = vmatprep.subr.mxu0 0.0
      %1328 = vmatpush1.msra.mxu0 0.0
      %1329 = vmatprep.subr.mxu0 0.0
      %1330 = vmatpush1.msra.mxu0 0.0
      %1331 = vmatprep.subr.mxu0 0.0
      %1332 = vmatpush1.msra.mxu0 0.0
      %1333 = vmatprep.subr.mxu0 0.0
      %1334 = vmatpush1.msra.mxu0 0.0
      %1335 = vmatprep.subr.mxu0 0.0
      %1336 = vmatpush1.msra.mxu0 0.0
      %1337 = vmatprep.subr.mxu0 0.0
      %1338 = vmatpush1.msra.mxu0 0.0
      %1339 = vmatprep.subr.mxu0 0.0
      %1340 = vmatpush1.msra.mxu0 0.0
      %1341 = vmatprep.subr.mxu0 0.0
      %1342 = vmatpush1.msra.mxu0 0.0
      %1343 = vmatprep.subr.mxu0 0.0
      %1344 = vmatpush1.msra.mxu0 %v1293
      %1345 = vmatprep.subr.mxu0 0.0
      %1346 = vmatpush1.msra.mxu0 %v1291
      %1347 = vmatprep.subr.mxu0 0.0
      %1348 = vmatpush1.msra.mxu0 %v1289
      %1349 = vmatprep.subr.mxu0 0.0
      %1350 = vmatpush1.msra.mxu0 %v1287
      %1351 = vmatprep.subr.mxu0 0.0
      %1352 = vmatpush1.msra.mxu0 %v1285
      %1353 = vmatprep.subr.mxu0 0.0
      %1354 = vmatpush1.msra.mxu0 %v1283
      %1355 = vmatprep.subr.mxu0 0.0
      %1356 = vmatpush1.msra.mxu0 %v1281
      %1357 = vmatprep.subr.mxu0 0.0
      %1358 = vmatpush1.msra.mxu0 %v1279
      %1359 = vmatprep.subr.mxu0 0.0
      %1360 = vmatpush2.msra.mxu0 0.0
      %1361 = vmatprep.subr.mxu0 0.0
      %1362 = vmatpush2.msra.mxu0 0.0
      %1363 = vmatprep.subr.mxu0 0.0
      %1364 = vmatpush2.msra.mxu0 0.0
      %1365 = vmatprep.subr.mxu0 0.0
      %1366 = vmatpush2.msra.mxu0 0.0
      %1367 = vmatprep.subr.mxu0 0.0
      %1368 = vmatpush2.msra.mxu0 0.0
      %1369 = vmatprep.subr.mxu0 0.0
      %1370 = vmatpush2.msra.mxu0 0.0
      %1371 = vmatprep.subr.mxu0 0.0
      %1372 = vmatpush2.msra.mxu0 0.0
      %1373 = vmatprep.subr.mxu0 0.0
      %1374 = vmatpush2.msra.mxu0 0.0
      %1375 = vmatprep.subr.mxu0 0.0
      %1376 = vmatpush2.msra.mxu0 0.0
      %1377 = vmatprep.subr.mxu0 0.0
      %1378 = vmatpush2.msra.mxu0 0.0
      %1379 = vmatprep.subr.mxu0 0.0
      %1380 = vmatpush2.msra.mxu0 0.0
      %1381 = vmatprep.subr.mxu0 0.0
      %1382 = vmatpush2.msra.mxu0 0.0
      %1383 = vmatprep.subr.mxu0 0.0
      %1384 = vmatpush2.msra.mxu0 0.0
      %1385 = vmatprep.subr.mxu0 0.0
      %1386 = vmatpush2.msra.mxu0 0.0
      %1387 = vmatprep.subr.mxu0 0.0
      %1388 = vmatpush2.msra.mxu0 0.0
      %1389 = vmatprep.subr.mxu0 0.0
      %1390 = vmatpush2.msra.mxu0 0.0
      %1391 = vmatprep.mubr.f32.mxu0 0.0
      %1392 = vmatmul.mubr.f32.gmra.mxu0 %v1304
      %v1393 = vpop.f32.mrf.mxu0
      %v1394 = vadd.f32 0.0, %v1393
      %v1395 = vpop.f32.mrf.mxu0
      %1396 = vmatprep.mubr.f32.mxu0 0.0
      %1397 = vmatmul.mubr.f32.gmra.mxu0 %v1307
      %v1398 = vpop.f32.mrf.mxu0
      %v1399 = vadd.f32 0.0, %v1398
      %v1400 = vpop.f32.mrf.mxu0
      %1401 = vmatprep.mubr.f32.mxu0 0.0
      %1402 = vmatmul.mubr.f32.gmra.mxu0 %v1310
      %v1403 = vpop.f32.mrf.mxu0
      %v1404 = vadd.f32 0.0, %v1403
      %v1405 = vpop.f32.mrf.mxu0
      %1406 = vmatprep.mubr.f32.mxu0 0.0
      %1407 = vmatmul.mubr.f32.gmra.mxu0 %v1313
      %v1408 = vpop.f32.mrf.mxu0
      %v1409 = vadd.f32 0.0, %v1408
      %v1410 = vpop.f32.mrf.mxu0
      %1411 = vmatprep.mubr.f32.mxu0 0.0
      %1412 = vmatmul.mubr.f32.gmra.mxu0 %v1316
      %v1413 = vpop.f32.mrf.mxu0
      %v1414 = vadd.f32 0.0, %v1413
      %v1415 = vpop.f32.mrf.mxu0
      %1416 = vmatprep.mubr.f32.mxu0 0.0
      %1417 = vmatmul.mubr.f32.gmra.mxu0 %v1319
      %v1418 = vpop.f32.mrf.mxu0
      %v1419 = vadd.f32 0.0, %v1418
      %v1420 = vpop.f32.mrf.mxu0
      %1421 = vmatprep.mubr.f32.mxu0 0.0
      %1422 = vmatmul.mubr.f32.gmra.mxu0 %v1322
      %v1423 = vpop.f32.mrf.mxu0
      %v1424 = vadd.f32 0.0, %v1423
      %v1425 = vpop.f32.mrf.mxu0
      %1426 = vmatprep.mubr.f32.mxu0 0.0
      %1427 = vmatmul.mubr.f32.gmra.mxu0 %v1325
      %v1428 = vpop.f32.mrf.mxu0
      %v1429 = vadd.f32 0.0, %v1428
      %v1430 = vpop.f32.mrf.mxu0
      %1431 = vdwg.mxu0
      %v1432 = vadd.f32 %v934, %v1394
      %v1433 = vadd.f32 %v939, %v1399
      %v1434 = vadd.f32 %v944, %v1404
      %v1435 = vadd.f32 %v949, %v1409
      %v1436 = vadd.f32 %v954, %v1414
      %v1437 = vadd.f32 %v959, %v1419
      %v1438 = vadd.f32 %v964, %v1424
      %v1439 = vadd.f32 %v969, %v1429
      %1440 = vst.msk [vmem:[#allocation4] sm:$0xff] %vm713, %v1432
      %1441 = vst.msk [vmem:[#allocation4 + $0x8] sm:$0xff] %vm713, %v1433
      %1442 = vst.msk [vmem:[#allocation4 + $0x10] sm:$0xff] %vm713, %v1434
      %1443 = vst.msk [vmem:[#allocation4 + $0x18] sm:$0xff] %vm713, %v1435
      %1444 = vst.msk [vmem:[#allocation4 + $0x20] sm:$0xff] %vm713, %v1436
      %1445 = vst.msk [vmem:[#allocation4 + $0x28] sm:$0xff] %vm713, %v1437
      %1446 = vst.msk [vmem:[#allocation4 + $0x30] sm:$0xff] %vm713, %v1438
      %1447 = vst.msk [vmem:[#allocation4 + $0x38] sm:$0xff] %vm713, %v1439
      %1456 = vxpose.xlu0.b32.start [1/16] %v1126, 128
      %1457 = vxpose.xlu0.b32.cont [2/16] %v1128, 128
      %1458 = vxpose.xlu0.b32.cont [3/16] %v1130, 128
      %1459 = vxpose.xlu0.b32.cont [4/16] %v1132, 128
      %1460 = vxpose.xlu0.b32.cont [5/16] %v1134, 128
      %1461 = vxpose.xlu0.b32.cont [6/16] %v1136, 128
      %1462 = vxpose.xlu0.b32.cont [7/16] %v1138, 128
      %1463 = vxpose.xlu0.b32.cont [8/16] %v1140, 128
      %1464 = vxpose.xlu0.b32.cont [9/16] 0.0, 128
      %1465 = vxpose.xlu0.b32.cont [10/16] 0.0, 128
      %1466 = vxpose.xlu0.b32.cont [11/16] 0.0, 128
      %1467 = vxpose.xlu0.b32.cont [12/16] 0.0, 128
      %1468 = vxpose.xlu0.b32.cont [13/16] 0.0, 128
      %1469 = vxpose.xlu0.b32.cont [14/16] 0.0, 128
      %1470 = vxpose.xlu0.b32.cont [15/16] 0.0, 128
      %1471 = vxpose.xlu0.b32.end [16/16] 0.0, 128
      %v1472 = vpop.trf.xlu0
      %v1473 = vpop.trf.xlu0
      %v1474 = vpop.trf.xlu0
      %v1475 = vpop.trf.xlu0
      %v1476 = vpop.trf.xlu0
      %v1477 = vpop.trf.xlu0
      %v1478 = vpop.trf.xlu0
      %v1479 = vpop.trf.xlu0
      %v1480 = vpop.trf.xlu0
      %v1481 = vpop.trf.xlu0
      %v1482 = vpop.trf.xlu0
      %v1483 = vpop.trf.xlu0
      %v1484 = vpop.trf.xlu0
      %v1485 = vpop.trf.xlu0
      %v1486 = vpop.trf.xlu0
      %v1487 = vpop.trf.xlu0
      %v1489 = vsel %vm1302, %v1472, 0
      %1491 = vmatprep.subr.mxu0 0.0
      %1492 = vmatpush1.msra.mxu0 0.0
      %1493 = vmatprep.subr.mxu0 0.0
      %1494 = vmatpush1.msra.mxu0 0.0
      %1495 = vmatprep.subr.mxu0 0.0
      %1496 = vmatpush1.msra.mxu0 0.0
      %1497 = vmatprep.subr.mxu0 0.0
      %1498 = vmatpush1.msra.mxu0 0.0
      %1499 = vmatprep.subr.mxu0 0.0
      %1500 = vmatpush1.msra.mxu0 0.0
      %1501 = vmatprep.subr.mxu0 0.0
      %1502 = vmatpush1.msra.mxu0 0.0
      %1503 = vmatprep.subr.mxu0 0.0
      %1504 = vmatpush1.msra.mxu0 0.0
      %1505 = vmatprep.subr.mxu0 0.0
      %1506 = vmatpush1.msra.mxu0 0.0
      %1507 = vmatprep.subr.mxu0 0.0
      %1508 = vmatpush1.msra.mxu0 %v1293
      %1509 = vmatprep.subr.mxu0 0.0
      %1510 = vmatpush1.msra.mxu0 %v1291
      %1511 = vmatprep.subr.mxu0 0.0
      %1512 = vmatpush1.msra.mxu0 %v1289
      %1513 = vmatprep.subr.mxu0 0.0
      %1514 = vmatpush1.msra.mxu0 %v1287
      %1515 = vmatprep.subr.mxu0 0.0
      %1516 = vmatpush1.msra.mxu0 %v1285
      %1517 = vmatprep.subr.mxu0 0.0
      %1518 = vmatpush1.msra.mxu0 %v1283
      %1519 = vmatprep.subr.mxu0 0.0
      %1520 = vmatpush1.msra.mxu0 %v1281
      %1521 = vmatprep.subr.mxu0 0.0
      %1522 = vmatpush1.msra.mxu0 %v1279
      %1523 = vmatprep.subr.mxu0 0.0
      %1524 = vmatpush2.msra.mxu0 0.0
      %1525 = vmatprep.subr.mxu0 0.0
      %1526 = vmatpush2.msra.mxu0 0.0
      %1527 = vmatprep.subr.mxu0 0.0
      %1528 = vmatpush2.msra.mxu0 0.0
      %1529 = vmatprep.subr.mxu0 0.0
      %1530 = vmatpush2.msra.mxu0 0.0
      %1531 = vmatprep.subr.mxu0 0.0
      %1532 = vmatpush2.msra.mxu0 0.0
      %1533 = vmatprep.subr.mxu0 0.0
      %1534 = vmatpush2.msra.mxu0 0.0
      %1535 = vmatprep.subr.mxu0 0.0
      %1536 = vmatpush2.msra.mxu0 0.0
      %1537 = vmatprep.subr.mxu0 0.0
      %1538 = vmatpush2.msra.mxu0 0.0
      %1539 = vmatprep.subr.mxu0 0.0
      %1540 = vmatpush2.msra.mxu0 0.0
      %1541 = vmatprep.subr.mxu0 0.0
      %1542 = vmatpush2.msra.mxu0 0.0
      %1543 = vmatprep.subr.mxu0 0.0
      %1544 = vmatpush2.msra.mxu0 0.0
      %1545 = vmatprep.subr.mxu0 0.0
      %1546 = vmatpush2.msra.mxu0 0.0
      %1547 = vmatprep.subr.mxu0 0.0
      %1548 = vmatpush2.msra.mxu0 0.0
      %1549 = vmatprep.subr.mxu0 0.0
      %1550 = vmatpush2.msra.mxu0 0.0
      %1551 = vmatprep.subr.mxu0 0.0
      %1552 = vmatpush2.msra.mxu0 0.0
      %1553 = vmatprep.subr.mxu0 0.0
      %1554 = vmatpush2.msra.mxu0 0.0
      %1555 = vmatprep.mubr.f32.mxu0 0.0
      %1556 = vmatmul.mubr.f32.gmra.mxu0 %v1489
      %v1557 = vpop.f32.mrf.mxu0
      %v1558 = vadd.f32 0.0, %v1557
      %v1559 = vpop.f32.mrf.mxu0
      %1560 = vdwg.mxu0
      %v1561 = vadd.f32 %v711, %v1558
      %1562 = vst.msk [vmem:[#allocation2] sm:$0xff] %vm713, %v1561
      %1571 = vxpose.xlu0.b32.start [1/16] %v981, 128
      %1572 = vxpose.xlu0.b32.cont [2/16] %v983, 128
      %1573 = vxpose.xlu0.b32.cont [3/16] %v985, 128
      %1574 = vxpose.xlu0.b32.cont [4/16] %v987, 128
      %1575 = vxpose.xlu0.b32.cont [5/16] %v989, 128
      %1576 = vxpose.xlu0.b32.cont [6/16] %v991, 128
      %1577 = vxpose.xlu0.b32.cont [7/16] %v993, 128
      %1578 = vxpose.xlu0.b32.cont [8/16] %v995, 128
      %1579 = vxpose.xlu0.b32.cont [9/16] 0.0, 128
      %1580 = vxpose.xlu0.b32.cont [10/16] 0.0, 128
      %1581 = vxpose.xlu0.b32.cont [11/16] 0.0, 128
      %1582 = vxpose.xlu0.b32.cont [12/16] 0.0, 128
      %1583 = vxpose.xlu0.b32.cont [13/16] 0.0, 128
      %1584 = vxpose.xlu0.b32.cont [14/16] 0.0, 128
      %1585 = vxpose.xlu0.b32.cont [15/16] 0.0, 128
      %1586 = vxpose.xlu0.b32.end [16/16] 0.0, 128
      %v1587 = vpop.trf.xlu0
      %v1588 = vpop.trf.xlu0
      %v1589 = vpop.trf.xlu0
      %v1590 = vpop.trf.xlu0
      %v1591 = vpop.trf.xlu0
      %v1592 = vpop.trf.xlu0
      %v1593 = vpop.trf.xlu0
      %v1594 = vpop.trf.xlu0
      %v1595 = vpop.trf.xlu0
      %v1596 = vpop.trf.xlu0
      %v1597 = vpop.trf.xlu0
      %v1598 = vpop.trf.xlu0
      %v1599 = vpop.trf.xlu0
      %v1600 = vpop.trf.xlu0
      %v1601 = vpop.trf.xlu0
      %v1602 = vpop.trf.xlu0
      %v1604 = vsel %vm1302, %v1587, 0
      %1606 = vmatprep.subr.mxu0 0.0
      %1607 = vmatpush1.msra.mxu0 0.0
      %1608 = vmatprep.subr.mxu0 0.0
      %1609 = vmatpush1.msra.mxu0 0.0
      %1610 = vmatprep.subr.mxu0 0.0
      %1611 = vmatpush1.msra.mxu0 0.0
      %1612 = vmatprep.subr.mxu0 0.0
      %1613 = vmatpush1.msra.mxu0 0.0
      %1614 = vmatprep.subr.mxu0 0.0
      %1615 = vmatpush1.msra.mxu0 0.0
      %1616 = vmatprep.subr.mxu0 0.0
      %1617 = vmatpush1.msra.mxu0 0.0
      %1618 = vmatprep.subr.mxu0 0.0
      %1619 = vmatpush1.msra.mxu0 0.0
      %1620 = vmatprep.subr.mxu0 0.0
      %1621 = vmatpush1.msra.mxu0 0.0
      %1622 = vmatprep.subr.mxu0 0.0
      %1623 = vmatpush1.msra.mxu0 %v1293
      %1624 = vmatprep.subr.mxu0 0.0
      %1625 = vmatpush1.msra.mxu0 %v1291
      %1626 = vmatprep.subr.mxu0 0.0
      %1627 = vmatpush1.msra.mxu0 %v1289
      %1628 = vmatprep.subr.mxu0 0.0
      %1629 = vmatpush1.msra.mxu0 %v1287
      %1630 = vmatprep.subr.mxu0 0.0
      %1631 = vmatpush1.msra.mxu0 %v1285
      %1632 = vmatprep.subr.mxu0 0.0
      %1633 = vmatpush1.msra.mxu0 %v1283
      %1634 = vmatprep.subr.mxu0 0.0
      %1635 = vmatpush1.msra.mxu0 %v1281
      %1636 = vmatprep.subr.mxu0 0.0
      %1637 = vmatpush1.msra.mxu0 %v1279
      %1638 = vmatprep.subr.mxu0 0.0
      %1639 = vmatpush2.msra.mxu0 0.0
      %1640 = vmatprep.subr.mxu0 0.0
      %1641 = vmatpush2.msra.mxu0 0.0
      %1642 = vmatprep.subr.mxu0 0.0
      %1643 = vmatpush2.msra.mxu0 0.0
      %1644 = vmatprep.subr.mxu0 0.0
      %1645 = vmatpush2.msra.mxu0 0.0
      %1646 = vmatprep.subr.mxu0 0.0
      %1647 = vmatpush2.msra.mxu0 0.0
      %1648 = vmatprep.subr.mxu0 0.0
      %1649 = vmatpush2.msra.mxu0 0.0
      %1650 = vmatprep.subr.mxu0 0.0
      %1651 = vmatpush2.msra.mxu0 0.0
      %1652 = vmatprep.subr.mxu0 0.0
      %1653 = vmatpush2.msra.mxu0 0.0
      %1654 = vmatprep.subr.mxu0 0.0
      %1655 = vmatpush2.msra.mxu0 0.0
      %1656 = vmatprep.subr.mxu0 0.0
      %1657 = vmatpush2.msra.mxu0 0.0
      %1658 = vmatprep.subr.mxu0 0.0
      %1659 = vmatpush2.msra.mxu0 0.0
      %1660 = vmatprep.subr.mxu0 0.0
      %1661 = vmatpush2.msra.mxu0 0.0
      %1662 = vmatprep.subr.mxu0 0.0
      %1663 = vmatpush2.msra.mxu0 0.0
      %1664 = vmatprep.subr.mxu0 0.0
      %1665 = vmatpush2.msra.mxu0 0.0
      %1666 = vmatprep.subr.mxu0 0.0
      %1667 = vmatpush2.msra.mxu0 0.0
      %1668 = vmatprep.subr.mxu0 0.0
      %1669 = vmatpush2.msra.mxu0 0.0
      %1670 = vmatprep.mubr.f32.mxu0 0.0
      %1671 = vmatmul.mubr.f32.gmra.mxu0 %v1604
      %v1672 = vpop.f32.mrf.mxu0
      %v1673 = vadd.f32 0.0, %v1672
      %v1674 = vpop.f32.mrf.mxu0
      %1675 = vdwg.mxu0
      %v1676 = vadd.f32 %v712, %v1673
      %1677 = vst.msk [vmem:[#allocation3] sm:$0xff] %vm713, %v1676
      %s1678 = scalar_lea.vmem [#allocation2], 8
      %v1679 = vld [vmem:[%s1678] sm:$0xff]
      %s1680 = scalar_lea.vmem [#allocation3], 8
      %v1681 = vld [vmem:[%s1680] sm:$0xff]
      %1682 = vrot.lane.b32.xlu0 %v604, 120
      %v1683 = vpop.permute.xlu0 %1682
      %1684 = vrot.lane.b32.xlu0 %v605, 120
      %v1685 = vpop.permute.xlu0 %1684
      %1686 = vrot.lane.b32.xlu0 %v606, 120
      %v1687 = vpop.permute.xlu0 %1686
      %1688 = vrot.lane.b32.xlu0 %v607, 120
      %v1689 = vpop.permute.xlu0 %1688
      %1690 = vrot.lane.b32.xlu0 %v608, 120
      %v1691 = vpop.permute.xlu0 %1690
      %1692 = vrot.lane.b32.xlu0 %v609, 120
      %v1693 = vpop.permute.xlu0 %1692
      %1694 = vrot.lane.b32.xlu0 %v610, 120
      %v1695 = vpop.permute.xlu0 %1694
      %1696 = vrot.lane.b32.xlu0 %v611, 120
      %v1697 = vpop.permute.xlu0 %1696
      %v1698 = vsel %vm713, %v1683, 0
      %v1700 = vsel %vm713, %v1685, 0
      %v1702 = vsel %vm713, %v1687, 0
      %v1704 = vsel %vm713, %v1689, 0
      %v1706 = vsel %vm713, %v1691, 0
      %v1708 = vsel %vm713, %v1693, 0
      %v1710 = vsel %vm713, %v1695, 0
      %v1712 = vsel %vm713, %v1697, 0
      %1714 = vmatprep.subr.mxu0 0.0
      %1715 = vmatpush1.msra.mxu0 0.0
      %1716 = vmatprep.subr.mxu0 0.0
      %1717 = vmatpush1.msra.mxu0 0.0
      %1718 = vmatprep.subr.mxu0 0.0
      %1719 = vmatpush1.msra.mxu0 0.0
      %1720 = vmatprep.subr.mxu0 0.0
      %1721 = vmatpush1.msra.mxu0 0.0
      %1722 = vmatprep.subr.mxu0 0.0
      %1723 = vmatpush1.msra.mxu0 0.0
      %1724 = vmatprep.subr.mxu0 0.0
      %1725 = vmatpush1.msra.mxu0 0.0
      %1726 = vmatprep.subr.mxu0 0.0
      %1727 = vmatpush1.msra.mxu0 0.0
      %1728 = vmatprep.subr.mxu0 0.0
      %1729 = vmatpush1.msra.mxu0 0.0
      %1730 = vmatprep.subr.mxu0 0.0
      %1731 = vmatpush1.msra.mxu0 0.0
      %1732 = vmatprep.subr.mxu0 0.0
      %1733 = vmatpush1.msra.mxu0 0.0
      %1734 = vmatprep.subr.mxu0 0.0
      %1735 = vmatpush1.msra.mxu0 0.0
      %1736 = vmatprep.subr.mxu0 0.0
      %1737 = vmatpush1.msra.mxu0 0.0
      %1738 = vmatprep.subr.mxu0 0.0
      %1739 = vmatpush1.msra.mxu0 0.0
      %1740 = vmatprep.subr.mxu0 0.0
      %1741 = vmatpush1.msra.mxu0 0.0
      %1742 = vmatprep.subr.mxu0 0.0
      %1743 = vmatpush1.msra.mxu0 0.0
      %1744 = vmatprep.subr.mxu0 0.0
      %1745 = vmatpush1.msra.mxu0 %v1681
      %1746 = vmatprep.subr.mxu0 0.0
      %1747 = vmatpush2.msra.mxu0 0.0
      %1748 = vmatprep.subr.mxu0 0.0
      %1749 = vmatpush2.msra.mxu0 0.0
      %1750 = vmatprep.subr.mxu0 0.0
      %1751 = vmatpush2.msra.mxu0 0.0
      %1752 = vmatprep.subr.mxu0 0.0
      %1753 = vmatpush2.msra.mxu0 0.0
      %1754 = vmatprep.subr.mxu0 0.0
      %1755 = vmatpush2.msra.mxu0 0.0
      %1756 = vmatprep.subr.mxu0 0.0
      %1757 = vmatpush2.msra.mxu0 0.0
      %1758 = vmatprep.subr.mxu0 0.0
      %1759 = vmatpush2.msra.mxu0 0.0
      %1760 = vmatprep.subr.mxu0 0.0
      %1761 = vmatpush2.msra.mxu0 0.0
      %1762 = vmatprep.subr.mxu0 0.0
      %1763 = vmatpush2.msra.mxu0 0.0
      %1764 = vmatprep.subr.mxu0 0.0
      %1765 = vmatpush2.msra.mxu0 0.0
      %1766 = vmatprep.subr.mxu0 0.0
      %1767 = vmatpush2.msra.mxu0 0.0
      %1768 = vmatprep.subr.mxu0 0.0
      %1769 = vmatpush2.msra.mxu0 0.0
      %1770 = vmatprep.subr.mxu0 0.0
      %1771 = vmatpush2.msra.mxu0 0.0
      %1772 = vmatprep.subr.mxu0 0.0
      %1773 = vmatpush2.msra.mxu0 0.0
      %1774 = vmatprep.subr.mxu0 0.0
      %1775 = vmatpush2.msra.mxu0 0.0
      %1776 = vmatprep.subr.mxu0 0.0
      %1777 = vmatpush2.msra.mxu0 0.0
      %1778 = vmatprep.mubr.f32.mxu0 0.0
      %1779 = vmatmul.mubr.f32.gmra.mxu0 %v1698
      %v1780 = vpop.f32.mrf.mxu0
      %v1781 = vadd.f32 0.0, %v1780
      %v1782 = vpop.f32.mrf.mxu0
      %1783 = vmatprep.mubr.f32.mxu0 0.0
      %1784 = vmatmul.mubr.f32.gmra.mxu0 %v1700
      %v1785 = vpop.f32.mrf.mxu0
      %v1786 = vadd.f32 0.0, %v1785
      %v1787 = vpop.f32.mrf.mxu0
      %1788 = vmatprep.mubr.f32.mxu0 0.0
      %1789 = vmatmul.mubr.f32.gmra.mxu0 %v1702
      %v1790 = vpop.f32.mrf.mxu0
      %v1791 = vadd.f32 0.0, %v1790
      %v1792 = vpop.f32.mrf.mxu0
      %1793 = vmatprep.mubr.f32.mxu0 0.0
      %1794 = vmatmul.mubr.f32.gmra.mxu0 %v1704
      %v1795 = vpop.f32.mrf.mxu0
      %v1796 = vadd.f32 0.0, %v1795
      %v1797 = vpop.f32.mrf.mxu0
      %1798 = vmatprep.mubr.f32.mxu0 0.0
      %1799 = vmatmul.mubr.f32.gmra.mxu0 %v1706
      %v1800 = vpop.f32.mrf.mxu0
      %v1801 = vadd.f32 0.0, %v1800
      %v1802 = vpop.f32.mrf.mxu0
      %1803 = vmatprep.mubr.f32.mxu0 0.0
      %1804 = vmatmul.mubr.f32.gmra.mxu0 %v1708
      %v1805 = vpop.f32.mrf.mxu0
      %v1806 = vadd.f32 0.0, %v1805
      %v1807 = vpop.f32.mrf.mxu0
      %1808 = vmatprep.mubr.f32.mxu0 0.0
      %1809 = vmatmul.mubr.f32.gmra.mxu0 %v1710
      %v1810 = vpop.f32.mrf.mxu0
      %v1811 = vadd.f32 0.0, %v1810
      %v1812 = vpop.f32.mrf.mxu0
      %1813 = vmatprep.mubr.f32.mxu0 0.0
      %1814 = vmatmul.mubr.f32.gmra.mxu0 %v1712
      %v1815 = vpop.f32.mrf.mxu0
      %v1816 = vadd.f32 0.0, %v1815
      %v1817 = vpop.f32.mrf.mxu0
      %1818 = vdwg.mxu0
      %1819 = vrot.lane.b32.xlu0 %v596, 120
      %v1820 = vpop.permute.xlu0 %1819
      %1821 = vrot.lane.b32.xlu0 %v597, 120
      %v1822 = vpop.permute.xlu0 %1821
      %1823 = vrot.lane.b32.xlu0 %v598, 120
      %v1824 = vpop.permute.xlu0 %1823
      %1825 = vrot.lane.b32.xlu0 %v599, 120
      %v1826 = vpop.permute.xlu0 %1825
      %1827 = vrot.lane.b32.xlu0 %v600, 120
      %v1828 = vpop.permute.xlu0 %1827
      %1829 = vrot.lane.b32.xlu0 %v601, 120
      %v1830 = vpop.permute.xlu0 %1829
      %1831 = vrot.lane.b32.xlu0 %v602, 120
      %v1832 = vpop.permute.xlu0 %1831
      %1833 = vrot.lane.b32.xlu0 %v603, 120
      %v1834 = vpop.permute.xlu0 %1833
      %v1835 = vsel %vm713, %v1820, 0
      %v1837 = vsel %vm713, %v1822, 0
      %v1839 = vsel %vm713, %v1824, 0
      %v1841 = vsel %vm713, %v1826, 0
      %v1843 = vsel %vm713, %v1828, 0
      %v1845 = vsel %vm713, %v1830, 0
      %v1847 = vsel %vm713, %v1832, 0
      %v1849 = vsel %vm713, %v1834, 0
      %1851 = vmatprep.subr.mxu0 0.0
      %1852 = vmatpush1.msra.mxu0 0.0
      %1853 = vmatprep.subr.mxu0 0.0
      %1854 = vmatpush1.msra.mxu0 0.0
      %1855 = vmatprep.subr.mxu0 0.0
      %1856 = vmatpush1.msra.mxu0 0.0
      %1857 = vmatprep.subr.mxu0 0.0
      %1858 = vmatpush1.msra.mxu0 0.0
      %1859 = vmatprep.subr.mxu0 0.0
      %1860 = vmatpush1.msra.mxu0 0.0
      %1861 = vmatprep.subr.mxu0 0.0
      %1862 = vmatpush1.msra.mxu0 0.0
      %1863 = vmatprep.subr.mxu0 0.0
      %1864 = vmatpush1.msra.mxu0 0.0
      %1865 = vmatprep.subr.mxu0 0.0
      %1866 = vmatpush1.msra.mxu0 0.0
      %1867 = vmatprep.subr.mxu0 0.0
      %1868 = vmatpush1.msra.mxu0 0.0
      %1869 = vmatprep.subr.mxu0 0.0
      %1870 = vmatpush1.msra.mxu0 0.0
      %1871 = vmatprep.subr.mxu0 0.0
      %1872 = vmatpush1.msra.mxu0 0.0
      %1873 = vmatprep.subr.mxu0 0.0
      %1874 = vmatpush1.msra.mxu0 0.0
      %1875 = vmatprep.subr.mxu0 0.0
      %1876 = vmatpush1.msra.mxu0 0.0
      %1877 = vmatprep.subr.mxu0 0.0
      %1878 = vmatpush1.msra.mxu0 0.0
      %1879 = vmatprep.subr.mxu0 0.0
      %1880 = vmatpush1.msra.mxu0 0.0
      %1881 = vmatprep.subr.mxu0 0.0
      %1882 = vmatpush1.msra.mxu0 %v1679
      %1883 = vmatprep.subr.mxu0 0.0
      %1884 = vmatpush2.msra.mxu0 0.0
      %1885 = vmatprep.subr.mxu0 0.0
      %1886 = vmatpush2.msra.mxu0 0.0
      %1887 = vmatprep.subr.mxu0 0.0
      %1888 = vmatpush2.msra.mxu0 0.0
      %1889 = vmatprep.subr.mxu0 0.0
      %1890 = vmatpush2.msra.mxu0 0.0
      %1891 = vmatprep.subr.mxu0 0.0
      %1892 = vmatpush2.msra.mxu0 0.0
      %1893 = vmatprep.subr.mxu0 0.0
      %1894 = vmatpush2.msra.mxu0 0.0
      %1895 = vmatprep.subr.mxu0 0.0
      %1896 = vmatpush2.msra.mxu0 0.0
      %1897 = vmatprep.subr.mxu0 0.0
      %1898 = vmatpush2.msra.mxu0 0.0
      %1899 = vmatprep.subr.mxu0 0.0
      %1900 = vmatpush2.msra.mxu0 0.0
      %1901 = vmatprep.subr.mxu0 0.0
      %1902 = vmatpush2.msra.mxu0 0.0
      %1903 = vmatprep.subr.mxu0 0.0
      %1904 = vmatpush2.msra.mxu0 0.0
      %1905 = vmatprep.subr.mxu0 0.0
      %1906 = vmatpush2.msra.mxu0 0.0
      %1907 = vmatprep.subr.mxu0 0.0
      %1908 = vmatpush2.msra.mxu0 0.0
      %1909 = vmatprep.subr.mxu0 0.0
      %1910 = vmatpush2.msra.mxu0 0.0
      %1911 = vmatprep.subr.mxu0 0.0
      %1912 = vmatpush2.msra.mxu0 0.0
      %1913 = vmatprep.subr.mxu0 0.0
      %1914 = vmatpush2.msra.mxu0 0.0
      %1915 = vmatprep.mubr.f32.mxu0 0.0
      %1916 = vmatmul.mubr.f32.gmra.mxu0 %v1835
      %v1917 = vpop.f32.mrf.mxu0
      %v1918 = vadd.f32 %v1781, %v1917
      %v1919 = vpop.f32.mrf.mxu0
      %1920 = vmatprep.mubr.f32.mxu0 0.0
      %1921 = vmatmul.mubr.f32.gmra.mxu0 %v1837
      %v1922 = vpop.f32.mrf.mxu0
      %v1923 = vadd.f32 %v1786, %v1922
      %v1924 = vpop.f32.mrf.mxu0
      %1925 = vmatprep.mubr.f32.mxu0 0.0
      %1926 = vmatmul.mubr.f32.gmra.mxu0 %v1839
      %v1927 = vpop.f32.mrf.mxu0
      %v1928 = vadd.f32 %v1791, %v1927
      %v1929 = vpop.f32.mrf.mxu0
      %1930 = vmatprep.mubr.f32.mxu0 0.0
      %1931 = vmatmul.mubr.f32.gmra.mxu0 %v1841
      %v1932 = vpop.f32.mrf.mxu0
      %v1933 = vadd.f32 %v1796, %v1932
      %v1934 = vpop.f32.mrf.mxu0
      %1935 = vmatprep.mubr.f32.mxu0 0.0
      %1936 = vmatmul.mubr.f32.gmra.mxu0 %v1843
      %v1937 = vpop.f32.mrf.mxu0
      %v1938 = vadd.f32 %v1801, %v1937
      %v1939 = vpop.f32.mrf.mxu0
      %1940 = vmatprep.mubr.f32.mxu0 0.0
      %1941 = vmatmul.mubr.f32.gmra.mxu0 %v1845
      %v1942 = vpop.f32.mrf.mxu0
      %v1943 = vadd.f32 %v1806, %v1942
      %v1944 = vpop.f32.mrf.mxu0
      %1945 = vmatprep.mubr.f32.mxu0 0.0
      %1946 = vmatmul.mubr.f32.gmra.mxu0 %v1847
      %v1947 = vpop.f32.mrf.mxu0
      %v1948 = vadd.f32 %v1811, %v1947
      %v1949 = vpop.f32.mrf.mxu0
      %1950 = vmatprep.mubr.f32.mxu0 0.0
      %1951 = vmatmul.mubr.f32.gmra.mxu0 %v1849
      %v1952 = vpop.f32.mrf.mxu0
      %v1953 = vadd.f32 %v1816, %v1952
      %v1954 = vpop.f32.mrf.mxu0
      %1955 = vdwg.mxu0
      %1956 = vrot.lane.b32.xlu0 %v684, 88
      %v1957 = vpop.permute.xlu0 %1956
      %1958 = vrot.lane.b32.xlu0 %v685, 88
      %v1959 = vpop.permute.xlu0 %1958
      %1960 = vrot.lane.b32.xlu0 %v686, 88
      %v1961 = vpop.permute.xlu0 %1960
      %1962 = vrot.lane.b32.xlu0 %v687, 88
      %v1963 = vpop.permute.xlu0 %1962
      %1964 = vrot.lane.b32.xlu0 %v688, 88
      %v1965 = vpop.permute.xlu0 %1964
      %1966 = vrot.lane.b32.xlu0 %v689, 88
      %v1967 = vpop.permute.xlu0 %1966
      %1968 = vrot.lane.b32.xlu0 %v690, 88
      %v1969 = vpop.permute.xlu0 %1968
      %1970 = vrot.lane.b32.xlu0 %v691, 88
      %v1971 = vpop.permute.xlu0 %1970
      %v1972 = vsel %vm713, %v1957, 0
      %v1974 = vsel %vm713, %v1959, 0
      %v1976 = vsel %vm713, %v1961, 0
      %v1978 = vsel %vm713, %v1963, 0
      %v1980 = vsel %vm713, %v1965, 0
      %v1982 = vsel %vm713, %v1967, 0
      %v1984 = vsel %vm713, %v1969, 0
      %v1986 = vsel %vm713, %v1971, 0
      %1988 = vmatprep.subr.mxu0 0.0
      %1989 = vmatpush1.xpose.msra.mxu0 0.0
      %1990 = vmatprep.subr.mxu0 0.0
      %1991 = vmatpush1.xpose.msra.mxu0 0.0
      %1992 = vmatprep.subr.mxu0 0.0
      %1993 = vmatpush1.xpose.msra.mxu0 0.0
      %1994 = vmatprep.subr.mxu0 0.0
      %1995 = vmatpush1.xpose.msra.mxu0 0.0
      %1996 = vmatprep.subr.mxu0 0.0
      %1997 = vmatpush1.xpose.msra.mxu0 0.0
      %1998 = vmatprep.subr.mxu0 0.0
      %1999 = vmatpush1.xpose.msra.mxu0 0.0
      %2000 = vmatprep.subr.mxu0 0.0
      %2001 = vmatpush1.xpose.msra.mxu0 0.0
      %2002 = vmatprep.subr.mxu0 0.0
      %2003 = vmatpush1.xpose.msra.mxu0 0.0
      %2004 = vmatprep.subr.mxu0 0.0
      %2005 = vmatpush1.xpose.msra.mxu0 %v1986
      %2006 = vmatprep.subr.mxu0 0.0
      %2007 = vmatpush1.xpose.msra.mxu0 %v1984
      %2008 = vmatprep.subr.mxu0 0.0
      %2009 = vmatpush1.xpose.msra.mxu0 %v1982
      %2010 = vmatprep.subr.mxu0 0.0
      %2011 = vmatpush1.xpose.msra.mxu0 %v1980
      %2012 = vmatprep.subr.mxu0 0.0
      %2013 = vmatpush1.xpose.msra.mxu0 %v1978
      %2014 = vmatprep.subr.mxu0 0.0
      %2015 = vmatpush1.xpose.msra.mxu0 %v1976
      %2016 = vmatprep.subr.mxu0 0.0
      %2017 = vmatpush1.xpose.msra.mxu0 %v1974
      %2018 = vmatprep.subr.mxu0 0.0
      %2019 = vmatpush1.xpose.msra.mxu0 %v1972
      %2020 = vmatprep.subr.mxu0 0.0
      %2021 = vmatpush2.xpose.msra.mxu0 0.0
      %2022 = vmatprep.subr.mxu0 0.0
      %2023 = vmatpush2.xpose.msra.mxu0 0.0
      %2024 = vmatprep.subr.mxu0 0.0
      %2025 = vmatpush2.xpose.msra.mxu0 0.0
      %2026 = vmatprep.subr.mxu0 0.0
      %2027 = vmatpush2.xpose.msra.mxu0 0.0
      %2028 = vmatprep.subr.mxu0 0.0
      %2029 = vmatpush2.xpose.msra.mxu0 0.0
      %2030 = vmatprep.subr.mxu0 0.0
      %2031 = vmatpush2.xpose.msra.mxu0 0.0
      %2032 = vmatprep.subr.mxu0 0.0
      %2033 = vmatpush2.xpose.msra.mxu0 0.0
      %2034 = vmatprep.subr.mxu0 0.0
      %2035 = vmatpush2.xpose.msra.mxu0 0.0
      %2036 = vmatprep.subr.mxu0 0.0
      %2037 = vmatpush2.xpose.msra.mxu0 0.0
      %2038 = vmatprep.subr.mxu0 0.0
      %2039 = vmatpush2.xpose.msra.mxu0 0.0
      %2040 = vmatprep.subr.mxu0 0.0
      %2041 = vmatpush2.xpose.msra.mxu0 0.0
      %2042 = vmatprep.subr.mxu0 0.0
      %2043 = vmatpush2.xpose.msra.mxu0 0.0
      %2044 = vmatprep.subr.mxu0 0.0
      %2045 = vmatpush2.xpose.msra.mxu0 0.0
      %2046 = vmatprep.subr.mxu0 0.0
      %2047 = vmatpush2.xpose.msra.mxu0 0.0
      %2048 = vmatprep.subr.mxu0 0.0
      %2049 = vmatpush2.xpose.msra.mxu0 0.0
      %2050 = vmatprep.subr.mxu0 0.0
      %2051 = vmatpush2.xpose.msra.mxu0 0.0
      %2052 = vmatprep.mubr.f32.mxu0 0.0
      %2053 = vmatmul.mubr.f32.gmra.mxu0 %v1698
      %v2054 = vpop.f32.mrf.mxu0
      %v2055 = vadd.f32 0.0, %v2054
      %v2056 = vpop.f32.mrf.mxu0
      %2057 = vmatprep.mubr.f32.mxu0 0.0
      %2058 = vmatmul.mubr.f32.gmra.mxu0 %v1700
      %v2059 = vpop.f32.mrf.mxu0
      %v2060 = vadd.f32 0.0, %v2059
      %v2061 = vpop.f32.mrf.mxu0
      %2062 = vmatprep.mubr.f32.mxu0 0.0
      %2063 = vmatmul.mubr.f32.gmra.mxu0 %v1702
      %v2064 = vpop.f32.mrf.mxu0
      %v2065 = vadd.f32 0.0, %v2064
      %v2066 = vpop.f32.mrf.mxu0
      %2067 = vmatprep.mubr.f32.mxu0 0.0
      %2068 = vmatmul.mubr.f32.gmra.mxu0 %v1704
      %v2069 = vpop.f32.mrf.mxu0
      %v2070 = vadd.f32 0.0, %v2069
      %v2071 = vpop.f32.mrf.mxu0
      %2072 = vmatprep.mubr.f32.mxu0 0.0
      %2073 = vmatmul.mubr.f32.gmra.mxu0 %v1706
      %v2074 = vpop.f32.mrf.mxu0
      %v2075 = vadd.f32 0.0, %v2074
      %v2076 = vpop.f32.mrf.mxu0
      %2077 = vmatprep.mubr.f32.mxu0 0.0
      %2078 = vmatmul.mubr.f32.gmra.mxu0 %v1708
      %v2079 = vpop.f32.mrf.mxu0
      %v2080 = vadd.f32 0.0, %v2079
      %v2081 = vpop.f32.mrf.mxu0
      %2082 = vmatprep.mubr.f32.mxu0 0.0
      %2083 = vmatmul.mubr.f32.gmra.mxu0 %v1710
      %v2084 = vpop.f32.mrf.mxu0
      %v2085 = vadd.f32 0.0, %v2084
      %v2086 = vpop.f32.mrf.mxu0
      %2087 = vmatprep.mubr.f32.mxu0 0.0
      %2088 = vmatmul.mubr.f32.gmra.mxu0 %v1712
      %v2089 = vpop.f32.mrf.mxu0
      %v2090 = vadd.f32 0.0, %v2089
      %v2091 = vpop.f32.mrf.mxu0
      %2092 = vdwg.mxu0
      %2093 = vrot.lane.b32.xlu0 %v644, 88
      %v2094 = vpop.permute.xlu0 %2093
      %2095 = vrot.lane.b32.xlu0 %v645, 88
      %v2096 = vpop.permute.xlu0 %2095
      %2097 = vrot.lane.b32.xlu0 %v646, 88
      %v2098 = vpop.permute.xlu0 %2097
      %2099 = vrot.lane.b32.xlu0 %v647, 88
      %v2100 = vpop.permute.xlu0 %2099
      %2101 = vrot.lane.b32.xlu0 %v648, 88
      %v2102 = vpop.permute.xlu0 %2101
      %2103 = vrot.lane.b32.xlu0 %v649, 88
      %v2104 = vpop.permute.xlu0 %2103
      %2105 = vrot.lane.b32.xlu0 %v650, 88
      %v2106 = vpop.permute.xlu0 %2105
      %2107 = vrot.lane.b32.xlu0 %v651, 88
      %v2108 = vpop.permute.xlu0 %2107
      %v2109 = vsel %vm713, %v2094, 0
      %v2111 = vsel %vm713, %v2096, 0
      %v2113 = vsel %vm713, %v2098, 0
      %v2115 = vsel %vm713, %v2100, 0
      %v2117 = vsel %vm713, %v2102, 0
      %v2119 = vsel %vm713, %v2104, 0
      %v2121 = vsel %vm713, %v2106, 0
      %v2123 = vsel %vm713, %v2108, 0
      %2125 = vmatprep.subr.mxu0 0.0
      %2126 = vmatpush1.xpose.msra.mxu0 0.0
      %2127 = vmatprep.subr.mxu0 0.0
      %2128 = vmatpush1.xpose.msra.mxu0 0.0
      %2129 = vmatprep.subr.mxu0 0.0
      %2130 = vmatpush1.xpose.msra.mxu0 0.0
      %2131 = vmatprep.subr.mxu0 0.0
      %2132 = vmatpush1.xpose.msra.mxu0 0.0
      %2133 = vmatprep.subr.mxu0 0.0
      %2134 = vmatpush1.xpose.msra.mxu0 0.0
      %2135 = vmatprep.subr.mxu0 0.0
      %2136 = vmatpush1.xpose.msra.mxu0 0.0
      %2137 = vmatprep.subr.mxu0 0.0
      %2138 = vmatpush1.xpose.msra.mxu0 0.0
      %2139 = vmatprep.subr.mxu0 0.0
      %2140 = vmatpush1.xpose.msra.mxu0 0.0
      %2141 = vmatprep.subr.mxu0 0.0
      %2142 = vmatpush1.xpose.msra.mxu0 %v2123
      %2143 = vmatprep.subr.mxu0 0.0
      %2144 = vmatpush1.xpose.msra.mxu0 %v2121
      %2145 = vmatprep.subr.mxu0 0.0
      %2146 = vmatpush1.xpose.msra.mxu0 %v2119
      %2147 = vmatprep.subr.mxu0 0.0
      %2148 = vmatpush1.xpose.msra.mxu0 %v2117
      %2149 = vmatprep.subr.mxu0 0.0
      %2150 = vmatpush1.xpose.msra.mxu0 %v2115
      %2151 = vmatprep.subr.mxu0 0.0
      %2152 = vmatpush1.xpose.msra.mxu0 %v2113
      %2153 = vmatprep.subr.mxu0 0.0
      %2154 = vmatpush1.xpose.msra.mxu0 %v2111
      %2155 = vmatprep.subr.mxu0 0.0
      %2156 = vmatpush1.xpose.msra.mxu0 %v2109
      %2157 = vmatprep.subr.mxu0 0.0
      %2158 = vmatpush2.xpose.msra.mxu0 0.0
      %2159 = vmatprep.subr.mxu0 0.0
      %2160 = vmatpush2.xpose.msra.mxu0 0.0
      %2161 = vmatprep.subr.mxu0 0.0
      %2162 = vmatpush2.xpose.msra.mxu0 0.0
      %2163 = vmatprep.subr.mxu0 0.0
      %2164 = vmatpush2.xpose.msra.mxu0 0.0
      %2165 = vmatprep.subr.mxu0 0.0
      %2166 = vmatpush2.xpose.msra.mxu0 0.0
      %2167 = vmatprep.subr.mxu0 0.0
      %2168 = vmatpush2.xpose.msra.mxu0 0.0
      %2169 = vmatprep.subr.mxu0 0.0
      %2170 = vmatpush2.xpose.msra.mxu0 0.0
      %2171 = vmatprep.subr.mxu0 0.0
      %2172 = vmatpush2.xpose.msra.mxu0 0.0
      %2173 = vmatprep.subr.mxu0 0.0
      %2174 = vmatpush2.xpose.msra.mxu0 0.0
      %2175 = vmatprep.subr.mxu0 0.0
      %2176 = vmatpush2.xpose.msra.mxu0 0.0
      %2177 = vmatprep.subr.mxu0 0.0
      %2178 = vmatpush2.xpose.msra.mxu0 0.0
      %2179 = vmatprep.subr.mxu0 0.0
      %2180 = vmatpush2.xpose.msra.mxu0 0.0
      %2181 = vmatprep.subr.mxu0 0.0
      %2182 = vmatpush2.xpose.msra.mxu0 0.0
      %2183 = vmatprep.subr.mxu0 0.0
      %2184 = vmatpush2.xpose.msra.mxu0 0.0
      %2185 = vmatprep.subr.mxu0 0.0
      %2186 = vmatpush2.xpose.msra.mxu0 0.0
      %2187 = vmatprep.subr.mxu0 0.0
      %2188 = vmatpush2.xpose.msra.mxu0 0.0
      %2189 = vmatprep.mubr.f32.mxu0 0.0
      %2190 = vmatmul.mubr.f32.gmra.mxu0 %v1835
      %v2191 = vpop.f32.mrf.mxu0
      %v2192 = vadd.f32 %v2055, %v2191
      %v2193 = vpop.f32.mrf.mxu0
      %2194 = vmatprep.mubr.f32.mxu0 0.0
      %2195 = vmatmul.mubr.f32.gmra.mxu0 %v1837
      %v2196 = vpop.f32.mrf.mxu0
      %v2197 = vadd.f32 %v2060, %v2196
      %v2198 = vpop.f32.mrf.mxu0
      %2199 = vmatprep.mubr.f32.mxu0 0.0
      %2200 = vmatmul.mubr.f32.gmra.mxu0 %v1839
      %v2201 = vpop.f32.mrf.mxu0
      %v2202 = vadd.f32 %v2065, %v2201
      %v2203 = vpop.f32.mrf.mxu0
      %2204 = vmatprep.mubr.f32.mxu0 0.0
      %2205 = vmatmul.mubr.f32.gmra.mxu0 %v1841
      %v2206 = vpop.f32.mrf.mxu0
      %v2207 = vadd.f32 %v2070, %v2206
      %v2208 = vpop.f32.mrf.mxu0
      %2209 = vmatprep.mubr.f32.mxu0 0.0
      %2210 = vmatmul.mubr.f32.gmra.mxu0 %v1843
      %v2211 = vpop.f32.mrf.mxu0
      %v2212 = vadd.f32 %v2075, %v2211
      %v2213 = vpop.f32.mrf.mxu0
      %2214 = vmatprep.mubr.f32.mxu0 0.0
      %2215 = vmatmul.mubr.f32.gmra.mxu0 %v1845
      %v2216 = vpop.f32.mrf.mxu0
      %v2217 = vadd.f32 %v2080, %v2216
      %v2218 = vpop.f32.mrf.mxu0
      %2219 = vmatprep.mubr.f32.mxu0 0.0
      %2220 = vmatmul.mubr.f32.gmra.mxu0 %v1847
      %v2221 = vpop.f32.mrf.mxu0
      %v2222 = vadd.f32 %v2085, %v2221
      %v2223 = vpop.f32.mrf.mxu0
      %2224 = vmatprep.mubr.f32.mxu0 0.0
      %2225 = vmatmul.mubr.f32.gmra.mxu0 %v1849
      %v2226 = vpop.f32.mrf.mxu0
      %v2227 = vadd.f32 %v2090, %v2226
      %v2228 = vpop.f32.mrf.mxu0
      %2229 = vdwg.mxu0
      %v2230 = vsel %vm703, %v2192, 0.0
      %v2231 = vsel %vm704, %v2197, 0.0
      %v2232 = vsel %vm705, %v2202, 0.0
      %v2233 = vsel %vm706, %v2207, 0.0
      %v2234 = vsel %vm707, %v2212, 0.0
      %v2235 = vsel %vm708, %v2217, 0.0
      %v2236 = vsel %vm709, %v2222, 0.0
      %v2237 = vsel %vm710, %v2227, 0.0
      %2238 = vrot.lane.b32.xlu0 %v486, 56
      %v2239 = vpop.permute.xlu0 %2238
      %2240 = vrot.lane.b32.xlu0 %v491, 56
      %v2241 = vpop.permute.xlu0 %2240
      %2242 = vrot.lane.b32.xlu0 %v496, 56
      %v2243 = vpop.permute.xlu0 %2242
      %2244 = vrot.lane.b32.xlu0 %v501, 56
      %v2245 = vpop.permute.xlu0 %2244
      %2246 = vrot.lane.b32.xlu0 %v506, 56
      %v2247 = vpop.permute.xlu0 %2246
      %2248 = vrot.lane.b32.xlu0 %v511, 56
      %v2249 = vpop.permute.xlu0 %2248
      %2250 = vrot.lane.b32.xlu0 %v516, 56
      %v2251 = vpop.permute.xlu0 %2250
      %2252 = vrot.lane.b32.xlu0 %v521, 56
      %v2253 = vpop.permute.xlu0 %2252
      %v2263 = vsel %vm1302, %v2230, 0
      %v2266 = vsel %vm1302, %v2231, 0
      %v2269 = vsel %vm1302, %v2232, 0
      %v2272 = vsel %vm1302, %v2233, 0
      %v2275 = vsel %vm1302, %v2234, 0
      %v2278 = vsel %vm1302, %v2235, 0
      %v2281 = vsel %vm1302, %v2236, 0
      %v2284 = vsel %vm1302, %v2237, 0
      %2286 = vmatprep.subr.mxu0 0.0
      %2287 = vmatpush1.msra.mxu0 0.0
      %2288 = vmatprep.subr.mxu0 0.0
      %2289 = vmatpush1.msra.mxu0 0.0
      %2290 = vmatprep.subr.mxu0 0.0
      %2291 = vmatpush1.msra.mxu0 0.0
      %2292 = vmatprep.subr.mxu0 0.0
      %2293 = vmatpush1.msra.mxu0 0.0
      %2294 = vmatprep.subr.mxu0 0.0
      %2295 = vmatpush1.msra.mxu0 0.0
      %2296 = vmatprep.subr.mxu0 0.0
      %2297 = vmatpush1.msra.mxu0 0.0
      %2298 = vmatprep.subr.mxu0 0.0
      %2299 = vmatpush1.msra.mxu0 0.0
      %2300 = vmatprep.subr.mxu0 0.0
      %2301 = vmatpush1.msra.mxu0 0.0
      %2302 = vmatprep.subr.mxu0 0.0
      %2303 = vmatpush1.msra.mxu0 %v2253
      %2304 = vmatprep.subr.mxu0 0.0
      %2305 = vmatpush1.msra.mxu0 %v2251
      %2306 = vmatprep.subr.mxu0 0.0
      %2307 = vmatpush1.msra.mxu0 %v2249
      %2308 = vmatprep.subr.mxu0 0.0
      %2309 = vmatpush1.msra.mxu0 %v2247
      %2310 = vmatprep.subr.mxu0 0.0
      %2311 = vmatpush1.msra.mxu0 %v2245
      %2312 = vmatprep.subr.mxu0 0.0
      %2313 = vmatpush1.msra.mxu0 %v2243
      %2314 = vmatprep.subr.mxu0 0.0
      %2315 = vmatpush1.msra.mxu0 %v2241
      %2316 = vmatprep.subr.mxu0 0.0
      %2317 = vmatpush1.msra.mxu0 %v2239
      %2318 = vmatprep.subr.mxu0 0.0
      %2319 = vmatpush2.msra.mxu0 0.0
      %2320 = vmatprep.subr.mxu0 0.0
      %2321 = vmatpush2.msra.mxu0 0.0
      %2322 = vmatprep.subr.mxu0 0.0
      %2323 = vmatpush2.msra.mxu0 0.0
      %2324 = vmatprep.subr.mxu0 0.0
      %2325 = vmatpush2.msra.mxu0 0.0
      %2326 = vmatprep.subr.mxu0 0.0
      %2327 = vmatpush2.msra.mxu0 0.0
      %2328 = vmatprep.subr.mxu0 0.0
      %2329 = vmatpush2.msra.mxu0 0.0
      %2330 = vmatprep.subr.mxu0 0.0
      %2331 = vmatpush2.msra.mxu0 0.0
      %2332 = vmatprep.subr.mxu0 0.0
      %2333 = vmatpush2.msra.mxu0 0.0
      %2334 = vmatprep.subr.mxu0 0.0
      %2335 = vmatpush2.msra.mxu0 0.0
      %2336 = vmatprep.subr.mxu0 0.0
      %2337 = vmatpush2.msra.mxu0 0.0
      %2338 = vmatprep.subr.mxu0 0.0
      %2339 = vmatpush2.msra.mxu0 0.0
      %2340 = vmatprep.subr.mxu0 0.0
      %2341 = vmatpush2.msra.mxu0 0.0
      %2342 = vmatprep.subr.mxu0 0.0
      %2343 = vmatpush2.msra.mxu0 0.0
      %2344 = vmatprep.subr.mxu0 0.0
      %2345 = vmatpush2.msra.mxu0 0.0
      %2346 = vmatprep.subr.mxu0 0.0
      %2347 = vmatpush2.msra.mxu0 0.0
      %2348 = vmatprep.subr.mxu0 0.0
      %2349 = vmatpush2.msra.mxu0 0.0
      %2350 = vmatprep.mubr.f32.mxu0 0.0
      %2351 = vmatmul.mubr.f32.gmra.mxu0 %v2263
      %v2352 = vpop.f32.mrf.mxu0
      %v2353 = vadd.f32 0.0, %v2352
      %v2354 = vpop.f32.mrf.mxu0
      %2355 = vmatprep.mubr.f32.mxu0 0.0
      %2356 = vmatmul.mubr.f32.gmra.mxu0 %v2266
      %v2357 = vpop.f32.mrf.mxu0
      %v2358 = vadd.f32 0.0, %v2357
      %v2359 = vpop.f32.mrf.mxu0
      %2360 = vmatprep.mubr.f32.mxu0 0.0
      %2361 = vmatmul.mubr.f32.gmra.mxu0 %v2269
      %v2362 = vpop.f32.mrf.mxu0
      %v2363 = vadd.f32 0.0, %v2362
      %v2364 = vpop.f32.mrf.mxu0
      %2365 = vmatprep.mubr.f32.mxu0 0.0
      %2366 = vmatmul.mubr.f32.gmra.mxu0 %v2272
      %v2367 = vpop.f32.mrf.mxu0
      %v2368 = vadd.f32 0.0, %v2367
      %v2369 = vpop.f32.mrf.mxu0
      %2370 = vmatprep.mubr.f32.mxu0 0.0
      %2371 = vmatmul.mubr.f32.gmra.mxu0 %v2275
      %v2372 = vpop.f32.mrf.mxu0
      %v2373 = vadd.f32 0.0, %v2372
      %v2374 = vpop.f32.mrf.mxu0
      %2375 = vmatprep.mubr.f32.mxu0 0.0
      %2376 = vmatmul.mubr.f32.gmra.mxu0 %v2278
      %v2377 = vpop.f32.mrf.mxu0
      %v2378 = vadd.f32 0.0, %v2377
      %v2379 = vpop.f32.mrf.mxu0
      %2380 = vmatprep.mubr.f32.mxu0 0.0
      %2381 = vmatmul.mubr.f32.gmra.mxu0 %v2281
      %v2382 = vpop.f32.mrf.mxu0
      %v2383 = vadd.f32 0.0, %v2382
      %v2384 = vpop.f32.mrf.mxu0
      %2385 = vmatprep.mubr.f32.mxu0 0.0
      %2386 = vmatmul.mubr.f32.gmra.mxu0 %v2284
      %v2387 = vpop.f32.mrf.mxu0
      %v2388 = vadd.f32 0.0, %v2387
      %v2389 = vpop.f32.mrf.mxu0
      %2390 = vdwg.mxu0
      %v2391 = vadd.f32 %v1918, %v2353
      %v2392 = vadd.f32 %v1923, %v2358
      %v2393 = vadd.f32 %v1928, %v2363
      %v2394 = vadd.f32 %v1933, %v2368
      %v2395 = vadd.f32 %v1938, %v2373
      %v2396 = vadd.f32 %v1943, %v2378
      %v2397 = vadd.f32 %v1948, %v2383
      %v2398 = vadd.f32 %v1953, %v2388
      %2407 = vrot.lane.b32.xlu0 %v2391, 8
      %v2408 = vpop.permute.xlu0 %2407
      %2409 = vrot.lane.b32.xlu0 %v2392, 8
      %v2410 = vpop.permute.xlu0 %2409
      %2411 = vrot.lane.b32.xlu0 %v2393, 8
      %v2412 = vpop.permute.xlu0 %2411
      %2413 = vrot.lane.b32.xlu0 %v2394, 8
      %v2414 = vpop.permute.xlu0 %2413
      %2415 = vrot.lane.b32.xlu0 %v2395, 8
      %v2416 = vpop.permute.xlu0 %2415
      %2417 = vrot.lane.b32.xlu0 %v2396, 8
      %v2418 = vpop.permute.xlu0 %2417
      %2419 = vrot.lane.b32.xlu0 %v2397, 8
      %v2420 = vpop.permute.xlu0 %2419
      %2421 = vrot.lane.b32.xlu0 %v2398, 8
      %v2422 = vpop.permute.xlu0 %2421
      %vm2431 = vcmask 130112
      %2432 = vst.msk [vmem:[#allocation4] sm:$0xff] %vm2431, %v2408
      %2433 = vst.msk [vmem:[#allocation4 + $0x8] sm:$0xff] %vm2431, %v2410
      %2434 = vst.msk [vmem:[#allocation4 + $0x10] sm:$0xff] %vm2431, %v2412
      %2435 = vst.msk [vmem:[#allocation4 + $0x18] sm:$0xff] %vm2431, %v2414
      %2436 = vst.msk [vmem:[#allocation4 + $0x20] sm:$0xff] %vm2431, %v2416
      %2437 = vst.msk [vmem:[#allocation4 + $0x28] sm:$0xff] %vm2431, %v2418
      %2438 = vst.msk [vmem:[#allocation4 + $0x30] sm:$0xff] %vm2431, %v2420
      %2439 = vst.msk [vmem:[#allocation4 + $0x38] sm:$0xff] %vm2431, %v2422
      %2448 = vxpose.xlu0.b32.start [1/16] %v2094, 128
      %2449 = vxpose.xlu0.b32.cont [2/16] %v2096, 128
      %2450 = vxpose.xlu0.b32.cont [3/16] %v2098, 128
      %2451 = vxpose.xlu0.b32.cont [4/16] %v2100, 128
      %2452 = vxpose.xlu0.b32.cont [5/16] %v2102, 128
      %2453 = vxpose.xlu0.b32.cont [6/16] %v2104, 128
      %2454 = vxpose.xlu0.b32.cont [7/16] %v2106, 128
      %2455 = vxpose.xlu0.b32.cont [8/16] %v2108, 128
      %2456 = vxpose.xlu0.b32.cont [9/16] 0.0, 128
      %2457 = vxpose.xlu0.b32.cont [10/16] 0.0, 128
      %2458 = vxpose.xlu0.b32.cont [11/16] 0.0, 128
      %2459 = vxpose.xlu0.b32.cont [12/16] 0.0, 128
      %2460 = vxpose.xlu0.b32.cont [13/16] 0.0, 128
      %2461 = vxpose.xlu0.b32.cont [14/16] 0.0, 128
      %2462 = vxpose.xlu0.b32.cont [15/16] 0.0, 128
      %2463 = vxpose.xlu0.b32.end [16/16] 0.0, 128
      %v2464 = vpop.trf.xlu0
      %v2465 = vpop.trf.xlu0
      %v2466 = vpop.trf.xlu0
      %v2467 = vpop.trf.xlu0
      %v2468 = vpop.trf.xlu0
      %v2469 = vpop.trf.xlu0
      %v2470 = vpop.trf.xlu0
      %v2471 = vpop.trf.xlu0
      %v2472 = vpop.trf.xlu0
      %v2473 = vpop.trf.xlu0
      %v2474 = vpop.trf.xlu0
      %v2475 = vpop.trf.xlu0
      %v2476 = vpop.trf.xlu0
      %v2477 = vpop.trf.xlu0
      %v2478 = vpop.trf.xlu0
      %v2479 = vpop.trf.xlu0
      %v2481 = vsel %vm1302, %v2464, 0
      %2483 = vmatprep.subr.mxu0 0.0
      %2484 = vmatpush1.msra.mxu0 0.0
      %2485 = vmatprep.subr.mxu0 0.0
      %2486 = vmatpush1.msra.mxu0 0.0
      %2487 = vmatprep.subr.mxu0 0.0
      %2488 = vmatpush1.msra.mxu0 0.0
      %2489 = vmatprep.subr.mxu0 0.0
      %2490 = vmatpush1.msra.mxu0 0.0
      %2491 = vmatprep.subr.mxu0 0.0
      %2492 = vmatpush1.msra.mxu0 0.0
      %2493 = vmatprep.subr.mxu0 0.0
      %2494 = vmatpush1.msra.mxu0 0.0
      %2495 = vmatprep.subr.mxu0 0.0
      %2496 = vmatpush1.msra.mxu0 0.0
      %2497 = vmatprep.subr.mxu0 0.0
      %2498 = vmatpush1.msra.mxu0 0.0
      %2499 = vmatprep.subr.mxu0 0.0
      %2500 = vmatpush1.msra.mxu0 %v2253
      %2501 = vmatprep.subr.mxu0 0.0
      %2502 = vmatpush1.msra.mxu0 %v2251
      %2503 = vmatprep.subr.mxu0 0.0
      %2504 = vmatpush1.msra.mxu0 %v2249
      %2505 = vmatprep.subr.mxu0 0.0
      %2506 = vmatpush1.msra.mxu0 %v2247
      %2507 = vmatprep.subr.mxu0 0.0
      %2508 = vmatpush1.msra.mxu0 %v2245
      %2509 = vmatprep.subr.mxu0 0.0
      %2510 = vmatpush1.msra.mxu0 %v2243
      %2511 = vmatprep.subr.mxu0 0.0
      %2512 = vmatpush1.msra.mxu0 %v2241
      %2513 = vmatprep.subr.mxu0 0.0
      %2514 = vmatpush1.msra.mxu0 %v2239
      %2515 = vmatprep.subr.mxu0 0.0
      %2516 = vmatpush2.msra.mxu0 0.0
      %2517 = vmatprep.subr.mxu0 0.0
      %2518 = vmatpush2.msra.mxu0 0.0
      %2519 = vmatprep.subr.mxu0 0.0
      %2520 = vmatpush2.msra.mxu0 0.0
      %2521 = vmatprep.subr.mxu0 0.0
      %2522 = vmatpush2.msra.mxu0 0.0
      %2523 = vmatprep.subr.mxu0 0.0
      %2524 = vmatpush2.msra.mxu0 0.0
      %2525 = vmatprep.subr.mxu0 0.0
      %2526 = vmatpush2.msra.mxu0 0.0
      %2527 = vmatprep.subr.mxu0 0.0
      %2528 = vmatpush2.msra.mxu0 0.0
      %2529 = vmatprep.subr.mxu0 0.0
      %2530 = vmatpush2.msra.mxu0 0.0
      %2531 = vmatprep.subr.mxu0 0.0
      %2532 = vmatpush2.msra.mxu0 0.0
      %2533 = vmatprep.subr.mxu0 0.0
      %2534 = vmatpush2.msra.mxu0 0.0
      %2535 = vmatprep.subr.mxu0 0.0
      %2536 = vmatpush2.msra.mxu0 0.0
      %2537 = vmatprep.subr.mxu0 0.0
      %2538 = vmatpush2.msra.mxu0 0.0
      %2539 = vmatprep.subr.mxu0 0.0
      %2540 = vmatpush2.msra.mxu0 0.0
      %2541 = vmatprep.subr.mxu0 0.0
      %2542 = vmatpush2.msra.mxu0 0.0
      %2543 = vmatprep.subr.mxu0 0.0
      %2544 = vmatpush2.msra.mxu0 0.0
      %2545 = vmatprep.subr.mxu0 0.0
      %2546 = vmatpush2.msra.mxu0 0.0
      %2547 = vmatprep.mubr.f32.mxu0 0.0
      %2548 = vmatmul.mubr.f32.gmra.mxu0 %v2481
      %v2549 = vpop.f32.mrf.mxu0
      %v2550 = vadd.f32 0.0, %v2549
      %v2551 = vpop.f32.mrf.mxu0
      %2552 = vdwg.mxu0
      %v2553 = vadd.f32 %v1679, %v2550
      %2554 = vst.msk [vmem:[%s1678] sm:$0xff] %vm713, %v2553
      %2563 = vxpose.xlu0.b32.start [1/16] %v1957, 128
      %2564 = vxpose.xlu0.b32.cont [2/16] %v1959, 128
      %2565 = vxpose.xlu0.b32.cont [3/16] %v1961, 128
      %2566 = vxpose.xlu0.b32.cont [4/16] %v1963, 128
      %2567 = vxpose.xlu0.b32.cont [5/16] %v1965, 128
      %2568 = vxpose.xlu0.b32.cont [6/16] %v1967, 128
      %2569 = vxpose.xlu0.b32.cont [7/16] %v1969, 128
      %2570 = vxpose.xlu0.b32.cont [8/16] %v1971, 128
      %2571 = vxpose.xlu0.b32.cont [9/16] 0.0, 128
      %2572 = vxpose.xlu0.b32.cont [10/16] 0.0, 128
      %2573 = vxpose.xlu0.b32.cont [11/16] 0.0, 128
      %2574 = vxpose.xlu0.b32.cont [12/16] 0.0, 128
      %2575 = vxpose.xlu0.b32.cont [13/16] 0.0, 128
      %2576 = vxpose.xlu0.b32.cont [14/16] 0.0, 128
      %2577 = vxpose.xlu0.b32.cont [15/16] 0.0, 128
      %2578 = vxpose.xlu0.b32.end [16/16] 0.0, 128
      %v2579 = vpop.trf.xlu0
      %v2580 = vpop.trf.xlu0
      %v2581 = vpop.trf.xlu0
      %v2582 = vpop.trf.xlu0
      %v2583 = vpop.trf.xlu0
      %v2584 = vpop.trf.xlu0
      %v2585 = vpop.trf.xlu0
      %v2586 = vpop.trf.xlu0
      %v2587 = vpop.trf.xlu0
      %v2588 = vpop.trf.xlu0
      %v2589 = vpop.trf.xlu0
      %v2590 = vpop.trf.xlu0
      %v2591 = vpop.trf.xlu0
      %v2592 = vpop.trf.xlu0
      %v2593 = vpop.trf.xlu0
      %v2594 = vpop.trf.xlu0
      %v2596 = vsel %vm1302, %v2579, 0
      %2598 = vmatprep.subr.mxu0 0.0
      %2599 = vmatpush1.msra.mxu0 0.0
      %2600 = vmatprep.subr.mxu0 0.0
      %2601 = vmatpush1.msra.mxu0 0.0
      %2602 = vmatprep.subr.mxu0 0.0
      %2603 = vmatpush1.msra.mxu0 0.0
      %2604 = vmatprep.subr.mxu0 0.0
      %2605 = vmatpush1.msra.mxu0 0.0
      %2606 = vmatprep.subr.mxu0 0.0
      %2607 = vmatpush1.msra.mxu0 0.0
      %2608 = vmatprep.subr.mxu0 0.0
      %2609 = vmatpush1.msra.mxu0 0.0
      %2610 = vmatprep.subr.mxu0 0.0
      %2611 = vmatpush1.msra.mxu0 0.0
      %2612 = vmatprep.subr.mxu0 0.0
      %2613 = vmatpush1.msra.mxu0 0.0
      %2614 = vmatprep.subr.mxu0 0.0
      %2615 = vmatpush1.msra.mxu0 %v2253
      %2616 = vmatprep.subr.mxu0 0.0
      %2617 = vmatpush1.msra.mxu0 %v2251
      %2618 = vmatprep.subr.mxu0 0.0
      %2619 = vmatpush1.msra.mxu0 %v2249
      %2620 = vmatprep.subr.mxu0 0.0
      %2621 = vmatpush1.msra.mxu0 %v2247
      %2622 = vmatprep.subr.mxu0 0.0
      %2623 = vmatpush1.msra.mxu0 %v2245
      %2624 = vmatprep.subr.mxu0 0.0
      %2625 = vmatpush1.msra.mxu0 %v2243
      %2626 = vmatprep.subr.mxu0 0.0
      %2627 = vmatpush1.msra.mxu0 %v2241
      %2628 = vmatprep.subr.mxu0 0.0
      %2629 = vmatpush1.msra.mxu0 %v2239
      %2630 = vmatprep.subr.mxu0 0.0
      %2631 = vmatpush2.msra.mxu0 0.0
      %2632 = vmatprep.subr.mxu0 0.0
      %2633 = vmatpush2.msra.mxu0 0.0
      %2634 = vmatprep.subr.mxu0 0.0
      %2635 = vmatpush2.msra.mxu0 0.0
      %2636 = vmatprep.subr.mxu0 0.0
      %2637 = vmatpush2.msra.mxu0 0.0
      %2638 = vmatprep.subr.mxu0 0.0
      %2639 = vmatpush2.msra.mxu0 0.0
      %2640 = vmatprep.subr.mxu0 0.0
      %2641 = vmatpush2.msra.mxu0 0.0
      %2642 = vmatprep.subr.mxu0 0.0
      %2643 = vmatpush2.msra.mxu0 0.0
      %2644 = vmatprep.subr.mxu0 0.0
      %2645 = vmatpush2.msra.mxu0 0.0
      %2646 = vmatprep.subr.mxu0 0.0
      %2647 = vmatpush2.msra.mxu0 0.0
      %2648 = vmatprep.subr.mxu0 0.0
      %2649 = vmatpush2.msra.mxu0 0.0
      %2650 = vmatprep.subr.mxu0 0.0
      %2651 = vmatpush2.msra.mxu0 0.0
      %2652 = vmatprep.subr.mxu0 0.0
      %2653 = vmatpush2.msra.mxu0 0.0
      %2654 = vmatprep.subr.mxu0 0.0
      %2655 = vmatpush2.msra.mxu0 0.0
      %2656 = vmatprep.subr.mxu0 0.0
      %2657 = vmatpush2.msra.mxu0 0.0
      %2658 = vmatprep.subr.mxu0 0.0
      %2659 = vmatpush2.msra.mxu0 0.0
      %2660 = vmatprep.subr.mxu0 0.0
      %2661 = vmatpush2.msra.mxu0 0.0
      %2662 = vmatprep.mubr.f32.mxu0 0.0
      %2663 = vmatmul.mubr.f32.gmra.mxu0 %v2596
      %v2664 = vpop.f32.mrf.mxu0
      %v2665 = vadd.f32 0.0, %v2664
      %v2666 = vpop.f32.mrf.mxu0
      %2667 = vdwg.mxu0
      %v2668 = vadd.f32 %v1681, %v2665
      %2669 = vst.msk [vmem:[%s1680] sm:$0xff] %vm713, %v2668
      %s2670 = scalar_lea.vmem [#allocation2], 16
      %v2671 = vld [vmem:[%s2670] sm:$0xff]
      %s2672 = scalar_lea.vmem [#allocation3], 16
      %v2673 = vld [vmem:[%s2672] sm:$0xff]
      %2674 = vrot.lane.b32.xlu0 %v604, 112
      %v2675 = vpop.permute.xlu0 %2674
      %2676 = vrot.lane.b32.xlu0 %v605, 112
      %v2677 = vpop.permute.xlu0 %2676
      %2678 = vrot.lane.b32.xlu0 %v606, 112
      %v2679 = vpop.permute.xlu0 %2678
      %2680 = vrot.lane.b32.xlu0 %v607, 112
      %v2681 = vpop.permute.xlu0 %2680
      %2682 = vrot.lane.b32.xlu0 %v608, 112
      %v2683 = vpop.permute.xlu0 %2682
      %2684 = vrot.lane.b32.xlu0 %v609, 112
      %v2685 = vpop.permute.xlu0 %2684
      %2686 = vrot.lane.b32.xlu0 %v610, 112
      %v2687 = vpop.permute.xlu0 %2686
      %2688 = vrot.lane.b32.xlu0 %v611, 112
      %v2689 = vpop.permute.xlu0 %2688
      %v2690 = vsel %vm713, %v2675, 0
      %v2692 = vsel %vm713, %v2677, 0
      %v2694 = vsel %vm713, %v2679, 0
      %v2696 = vsel %vm713, %v2681, 0
      %v2698 = vsel %vm713, %v2683, 0
      %v2700 = vsel %vm713, %v2685, 0
      %v2702 = vsel %vm713, %v2687, 0
      %v2704 = vsel %vm713, %v2689, 0
      %2706 = vmatprep.subr.mxu0 0.0
      %2707 = vmatpush1.msra.mxu0 0.0
      %2708 = vmatprep.subr.mxu0 0.0
      %2709 = vmatpush1.msra.mxu0 0.0
      %2710 = vmatprep.subr.mxu0 0.0
      %2711 = vmatpush1.msra.mxu0 0.0
      %2712 = vmatprep.subr.mxu0 0.0
      %2713 = vmatpush1.msra.mxu0 0.0
      %2714 = vmatprep.subr.mxu0 0.0
      %2715 = vmatpush1.msra.mxu0 0.0
      %2716 = vmatprep.subr.mxu0 0.0
      %2717 = vmatpush1.msra.mxu0 0.0
      %2718 = vmatprep.subr.mxu0 0.0
      %2719 = vmatpush1.msra.mxu0 0.0
      %2720 = vmatprep.subr.mxu0 0.0
      %2721 = vmatpush1.msra.mxu0 0.0
      %2722 = vmatprep.subr.mxu0 0.0
      %2723 = vmatpush1.msra.mxu0 0.0
      %2724 = vmatprep.subr.mxu0 0.0
      %2725 = vmatpush1.msra.mxu0 0.0
      %2726 = vmatprep.subr.mxu0 0.0
      %2727 = vmatpush1.msra.mxu0 0.0
      %2728 = vmatprep.subr.mxu0 0.0
      %2729 = vmatpush1.msra.mxu0 0.0
      %2730 = vmatprep.subr.mxu0 0.0
      %2731 = vmatpush1.msra.mxu0 0.0
      %2732 = vmatprep.subr.mxu0 0.0
      %2733 = vmatpush1.msra.mxu0 0.0
      %2734 = vmatprep.subr.mxu0 0.0
      %2735 = vmatpush1.msra.mxu0 0.0
      %2736 = vmatprep.subr.mxu0 0.0
      %2737 = vmatpush1.msra.mxu0 %v2673
      %2738 = vmatprep.subr.mxu0 0.0
      %2739 = vmatpush2.msra.mxu0 0.0
      %2740 = vmatprep.subr.mxu0 0.0
      %2741 = vmatpush2.msra.mxu0 0.0
      %2742 = vmatprep.subr.mxu0 0.0
      %2743 = vmatpush2.msra.mxu0 0.0
      %2744 = vmatprep.subr.mxu0 0.0
      %2745 = vmatpush2.msra.mxu0 0.0
      %2746 = vmatprep.subr.mxu0 0.0
      %2747 = vmatpush2.msra.mxu0 0.0
      %2748 = vmatprep.subr.mxu0 0.0
      %2749 = vmatpush2.msra.mxu0 0.0
      %2750 = vmatprep.subr.mxu0 0.0
      %2751 = vmatpush2.msra.mxu0 0.0
      %2752 = vmatprep.subr.mxu0 0.0
      %2753 = vmatpush2.msra.mxu0 0.0
      %2754 = vmatprep.subr.mxu0 0.0
      %2755 = vmatpush2.msra.mxu0 0.0
      %2756 = vmatprep.subr.mxu0 0.0
      %2757 = vmatpush2.msra.mxu0 0.0
      %2758 = vmatprep.subr.mxu0 0.0
      %2759 = vmatpush2.msra.mxu0 0.0
      %2760 = vmatprep.subr.mxu0 0.0
      %2761 = vmatpush2.msra.mxu0 0.0
      %2762 = vmatprep.subr.mxu0 0.0
      %2763 = vmatpush2.msra.mxu0 0.0
      %2764 = vmatprep.subr.mxu0 0.0
      %2765 = vmatpush2.msra.mxu0 0.0
      %2766 = vmatprep.subr.mxu0 0.0
      %2767 = vmatpush2.msra.mxu0 0.0
      %2768 = vmatprep.subr.mxu0 0.0
      %2769 = vmatpush2.msra.mxu0 0.0
      %2770 = vmatprep.mubr.f32.mxu0 0.0
      %2771 = vmatmul.mubr.f32.gmra.mxu0 %v2690
      %v2772 = vpop.f32.mrf.mxu0
      %v2773 = vadd.f32 0.0, %v2772
      %v2774 = vpop.f32.mrf.mxu0
      %2775 = vmatprep.mubr.f32.mxu0 0.0
      %2776 = vmatmul.mubr.f32.gmra.mxu0 %v2692
      %v2777 = vpop.f32.mrf.mxu0
      %v2778 = vadd.f32 0.0, %v2777
      %v2779 = vpop.f32.mrf.mxu0
      %2780 = vmatprep.mubr.f32.mxu0 0.0
      %2781 = vmatmul.mubr.f32.gmra.mxu0 %v2694
      %v2782 = vpop.f32.mrf.mxu0
      %v2783 = vadd.f32 0.0, %v2782
      %v2784 = vpop.f32.mrf.mxu0
      %2785 = vmatprep.mubr.f32.mxu0 0.0
      %2786 = vmatmul.mubr.f32.gmra.mxu0 %v2696
      %v2787 = vpop.f32.mrf.mxu0
      %v2788 = vadd.f32 0.0, %v2787
      %v2789 = vpop.f32.mrf.mxu0
      %2790 = vmatprep.mubr.f32.mxu0 0.0
      %2791 = vmatmul.mubr.f32.gmra.mxu0 %v2698
      %v2792 = vpop.f32.mrf.mxu0
      %v2793 = vadd.f32 0.0, %v2792
      %v2794 = vpop.f32.mrf.mxu0
      %2795 = vmatprep.mubr.f32.mxu0 0.0
      %2796 = vmatmul.mubr.f32.gmra.mxu0 %v2700
      %v2797 = vpop.f32.mrf.mxu0
      %v2798 = vadd.f32 0.0, %v2797
      %v2799 = vpop.f32.mrf.mxu0
      %2800 = vmatprep.mubr.f32.mxu0 0.0
      %2801 = vmatmul.mubr.f32.gmra.mxu0 %v2702
      %v2802 = vpop.f32.mrf.mxu0
      %v2803 = vadd.f32 0.0, %v2802
      %v2804 = vpop.f32.mrf.mxu0
      %2805 = vmatprep.mubr.f32.mxu0 0.0
      %2806 = vmatmul.mubr.f32.gmra.mxu0 %v2704
      %v2807 = vpop.f32.mrf.mxu0
      %v2808 = vadd.f32 0.0, %v2807
      %v2809 = vpop.f32.mrf.mxu0
      %2810 = vdwg.mxu0
      %2811 = vrot.lane.b32.xlu0 %v596, 112
      %v2812 = vpop.permute.xlu0 %2811
      %2813 = vrot.lane.b32.xlu0 %v597, 112
      %v2814 = vpop.permute.xlu0 %2813
      %2815 = vrot.lane.b32.xlu0 %v598, 112
      %v2816 = vpop.permute.xlu0 %2815
      %2817 = vrot.lane.b32.xlu0 %v599, 112
      %v2818 = vpop.permute.xlu0 %2817
      %2819 = vrot.lane.b32.xlu0 %v600, 112
      %v2820 = vpop.permute.xlu0 %2819
      %2821 = vrot.lane.b32.xlu0 %v601, 112
      %v2822 = vpop.permute.xlu0 %2821
      %2823 = vrot.lane.b32.xlu0 %v602, 112
      %v2824 = vpop.permute.xlu0 %2823
      %2825 = vrot.lane.b32.xlu0 %v603, 112
      %v2826 = vpop.permute.xlu0 %2825
      %v2827 = vsel %vm713, %v2812, 0
      %v2829 = vsel %vm713, %v2814, 0
      %v2831 = vsel %vm713, %v2816, 0
      %v2833 = vsel %vm713, %v2818, 0
      %v2835 = vsel %vm713, %v2820, 0
      %v2837 = vsel %vm713, %v2822, 0
      %v2839 = vsel %vm713, %v2824, 0
      %v2841 = vsel %vm713, %v2826, 0
      %2843 = vmatprep.subr.mxu0 0.0
      %2844 = vmatpush1.msra.mxu0 0.0
      %2845 = vmatprep.subr.mxu0 0.0
      %2846 = vmatpush1.msra.mxu0 0.0
      %2847 = vmatprep.subr.mxu0 0.0
      %2848 = vmatpush1.msra.mxu0 0.0
      %2849 = vmatprep.subr.mxu0 0.0
      %2850 = vmatpush1.msra.mxu0 0.0
      %2851 = vmatprep.subr.mxu0 0.0
      %2852 = vmatpush1.msra.mxu0 0.0
      %2853 = vmatprep.subr.mxu0 0.0
      %2854 = vmatpush1.msra.mxu0 0.0
      %2855 = vmatprep.subr.mxu0 0.0
      %2856 = vmatpush1.msra.mxu0 0.0
      %2857 = vmatprep.subr.mxu0 0.0
      %2858 = vmatpush1.msra.mxu0 0.0
      %2859 = vmatprep.subr.mxu0 0.0
      %2860 = vmatpush1.msra.mxu0 0.0
      %2861 = vmatprep.subr.mxu0 0.0
      %2862 = vmatpush1.msra.mxu0 0.0
      %2863 = vmatprep.subr.mxu0 0.0
      %2864 = vmatpush1.msra.mxu0 0.0
      %2865 = vmatprep.subr.mxu0 0.0
      %2866 = vmatpush1.msra.mxu0 0.0
      %2867 = vmatprep.subr.mxu0 0.0
      %2868 = vmatpush1.msra.mxu0 0.0
      %2869 = vmatprep.subr.mxu0 0.0
      %2870 = vmatpush1.msra.mxu0 0.0
      %2871 = vmatprep.subr.mxu0 0.0
      %2872 = vmatpush1.msra.mxu0 0.0
      %2873 = vmatprep.subr.mxu0 0.0
      %2874 = vmatpush1.msra.mxu0 %v2671
      %2875 = vmatprep.subr.mxu0 0.0
      %2876 = vmatpush2.msra.mxu0 0.0
      %2877 = vmatprep.subr.mxu0 0.0
      %2878 = vmatpush2.msra.mxu0 0.0
      %2879 = vmatprep.subr.mxu0 0.0
      %2880 = vmatpush2.msra.mxu0 0.0
      %2881 = vmatprep.subr.mxu0 0.0
      %2882 = vmatpush2.msra.mxu0 0.0
      %2883 = vmatprep.subr.mxu0 0.0
      %2884 = vmatpush2.msra.mxu0 0.0
      %2885 = vmatprep.subr.mxu0 0.0
      %2886 = vmatpush2.msra.mxu0 0.0
      %2887 = vmatprep.subr.mxu0 0.0
      %2888 = vmatpush2.msra.mxu0 0.0
      %2889 = vmatprep.subr.mxu0 0.0
      %2890 = vmatpush2.msra.mxu0 0.0
      %2891 = vmatprep.subr.mxu0 0.0
      %2892 = vmatpush2.msra.mxu0 0.0
      %2893 = vmatprep.subr.mxu0 0.0
      %2894 = vmatpush2.msra.mxu0 0.0
      %2895 = vmatprep.subr.mxu0 0.0
      %2896 = vmatpush2.msra.mxu0 0.0
      %2897 = vmatprep.subr.mxu0 0.0
      %2898 = vmatpush2.msra.mxu0 0.0
      %2899 = vmatprep.subr.mxu0 0.0
      %2900 = vmatpush2.msra.mxu0 0.0
      %2901 = vmatprep.subr.mxu0 0.0
      %2902 = vmatpush2.msra.mxu0 0.0
      %2903 = vmatprep.subr.mxu0 0.0
      %2904 = vmatpush2.msra.mxu0 0.0
      %2905 = vmatprep.subr.mxu0 0.0
      %2906 = vmatpush2.msra.mxu0 0.0
      %2907 = vmatprep.mubr.f32.mxu0 0.0
      %2908 = vmatmul.mubr.f32.gmra.mxu0 %v2827
      %v2909 = vpop.f32.mrf.mxu0
      %v2910 = vadd.f32 %v2773, %v2909
      %v2911 = vpop.f32.mrf.mxu0
      %2912 = vmatprep.mubr.f32.mxu0 0.0
      %2913 = vmatmul.mubr.f32.gmra.mxu0 %v2829
      %v2914 = vpop.f32.mrf.mxu0
      %v2915 = vadd.f32 %v2778, %v2914
      %v2916 = vpop.f32.mrf.mxu0
      %2917 = vmatprep.mubr.f32.mxu0 0.0
      %2918 = vmatmul.mubr.f32.gmra.mxu0 %v2831
      %v2919 = vpop.f32.mrf.mxu0
      %v2920 = vadd.f32 %v2783, %v2919
      %v2921 = vpop.f32.mrf.mxu0
      %2922 = vmatprep.mubr.f32.mxu0 0.0
      %2923 = vmatmul.mubr.f32.gmra.mxu0 %v2833
      %v2924 = vpop.f32.mrf.mxu0
      %v2925 = vadd.f32 %v2788, %v2924
      %v2926 = vpop.f32.mrf.mxu0
      %2927 = vmatprep.mubr.f32.mxu0 0.0
      %2928 = vmatmul.mubr.f32.gmra.mxu0 %v2835
      %v2929 = vpop.f32.mrf.mxu0
      %v2930 = vadd.f32 %v2793, %v2929
      %v2931 = vpop.f32.mrf.mxu0
      %2932 = vmatprep.mubr.f32.mxu0 0.0
      %2933 = vmatmul.mubr.f32.gmra.mxu0 %v2837
      %v2934 = vpop.f32.mrf.mxu0
      %v2935 = vadd.f32 %v2798, %v2934
      %v2936 = vpop.f32.mrf.mxu0
      %2937 = vmatprep.mubr.f32.mxu0 0.0
      %2938 = vmatmul.mubr.f32.gmra.mxu0 %v2839
      %v2939 = vpop.f32.mrf.mxu0
      %v2940 = vadd.f32 %v2803, %v2939
      %v2941 = vpop.f32.mrf.mxu0
      %2942 = vmatprep.mubr.f32.mxu0 0.0
      %2943 = vmatmul.mubr.f32.gmra.mxu0 %v2841
      %v2944 = vpop.f32.mrf.mxu0
      %v2945 = vadd.f32 %v2808, %v2944
      %v2946 = vpop.f32.mrf.mxu0
      %2947 = vdwg.mxu0
      %2948 = vrot.lane.b32.xlu0 %v684, 80
      %v2949 = vpop.permute.xlu0 %2948
      %2950 = vrot.lane.b32.xlu0 %v685, 80
      %v2951 = vpop.permute.xlu0 %2950
      %2952 = vrot.lane.b32.xlu0 %v686, 80
      %v2953 = vpop.permute.xlu0 %2952
      %2954 = vrot.lane.b32.xlu0 %v687, 80
      %v2955 = vpop.permute.xlu0 %2954
      %2956 = vrot.lane.b32.xlu0 %v688, 80
      %v2957 = vpop.permute.xlu0 %2956
      %2958 = vrot.lane.b32.xlu0 %v689, 80
      %v2959 = vpop.permute.xlu0 %2958
      %2960 = vrot.lane.b32.xlu0 %v690, 80
      %v2961 = vpop.permute.xlu0 %2960
      %2962 = vrot.lane.b32.xlu0 %v691, 80
      %v2963 = vpop.permute.xlu0 %2962
      %v2964 = vsel %vm713, %v2949, 0
      %v2966 = vsel %vm713, %v2951, 0
      %v2968 = vsel %vm713, %v2953, 0
      %v2970 = vsel %vm713, %v2955, 0
      %v2972 = vsel %vm713, %v2957, 0
      %v2974 = vsel %vm713, %v2959, 0
      %v2976 = vsel %vm713, %v2961, 0
      %v2978 = vsel %vm713, %v2963, 0
      %2980 = vmatprep.subr.mxu0 0.0
      %2981 = vmatpush1.xpose.msra.mxu0 0.0
      %2982 = vmatprep.subr.mxu0 0.0
      %2983 = vmatpush1.xpose.msra.mxu0 0.0
      %2984 = vmatprep.subr.mxu0 0.0
      %2985 = vmatpush1.xpose.msra.mxu0 0.0
      %2986 = vmatprep.subr.mxu0 0.0
      %2987 = vmatpush1.xpose.msra.mxu0 0.0
      %2988 = vmatprep.subr.mxu0 0.0
      %2989 = vmatpush1.xpose.msra.mxu0 0.0
      %2990 = vmatprep.subr.mxu0 0.0
      %2991 = vmatpush1.xpose.msra.mxu0 0.0
      %2992 = vmatprep.subr.mxu0 0.0
      %2993 = vmatpush1.xpose.msra.mxu0 0.0
      %2994 = vmatprep.subr.mxu0 0.0
      %2995 = vmatpush1.xpose.msra.mxu0 0.0
      %2996 = vmatprep.subr.mxu0 0.0
      %2997 = vmatpush1.xpose.msra.mxu0 %v2978
      %2998 = vmatprep.subr.mxu0 0.0
      %2999 = vmatpush1.xpose.msra.mxu0 %v2976
      %3000 = vmatprep.subr.mxu0 0.0
      %3001 = vmatpush1.xpose.msra.mxu0 %v2974
      %3002 = vmatprep.subr.mxu0 0.0
      %3003 = vmatpush1.xpose.msra.mxu0 %v2972
      %3004 = vmatprep.subr.mxu0 0.0
      %3005 = vmatpush1.xpose.msra.mxu0 %v2970
      %3006 = vmatprep.subr.mxu0 0.0
      %3007 = vmatpush1.xpose.msra.mxu0 %v2968
      %3008 = vmatprep.subr.mxu0 0.0
      %3009 = vmatpush1.xpose.msra.mxu0 %v2966
      %3010 = vmatprep.subr.mxu0 0.0
      %3011 = vmatpush1.xpose.msra.mxu0 %v2964
      %3012 = vmatprep.subr.mxu0 0.0
      %3013 = vmatpush2.xpose.msra.mxu0 0.0
      %3014 = vmatprep.subr.mxu0 0.0
      %3015 = vmatpush2.xpose.msra.mxu0 0.0
      %3016 = vmatprep.subr.mxu0 0.0
      %3017 = vmatpush2.xpose.msra.mxu0 0.0
      %3018 = vmatprep.subr.mxu0 0.0
      %3019 = vmatpush2.xpose.msra.mxu0 0.0
      %3020 = vmatprep.subr.mxu0 0.0
      %3021 = vmatpush2.xpose.msra.mxu0 0.0
      %3022 = vmatprep.subr.mxu0 0.0
      %3023 = vmatpush2.xpose.msra.mxu0 0.0
      %3024 = vmatprep.subr.mxu0 0.0
      %3025 = vmatpush2.xpose.msra.mxu0 0.0
      %3026 = vmatprep.subr.mxu0 0.0
      %3027 = vmatpush2.xpose.msra.mxu0 0.0
      %3028 = vmatprep.subr.mxu0 0.0
      %3029 = vmatpush2.xpose.msra.mxu0 0.0
      %3030 = vmatprep.subr.mxu0 0.0
      %3031 = vmatpush2.xpose.msra.mxu0 0.0
      %3032 = vmatprep.subr.mxu0 0.0
      %3033 = vmatpush2.xpose.msra.mxu0 0.0
      %3034 = vmatprep.subr.mxu0 0.0
      %3035 = vmatpush2.xpose.msra.mxu0 0.0
      %3036 = vmatprep.subr.mxu0 0.0
      %3037 = vmatpush2.xpose.msra.mxu0 0.0
      %3038 = vmatprep.subr.mxu0 0.0
      %3039 = vmatpush2.xpose.msra.mxu0 0.0
      %3040 = vmatprep.subr.mxu0 0.0
      %3041 = vmatpush2.xpose.msra.mxu0 0.0
      %3042 = vmatprep.subr.mxu0 0.0
      %3043 = vmatpush2.xpose.msra.mxu0 0.0
      %3044 = vmatprep.mubr.f32.mxu0 0.0
      %3045 = vmatmul.mubr.f32.gmra.mxu0 %v2690
      %v3046 = vpop.f32.mrf.mxu0
      %v3047 = vadd.f32 0.0, %v3046
      %v3048 = vpop.f32.mrf.mxu0
      %3049 = vmatprep.mubr.f32.mxu0 0.0
      %3050 = vmatmul.mubr.f32.gmra.mxu0 %v2692
      %v3051 = vpop.f32.mrf.mxu0
      %v3052 = vadd.f32 0.0, %v3051
      %v3053 = vpop.f32.mrf.mxu0
      %3054 = vmatprep.mubr.f32.mxu0 0.0
      %3055 = vmatmul.mubr.f32.gmra.mxu0 %v2694
      %v3056 = vpop.f32.mrf.mxu0
      %v3057 = vadd.f32 0.0, %v3056
      %v3058 = vpop.f32.mrf.mxu0
      %3059 = vmatprep.mubr.f32.mxu0 0.0
      %3060 = vmatmul.mubr.f32.gmra.mxu0 %v2696
      %v3061 = vpop.f32.mrf.mxu0
      %v3062 = vadd.f32 0.0, %v3061
      %v3063 = vpop.f32.mrf.mxu0
      %3064 = vmatprep.mubr.f32.mxu0 0.0
      %3065 = vmatmul.mubr.f32.gmra.mxu0 %v2698
      %v3066 = vpop.f32.mrf.mxu0
      %v3067 = vadd.f32 0.0, %v3066
      %v3068 = vpop.f32.mrf.mxu0
      %3069 = vmatprep.mubr.f32.mxu0 0.0
      %3070 = vmatmul.mubr.f32.gmra.mxu0 %v2700
      %v3071 = vpop.f32.mrf.mxu0
      %v3072 = vadd.f32 0.0, %v3071
      %v3073 = vpop.f32.mrf.mxu0
      %3074 = vmatprep.mubr.f32.mxu0 0.0
      %3075 = vmatmul.mubr.f32.gmra.mxu0 %v2702
      %v3076 = vpop.f32.mrf.mxu0
      %v3077 = vadd.f32 0.0, %v3076
      %v3078 = vpop.f32.mrf.mxu0
      %3079 = vmatprep.mubr.f32.mxu0 0.0
      %3080 = vmatmul.mubr.f32.gmra.mxu0 %v2704
      %v3081 = vpop.f32.mrf.mxu0
      %v3082 = vadd.f32 0.0, %v3081
      %v3083 = vpop.f32.mrf.mxu0
      %3084 = vdwg.mxu0
      %3085 = vrot.lane.b32.xlu0 %v644, 80
      %v3086 = vpop.permute.xlu0 %3085
      %3087 = vrot.lane.b32.xlu0 %v645, 80
      %v3088 = vpop.permute.xlu0 %3087
      %3089 = vrot.lane.b32.xlu0 %v646, 80
      %v3090 = vpop.permute.xlu0 %3089
      %3091 = vrot.lane.b32.xlu0 %v647, 80
      %v3092 = vpop.permute.xlu0 %3091
      %3093 = vrot.lane.b32.xlu0 %v648, 80
      %v3094 = vpop.permute.xlu0 %3093
      %3095 = vrot.lane.b32.xlu0 %v649, 80
      %v3096 = vpop.permute.xlu0 %3095
      %3097 = vrot.lane.b32.xlu0 %v650, 80
      %v3098 = vpop.permute.xlu0 %3097
      %3099 = vrot.lane.b32.xlu0 %v651, 80
      %v3100 = vpop.permute.xlu0 %3099
      %v3101 = vsel %vm713, %v3086, 0
      %v3103 = vsel %vm713, %v3088, 0
      %v3105 = vsel %vm713, %v3090, 0
      %v3107 = vsel %vm713, %v3092, 0
      %v3109 = vsel %vm713, %v3094, 0
      %v3111 = vsel %vm713, %v3096, 0
      %v3113 = vsel %vm713, %v3098, 0
      %v3115 = vsel %vm713, %v3100, 0
      %3117 = vmatprep.subr.mxu0 0.0
      %3118 = vmatpush1.xpose.msra.mxu0 0.0
      %3119 = vmatprep.subr.mxu0 0.0
      %3120 = vmatpush1.xpose.msra.mxu0 0.0
      %3121 = vmatprep.subr.mxu0 0.0
      %3122 = vmatpush1.xpose.msra.mxu0 0.0
      %3123 = vmatprep.subr.mxu0 0.0
      %3124 = vmatpush1.xpose.msra.mxu0 0.0
      %3125 = vmatprep.subr.mxu0 0.0
      %3126 = vmatpush1.xpose.msra.mxu0 0.0
      %3127 = vmatprep.subr.mxu0 0.0
      %3128 = vmatpush1.xpose.msra.mxu0 0.0
      %3129 = vmatprep.subr.mxu0 0.0
      %3130 = vmatpush1.xpose.msra.mxu0 0.0
      %3131 = vmatprep.subr.mxu0 0.0
      %3132 = vmatpush1.xpose.msra.mxu0 0.0
      %3133 = vmatprep.subr.mxu0 0.0
      %3134 = vmatpush1.xpose.msra.mxu0 %v3115
      %3135 = vmatprep.subr.mxu0 0.0
      %3136 = vmatpush1.xpose.msra.mxu0 %v3113
      %3137 = vmatprep.subr.mxu0 0.0
      %3138 = vmatpush1.xpose.msra.mxu0 %v3111
      %3139 = vmatprep.subr.mxu0 0.0
      %3140 = vmatpush1.xpose.msra.mxu0 %v3109
      %3141 = vmatprep.subr.mxu0 0.0
      %3142 = vmatpush1.xpose.msra.mxu0 %v3107
      %3143 = vmatprep.subr.mxu0 0.0
      %3144 = vmatpush1.xpose.msra.mxu0 %v3105
      %3145 = vmatprep.subr.mxu0 0.0
      %3146 = vmatpush1.xpose.msra.mxu0 %v3103
      %3147 = vmatprep.subr.mxu0 0.0
      %3148 = vmatpush1.xpose.msra.mxu0 %v3101
      %3149 = vmatprep.subr.mxu0 0.0
      %3150 = vmatpush2.xpose.msra.mxu0 0.0
      %3151 = vmatprep.subr.mxu0 0.0
      %3152 = vmatpush2.xpose.msra.mxu0 0.0
      %3153 = vmatprep.subr.mxu0 0.0
      %3154 = vmatpush2.xpose.msra.mxu0 0.0
      %3155 = vmatprep.subr.mxu0 0.0
      %3156 = vmatpush2.xpose.msra.mxu0 0.0
      %3157 = vmatprep.subr.mxu0 0.0
      %3158 = vmatpush2.xpose.msra.mxu0 0.0
      %3159 = vmatprep.subr.mxu0 0.0
      %3160 = vmatpush2.xpose.msra.mxu0 0.0
      %3161 = vmatprep.subr.mxu0 0.0
      %3162 = vmatpush2.xpose.msra.mxu0 0.0
      %3163 = vmatprep.subr.mxu0 0.0
      %3164 = vmatpush2.xpose.msra.mxu0 0.0
      %3165 = vmatprep.subr.mxu0 0.0
      %3166 = vmatpush2.xpose.msra.mxu0 0.0
      %3167 = vmatprep.subr.mxu0 0.0
      %3168 = vmatpush2.xpose.msra.mxu0 0.0
      %3169 = vmatprep.subr.mxu0 0.0
      %3170 = vmatpush2.xpose.msra.mxu0 0.0
      %3171 = vmatprep.subr.mxu0 0.0
      %3172 = vmatpush2.xpose.msra.mxu0 0.0
      %3173 = vmatprep.subr.mxu0 0.0
      %3174 = vmatpush2.xpose.msra.mxu0 0.0
      %3175 = vmatprep.subr.mxu0 0.0
      %3176 = vmatpush2.xpose.msra.mxu0 0.0
      %3177 = vmatprep.subr.mxu0 0.0
      %3178 = vmatpush2.xpose.msra.mxu0 0.0
      %3179 = vmatprep.subr.mxu0 0.0
      %3180 = vmatpush2.xpose.msra.mxu0 0.0
      %3181 = vmatprep.mubr.f32.mxu0 0.0
      %3182 = vmatmul.mubr.f32.gmra.mxu0 %v2827
      %v3183 = vpop.f32.mrf.mxu0
      %v3184 = vadd.f32 %v3047, %v3183
      %v3185 = vpop.f32.mrf.mxu0
      %3186 = vmatprep.mubr.f32.mxu0 0.0
      %3187 = vmatmul.mubr.f32.gmra.mxu0 %v2829
      %v3188 = vpop.f32.mrf.mxu0
      %v3189 = vadd.f32 %v3052, %v3188
      %v3190 = vpop.f32.mrf.mxu0
      %3191 = vmatprep.mubr.f32.mxu0 0.0
      %3192 = vmatmul.mubr.f32.gmra.mxu0 %v2831
      %v3193 = vpop.f32.mrf.mxu0
      %v3194 = vadd.f32 %v3057, %v3193
      %v3195 = vpop.f32.mrf.mxu0
      %3196 = vmatprep.mubr.f32.mxu0 0.0
      %3197 = vmatmul.mubr.f32.gmra.mxu0 %v2833
      %v3198 = vpop.f32.mrf.mxu0
      %v3199 = vadd.f32 %v3062, %v3198
      %v3200 = vpop.f32.mrf.mxu0
      %3201 = vmatprep.mubr.f32.mxu0 0.0
      %3202 = vmatmul.mubr.f32.gmra.mxu0 %v2835
      %v3203 = vpop.f32.mrf.mxu0
      %v3204 = vadd.f32 %v3067, %v3203
      %v3205 = vpop.f32.mrf.mxu0
      %3206 = vmatprep.mubr.f32.mxu0 0.0
      %3207 = vmatmul.mubr.f32.gmra.mxu0 %v2837
      %v3208 = vpop.f32.mrf.mxu0
      %v3209 = vadd.f32 %v3072, %v3208
      %v3210 = vpop.f32.mrf.mxu0
      %3211 = vmatprep.mubr.f32.mxu0 0.0
      %3212 = vmatmul.mubr.f32.gmra.mxu0 %v2839
      %v3213 = vpop.f32.mrf.mxu0
      %v3214 = vadd.f32 %v3077, %v3213
      %v3215 = vpop.f32.mrf.mxu0
      %3216 = vmatprep.mubr.f32.mxu0 0.0
      %3217 = vmatmul.mubr.f32.gmra.mxu0 %v2841
      %v3218 = vpop.f32.mrf.mxu0
      %v3219 = vadd.f32 %v3082, %v3218
      %v3220 = vpop.f32.mrf.mxu0
      %3221 = vdwg.mxu0
      %v3222 = vsel %vm703, %v3184, 0.0
      %v3223 = vsel %vm704, %v3189, 0.0
      %v3224 = vsel %vm705, %v3194, 0.0
      %v3225 = vsel %vm706, %v3199, 0.0
      %v3226 = vsel %vm707, %v3204, 0.0
      %v3227 = vsel %vm708, %v3209, 0.0
      %v3228 = vsel %vm709, %v3214, 0.0
      %v3229 = vsel %vm710, %v3219, 0.0
      %3230 = vrot.lane.b32.xlu0 %v486, 48
      %v3231 = vpop.permute.xlu0 %3230
      %3232 = vrot.lane.b32.xlu0 %v491, 48
      %v3233 = vpop.permute.xlu0 %3232
      %3234 = vrot.lane.b32.xlu0 %v496, 48
      %v3235 = vpop.permute.xlu0 %3234
      %3236 = vrot.lane.b32.xlu0 %v501, 48
      %v3237 = vpop.permute.xlu0 %3236
      %3238 = vrot.lane.b32.xlu0 %v506, 48
      %v3239 = vpop.permute.xlu0 %3238
      %3240 = vrot.lane.b32.xlu0 %v511, 48
      %v3241 = vpop.permute.xlu0 %3240
      %3242 = vrot.lane.b32.xlu0 %v516, 48
      %v3243 = vpop.permute.xlu0 %3242
      %3244 = vrot.lane.b32.xlu0 %v521, 48
      %v3245 = vpop.permute.xlu0 %3244
      %v3255 = vsel %vm1302, %v3222, 0
      %v3258 = vsel %vm1302, %v3223, 0
      %v3261 = vsel %vm1302, %v3224, 0
      %v3264 = vsel %vm1302, %v3225, 0
      %v3267 = vsel %vm1302, %v3226, 0
      %v3270 = vsel %vm1302, %v3227, 0
      %v3273 = vsel %vm1302, %v3228, 0
      %v3276 = vsel %vm1302, %v3229, 0
      %3278 = vmatprep.subr.mxu0 0.0
      %3279 = vmatpush1.msra.mxu0 0.0
      %3280 = vmatprep.subr.mxu0 0.0
      %3281 = vmatpush1.msra.mxu0 0.0
      %3282 = vmatprep.subr.mxu0 0.0
      %3283 = vmatpush1.msra.mxu0 0.0
      %3284 = vmatprep.subr.mxu0 0.0
      %3285 = vmatpush1.msra.mxu0 0.0
      %3286 = vmatprep.subr.mxu0 0.0
      %3287 = vmatpush1.msra.mxu0 0.0
      %3288 = vmatprep.subr.mxu0 0.0
      %3289 = vmatpush1.msra.mxu0 0.0
      %3290 = vmatprep.subr.mxu0 0.0
      %3291 = vmatpush1.msra.mxu0 0.0
      %3292 = vmatprep.subr.mxu0 0.0
      %3293 = vmatpush1.msra.mxu0 0.0
      %3294 = vmatprep.subr.mxu0 0.0
      %3295 = vmatpush1.msra.mxu0 %v3245
      %3296 = vmatprep.subr.mxu0 0.0
      %3297 = vmatpush1.msra.mxu0 %v3243
      %3298 = vmatprep.subr.mxu0 0.0
      %3299 = vmatpush1.msra.mxu0 %v3241
      %3300 = vmatprep.subr.mxu0 0.0
      %3301 = vmatpush1.msra.mxu0 %v3239
      %3302 = vmatprep.subr.mxu0 0.0
      %3303 = vmatpush1.msra.mxu0 %v3237
      %3304 = vmatprep.subr.mxu0 0.0
      %3305 = vmatpush1.msra.mxu0 %v3235
      %3306 = vmatprep.subr.mxu0 0.0
      %3307 = vmatpush1.msra.mxu0 %v3233
      %3308 = vmatprep.subr.mxu0 0.0
      %3309 = vmatpush1.msra.mxu0 %v3231
      %3310 = vmatprep.subr.mxu0 0.0
      %3311 = vmatpush2.msra.mxu0 0.0
      %3312 = vmatprep.subr.mxu0 0.0
      %3313 = vmatpush2.msra.mxu0 0.0
      %3314 = vmatprep.subr.mxu0 0.0
      %3315 = vmatpush2.msra.mxu0 0.0
      %3316 = vmatprep.subr.mxu0 0.0
      %3317 = vmatpush2.msra.mxu0 0.0
      %3318 = vmatprep.subr.mxu0 0.0
      %3319 = vmatpush2.msra.mxu0 0.0
      %3320 = vmatprep.subr.mxu0 0.0
      %3321 = vmatpush2.msra.mxu0 0.0
      %3322 = vmatprep.subr.mxu0 0.0
      %3323 = vmatpush2.msra.mxu0 0.0
      %3324 = vmatprep.subr.mxu0 0.0
      %3325 = vmatpush2.msra.mxu0 0.0
      %3326 = vmatprep.subr.mxu0 0.0
      %3327 = vmatpush2.msra.mxu0 0.0
      %3328 = vmatprep.subr.mxu0 0.0
      %3329 = vmatpush2.msra.mxu0 0.0
      %3330 = vmatprep.subr.mxu0 0.0
      %3331 = vmatpush2.msra.mxu0 0.0
      %3332 = vmatprep.subr.mxu0 0.0
      %3333 = vmatpush2.msra.mxu0 0.0
      %3334 = vmatprep.subr.mxu0 0.0
      %3335 = vmatpush2.msra.mxu0 0.0
      %3336 = vmatprep.subr.mxu0 0.0
      %3337 = vmatpush2.msra.mxu0 0.0
      %3338 = vmatprep.subr.mxu0 0.0
      %3339 = vmatpush2.msra.mxu0 0.0
      %3340 = vmatprep.subr.mxu0 0.0
      %3341 = vmatpush2.msra.mxu0 0.0
      %3342 = vmatprep.mubr.f32.mxu0 0.0
      %3343 = vmatmul.mubr.f32.gmra.mxu0 %v3255
      %v3344 = vpop.f32.mrf.mxu0
      %v3345 = vadd.f32 0.0, %v3344
      %v3346 = vpop.f32.mrf.mxu0
      %3347 = vmatprep.mubr.f32.mxu0 0.0
      %3348 = vmatmul.mubr.f32.gmra.mxu0 %v3258
      %v3349 = vpop.f32.mrf.mxu0
      %v3350 = vadd.f32 0.0, %v3349
      %v3351 = vpop.f32.mrf.mxu0
      %3352 = vmatprep.mubr.f32.mxu0 0.0
      %3353 = vmatmul.mubr.f32.gmra.mxu0 %v3261
      %v3354 = vpop.f32.mrf.mxu0
      %v3355 = vadd.f32 0.0, %v3354
      %v3356 = vpop.f32.mrf.mxu0
      %3357 = vmatprep.mubr.f32.mxu0 0.0
      %3358 = vmatmul.mubr.f32.gmra.mxu0 %v3264
      %v3359 = vpop.f32.mrf.mxu0
      %v3360 = vadd.f32 0.0, %v3359
      %v3361 = vpop.f32.mrf.mxu0
      %3362 = vmatprep.mubr.f32.mxu0 0.0
      %3363 = vmatmul.mubr.f32.gmra.mxu0 %v3267
      %v3364 = vpop.f32.mrf.mxu0
      %v3365 = vadd.f32 0.0, %v3364
      %v3366 = vpop.f32.mrf.mxu0
      %3367 = vmatprep.mubr.f32.mxu0 0.0
      %3368 = vmatmul.mubr.f32.gmra.mxu0 %v3270
      %v3369 = vpop.f32.mrf.mxu0
      %v3370 = vadd.f32 0.0, %v3369
      %v3371 = vpop.f32.mrf.mxu0
      %3372 = vmatprep.mubr.f32.mxu0 0.0
      %3373 = vmatmul.mubr.f32.gmra.mxu0 %v3273
      %v3374 = vpop.f32.mrf.mxu0
      %v3375 = vadd.f32 0.0, %v3374
      %v3376 = vpop.f32.mrf.mxu0
      %3377 = vmatprep.mubr.f32.mxu0 0.0
      %3378 = vmatmul.mubr.f32.gmra.mxu0 %v3276
      %v3379 = vpop.f32.mrf.mxu0
      %v3380 = vadd.f32 0.0, %v3379
      %v3381 = vpop.f32.mrf.mxu0
      %3382 = vdwg.mxu0
      %v3383 = vadd.f32 %v2910, %v3345
      %v3384 = vadd.f32 %v2915, %v3350
      %v3385 = vadd.f32 %v2920, %v3355
      %v3386 = vadd.f32 %v2925, %v3360
      %v3387 = vadd.f32 %v2930, %v3365
      %v3388 = vadd.f32 %v2935, %v3370
      %v3389 = vadd.f32 %v2940, %v3375
      %v3390 = vadd.f32 %v2945, %v3380
      %3399 = vrot.lane.b32.xlu0 %v3383, 16
      %v3400 = vpop.permute.xlu0 %3399
      %3401 = vrot.lane.b32.xlu0 %v3384, 16
      %v3402 = vpop.permute.xlu0 %3401
      %3403 = vrot.lane.b32.xlu0 %v3385, 16
      %v3404 = vpop.permute.xlu0 %3403
      %3405 = vrot.lane.b32.xlu0 %v3386, 16
      %v3406 = vpop.permute.xlu0 %3405
      %3407 = vrot.lane.b32.xlu0 %v3387, 16
      %v3408 = vpop.permute.xlu0 %3407
      %3409 = vrot.lane.b32.xlu0 %v3388, 16
      %v3410 = vpop.permute.xlu0 %3409
      %3411 = vrot.lane.b32.xlu0 %v3389, 16
      %v3412 = vpop.permute.xlu0 %3411
      %3413 = vrot.lane.b32.xlu0 %v3390, 16
      %v3414 = vpop.permute.xlu0 %3413
      %vm3423 = vcmask 195712
      %3424 = vst.msk [vmem:[#allocation4] sm:$0xff] %vm3423, %v3400
      %3425 = vst.msk [vmem:[#allocation4 + $0x8] sm:$0xff] %vm3423, %v3402
      %3426 = vst.msk [vmem:[#allocation4 + $0x10] sm:$0xff] %vm3423, %v3404
      %3427 = vst.msk [vmem:[#allocation4 + $0x18] sm:$0xff] %vm3423, %v3406
      %3428 = vst.msk [vmem:[#allocation4 + $0x20] sm:$0xff] %vm3423, %v3408
      %3429 = vst.msk [vmem:[#allocation4 + $0x28] sm:$0xff] %vm3423, %v3410
      %3430 = vst.msk [vmem:[#allocation4 + $0x30] sm:$0xff] %vm3423, %v3412
      %3431 = vst.msk [vmem:[#allocation4 + $0x38] sm:$0xff] %vm3423, %v3414
      %3440 = vxpose.xlu0.b32.start [1/16] %v3086, 128
      %3441 = vxpose.xlu0.b32.cont [2/16] %v3088, 128
      %3442 = vxpose.xlu0.b32.cont [3/16] %v3090, 128
      %3443 = vxpose.xlu0.b32.cont [4/16] %v3092, 128
      %3444 = vxpose.xlu0.b32.cont [5/16] %v3094, 128
      %3445 = vxpose.xlu0.b32.cont [6/16] %v3096, 128
      %3446 = vxpose.xlu0.b32.cont [7/16] %v3098, 128
      %3447 = vxpose.xlu0.b32.cont [8/16] %v3100, 128
      %3448 = vxpose.xlu0.b32.cont [9/16] 0.0, 128
      %3449 = vxpose.xlu0.b32.cont [10/16] 0.0, 128
      %3450 = vxpose.xlu0.b32.cont [11/16] 0.0, 128
      %3451 = vxpose.xlu0.b32.cont [12/16] 0.0, 128
      %3452 = vxpose.xlu0.b32.cont [13/16] 0.0, 128
      %3453 = vxpose.xlu0.b32.cont [14/16] 0.0, 128
      %3454 = vxpose.xlu0.b32.cont [15/16] 0.0, 128
      %3455 = vxpose.xlu0.b32.end [16/16] 0.0, 128
      %v3456 = vpop.trf.xlu0
      %v3457 = vpop.trf.xlu0
      %v3458 = vpop.trf.xlu0
      %v3459 = vpop.trf.xlu0
      %v3460 = vpop.trf.xlu0
      %v3461 = vpop.trf.xlu0
      %v3462 = vpop.trf.xlu0
      %v3463 = vpop.trf.xlu0
      %v3464 = vpop.trf.xlu0
      %v3465 = vpop.trf.xlu0
      %v3466 = vpop.trf.xlu0
      %v3467 = vpop.trf.xlu0
      %v3468 = vpop.trf.xlu0
      %v3469 = vpop.trf.xlu0
      %v3470 = vpop.trf.xlu0
      %v3471 = vpop.trf.xlu0
      %v3473 = vsel %vm1302, %v3456, 0
      %3475 = vmatprep.subr.mxu0 0.0
      %3476 = vmatpush1.msra.mxu0 0.0
      %3477 = vmatprep.subr.mxu0 0.0
      %3478 = vmatpush1.msra.mxu0 0.0
      %3479 = vmatprep.subr.mxu0 0.0
      %3480 = vmatpush1.msra.mxu0 0.0
      %3481 = vmatprep.subr.mxu0 0.0
      %3482 = vmatpush1.msra.mxu0 0.0
      %3483 = vmatprep.subr.mxu0 0.0
      %3484 = vmatpush1.msra.mxu0 0.0
      %3485 = vmatprep.subr.mxu0 0.0
      %3486 = vmatpush1.msra.mxu0 0.0
      %3487 = vmatprep.subr.mxu0 0.0
      %3488 = vmatpush1.msra.mxu0 0.0
      %3489 = vmatprep.subr.mxu0 0.0
      %3490 = vmatpush1.msra.mxu0 0.0
      %3491 = vmatprep.subr.mxu0 0.0
      %3492 = vmatpush1.msra.mxu0 %v3245
      %3493 = vmatprep.subr.mxu0 0.0
      %3494 = vmatpush1.msra.mxu0 %v3243
      %3495 = vmatprep.subr.mxu0 0.0
      %3496 = vmatpush1.msra.mxu0 %v3241
      %3497 = vmatprep.subr.mxu0 0.0
      %3498 = vmatpush1.msra.mxu0 %v3239
      %3499 = vmatprep.subr.mxu0 0.0
      %3500 = vmatpush1.msra.mxu0 %v3237
      %3501 = vmatprep.subr.mxu0 0.0
      %3502 = vmatpush1.msra.mxu0 %v3235
      %3503 = vmatprep.subr.mxu0 0.0
      %3504 = vmatpush1.msra.mxu0 %v3233
      %3505 = vmatprep.subr.mxu0 0.0
      %3506 = vmatpush1.msra.mxu0 %v3231
      %3507 = vmatprep.subr.mxu0 0.0
      %3508 = vmatpush2.msra.mxu0 0.0
      %3509 = vmatprep.subr.mxu0 0.0
      %3510 = vmatpush2.msra.mxu0 0.0
      %3511 = vmatprep.subr.mxu0 0.0
      %3512 = vmatpush2.msra.mxu0 0.0
      %3513 = vmatprep.subr.mxu0 0.0
      %3514 = vmatpush2.msra.mxu0 0.0
      %3515 = vmatprep.subr.mxu0 0.0
      %3516 = vmatpush2.msra.mxu0 0.0
      %3517 = vmatprep.subr.mxu0 0.0
      %3518 = vmatpush2.msra.mxu0 0.0
      %3519 = vmatprep.subr.mxu0 0.0
      %3520 = vmatpush2.msra.mxu0 0.0
      %3521 = vmatprep.subr.mxu0 0.0
      %3522 = vmatpush2.msra.mxu0 0.0
      %3523 = vmatprep.subr.mxu0 0.0
      %3524 = vmatpush2.msra.mxu0 0.0
      %3525 = vmatprep.subr.mxu0 0.0
      %3526 = vmatpush2.msra.mxu0 0.0
      %3527 = vmatprep.subr.mxu0 0.0
      %3528 = vmatpush2.msra.mxu0 0.0
      %3529 = vmatprep.subr.mxu0 0.0
      %3530 = vmatpush2.msra.mxu0 0.0
      %3531 = vmatprep.subr.mxu0 0.0
      %3532 = vmatpush2.msra.mxu0 0.0
      %3533 = vmatprep.subr.mxu0 0.0
      %3534 = vmatpush2.msra.mxu0 0.0
      %3535 = vmatprep.subr.mxu0 0.0
      %3536 = vmatpush2.msra.mxu0 0.0
      %3537 = vmatprep.subr.mxu0 0.0
      %3538 = vmatpush2.msra.mxu0 0.0
      %3539 = vmatprep.mubr.f32.mxu0 0.0
      %3540 = vmatmul.mubr.f32.gmra.mxu0 %v3473
      %v3541 = vpop.f32.mrf.mxu0
      %v3542 = vadd.f32 0.0, %v3541
      %v3543 = vpop.f32.mrf.mxu0
      %3544 = vdwg.mxu0
      %v3545 = vadd.f32 %v2671, %v3542
      %3546 = vst.msk [vmem:[%s2670] sm:$0xff] %vm713, %v3545
      %3555 = vxpose.xlu0.b32.start [1/16] %v2949, 128
      %3556 = vxpose.xlu0.b32.cont [2/16] %v2951, 128
      %3557 = vxpose.xlu0.b32.cont [3/16] %v2953, 128
      %3558 = vxpose.xlu0.b32.cont [4/16] %v2955, 128
      %3559 = vxpose.xlu0.b32.cont [5/16] %v2957, 128
      %3560 = vxpose.xlu0.b32.cont [6/16] %v2959, 128
      %3561 = vxpose.xlu0.b32.cont [7/16] %v2961, 128
      %3562 = vxpose.xlu0.b32.cont [8/16] %v2963, 128
      %3563 = vxpose.xlu0.b32.cont [9/16] 0.0, 128
      %3564 = vxpose.xlu0.b32.cont [10/16] 0.0, 128
      %3565 = vxpose.xlu0.b32.cont [11/16] 0.0, 128
      %3566 = vxpose.xlu0.b32.cont [12/16] 0.0, 128
      %3567 = vxpose.xlu0.b32.cont [13/16] 0.0, 128
      %3568 = vxpose.xlu0.b32.cont [14/16] 0.0, 128
      %3569 = vxpose.xlu0.b32.cont [15/16] 0.0, 128
      %3570 = vxpose.xlu0.b32.end [16/16] 0.0, 128
      %v3571 = vpop.trf.xlu0
      %v3572 = vpop.trf.xlu0
      %v3573 = vpop.trf.xlu0
      %v3574 = vpop.trf.xlu0
      %v3575 = vpop.trf.xlu0
      %v3576 = vpop.trf.xlu0
      %v3577 = vpop.trf.xlu0
      %v3578 = vpop.trf.xlu0
      %v3579 = vpop.trf.xlu0
      %v3580 = vpop.trf.xlu0
      %v3581 = vpop.trf.xlu0
      %v3582 = vpop.trf.xlu0
      %v3583 = vpop.trf.xlu0
      %v3584 = vpop.trf.xlu0
      %v3585 = vpop.trf.xlu0
      %v3586 = vpop.trf.xlu0
      %v3588 = vsel %vm1302, %v3571, 0
      %3590 = vmatprep.subr.mxu0 0.0
      %3591 = vmatpush1.msra.mxu0 0.0
      %3592 = vmatprep.subr.mxu0 0.0
      %3593 = vmatpush1.msra.mxu0 0.0
      %3594 = vmatprep.subr.mxu0 0.0
      %3595 = vmatpush1.msra.mxu0 0.0
      %3596 = vmatprep.subr.mxu0 0.0
      %3597 = vmatpush1.msra.mxu0 0.0
      %3598 = vmatprep.subr.mxu0 0.0
      %3599 = vmatpush1.msra.mxu0 0.0
      %3600 = vmatprep.subr.mxu0 0.0
      %3601 = vmatpush1.msra.mxu0 0.0
      %3602 = vmatprep.subr.mxu0 0.0
      %3603 = vmatpush1.msra.mxu0 0.0
      %3604 = vmatprep.subr.mxu0 0.0
      %3605 = vmatpush1.msra.mxu0 0.0
      %3606 = vmatprep.subr.mxu0 0.0
      %3607 = vmatpush1.msra.mxu0 %v3245
      %3608 = vmatprep.subr.mxu0 0.0
      %3609 = vmatpush1.msra.mxu0 %v3243
      %3610 = vmatprep.subr.mxu0 0.0
      %3611 = vmatpush1.msra.mxu0 %v3241
      %3612 = vmatprep.subr.mxu0 0.0
      %3613 = vmatpush1.msra.mxu0 %v3239
      %3614 = vmatprep.subr.mxu0 0.0
      %3615 = vmatpush1.msra.mxu0 %v3237
      %3616 = vmatprep.subr.mxu0 0.0
      %3617 = vmatpush1.msra.mxu0 %v3235
      %3618 = vmatprep.subr.mxu0 0.0
      %3619 = vmatpush1.msra.mxu0 %v3233
      %3620 = vmatprep.subr.mxu0 0.0
      %3621 = vmatpush1.msra.mxu0 %v3231
      %3622 = vmatprep.subr.mxu0 0.0
      %3623 = vmatpush2.msra.mxu0 0.0
      %3624 = vmatprep.subr.mxu0 0.0
      %3625 = vmatpush2.msra.mxu0 0.0
      %3626 = vmatprep.subr.mxu0 0.0
      %3627 = vmatpush2.msra.mxu0 0.0
      %3628 = vmatprep.subr.mxu0 0.0
      %3629 = vmatpush2.msra.mxu0 0.0
      %3630 = vmatprep.subr.mxu0 0.0
      %3631 = vmatpush2.msra.mxu0 0.0
      %3632 = vmatprep.subr.mxu0 0.0
      %3633 = vmatpush2.msra.mxu0 0.0
      %3634 = vmatprep.subr.mxu0 0.0
      %3635 = vmatpush2.msra.mxu0 0.0
      %3636 = vmatprep.subr.mxu0 0.0
      %3637 = vmatpush2.msra.mxu0 0.0
      %3638 = vmatprep.subr.mxu0 0.0
      %3639 = vmatpush2.msra.mxu0 0.0
      %3640 = vmatprep.subr.mxu0 0.0
      %3641 = vmatpush2.msra.mxu0 0.0
      %3642 = vmatprep.subr.mxu0 0.0
      %3643 = vmatpush2.msra.mxu0 0.0
      %3644 = vmatprep.subr.mxu0 0.0
      %3645 = vmatpush2.msra.mxu0 0.0
      %3646 = vmatprep.subr.mxu0 0.0
      %3647 = vmatpush2.msra.mxu0 0.0
      %3648 = vmatprep.subr.mxu0 0.0
      %3649 = vmatpush2.msra.mxu0 0.0
      %3650 = vmatprep.subr.mxu0 0.0
      %3651 = vmatpush2.msra.mxu0 0.0
      %3652 = vmatprep.subr.mxu0 0.0
      %3653 = vmatpush2.msra.mxu0 0.0
      %3654 = vmatprep.mubr.f32.mxu0 0.0
      %3655 = vmatmul.mubr.f32.gmra.mxu0 %v3588
      %v3656 = vpop.f32.mrf.mxu0
      %v3657 = vadd.f32 0.0, %v3656
      %v3658 = vpop.f32.mrf.mxu0
      %3659 = vdwg.mxu0
      %v3660 = vadd.f32 %v2673, %v3657
      %3661 = vst.msk [vmem:[%s2672] sm:$0xff] %vm713, %v3660
      %s3662 = scalar_lea.vmem [#allocation2], 24
      %v3663 = vld [vmem:[%s3662] sm:$0xff]
      %s3664 = scalar_lea.vmem [#allocation3], 24
      %v3665 = vld [vmem:[%s3664] sm:$0xff]
      %3666 = vrot.lane.b32.xlu0 %v604, 104
      %v3667 = vpop.permute.xlu0 %3666
      %3668 = vrot.lane.b32.xlu0 %v605, 104
      %v3669 = vpop.permute.xlu0 %3668
      %3670 = vrot.lane.b32.xlu0 %v606, 104
      %v3671 = vpop.permute.xlu0 %3670
      %3672 = vrot.lane.b32.xlu0 %v607, 104
      %v3673 = vpop.permute.xlu0 %3672
      %3674 = vrot.lane.b32.xlu0 %v608, 104
      %v3675 = vpop.permute.xlu0 %3674
      %3676 = vrot.lane.b32.xlu0 %v609, 104
      %v3677 = vpop.permute.xlu0 %3676
      %3678 = vrot.lane.b32.xlu0 %v610, 104
      %v3679 = vpop.permute.xlu0 %3678
      %3680 = vrot.lane.b32.xlu0 %v611, 104
      %v3681 = vpop.permute.xlu0 %3680
      %v3682 = vsel %vm713, %v3667, 0
      %v3684 = vsel %vm713, %v3669, 0
      %v3686 = vsel %vm713, %v3671, 0
      %v3688 = vsel %vm713, %v3673, 0
      %v3690 = vsel %vm713, %v3675, 0
      %v3692 = vsel %vm713, %v3677, 0
      %v3694 = vsel %vm713, %v3679, 0
      %v3696 = vsel %vm713, %v3681, 0
      %3698 = vmatprep.subr.mxu0 0.0
      %3699 = vmatpush1.msra.mxu0 0.0
      %3700 = vmatprep.subr.mxu0 0.0
      %3701 = vmatpush1.msra.mxu0 0.0
      %3702 = vmatprep.subr.mxu0 0.0
      %3703 = vmatpush1.msra.mxu0 0.0
      %3704 = vmatprep.subr.mxu0 0.0
      %3705 = vmatpush1.msra.mxu0 0.0
      %3706 = vmatprep.subr.mxu0 0.0
      %3707 = vmatpush1.msra.mxu0 0.0
      %3708 = vmatprep.subr.mxu0 0.0
      %3709 = vmatpush1.msra.mxu0 0.0
      %3710 = vmatprep.subr.mxu0 0.0
      %3711 = vmatpush1.msra.mxu0 0.0
      %3712 = vmatprep.subr.mxu0 0.0
      %3713 = vmatpush1.msra.mxu0 0.0
      %3714 = vmatprep.subr.mxu0 0.0
      %3715 = vmatpush1.msra.mxu0 0.0
      %3716 = vmatprep.subr.mxu0 0.0
      %3717 = vmatpush1.msra.mxu0 0.0
      %3718 = vmatprep.subr.mxu0 0.0
      %3719 = vmatpush1.msra.mxu0 0.0
      %3720 = vmatprep.subr.mxu0 0.0
      %3721 = vmatpush1.msra.mxu0 0.0
      %3722 = vmatprep.subr.mxu0 0.0
      %3723 = vmatpush1.msra.mxu0 0.0
      %3724 = vmatprep.subr.mxu0 0.0
      %3725 = vmatpush1.msra.mxu0 0.0
      %3726 = vmatprep.subr.mxu0 0.0
      %3727 = vmatpush1.msra.mxu0 0.0
      %3728 = vmatprep.subr.mxu0 0.0
      %3729 = vmatpush1.msra.mxu0 %v3665
      %3730 = vmatprep.subr.mxu0 0.0
      %3731 = vmatpush2.msra.mxu0 0.0
      %3732 = vmatprep.subr.mxu0 0.0
      %3733 = vmatpush2.msra.mxu0 0.0
      %3734 = vmatprep.subr.mxu0 0.0
      %3735 = vmatpush2.msra.mxu0 0.0
      %3736 = vmatprep.subr.mxu0 0.0
      %3737 = vmatpush2.msra.mxu0 0.0
      %3738 = vmatprep.subr.mxu0 0.0
      %3739 = vmatpush2.msra.mxu0 0.0
      %3740 = vmatprep.subr.mxu0 0.0
      %3741 = vmatpush2.msra.mxu0 0.0
      %3742 = vmatprep.subr.mxu0 0.0
      %3743 = vmatpush2.msra.mxu0 0.0
      %3744 = vmatprep.subr.mxu0 0.0
      %3745 = vmatpush2.msra.mxu0 0.0
      %3746 = vmatprep.subr.mxu0 0.0
      %3747 = vmatpush2.msra.mxu0 0.0
      %3748 = vmatprep.subr.mxu0 0.0
      %3749 = vmatpush2.msra.mxu0 0.0
      %3750 = vmatprep.subr.mxu0 0.0
      %3751 = vmatpush2.msra.mxu0 0.0
      %3752 = vmatprep.subr.mxu0 0.0
      %3753 = vmatpush2.msra.mxu0 0.0
      %3754 = vmatprep.subr.mxu0 0.0
      %3755 = vmatpush2.msra.mxu0 0.0
      %3756 = vmatprep.subr.mxu0 0.0
      %3757 = vmatpush2.msra.mxu0 0.0
      %3758 = vmatprep.subr.mxu0 0.0
      %3759 = vmatpush2.msra.mxu0 0.0
      %3760 = vmatprep.subr.mxu0 0.0
      %3761 = vmatpush2.msra.mxu0 0.0
      %3762 = vmatprep.mubr.f32.mxu0 0.0
      %3763 = vmatmul.mubr.f32.gmra.mxu0 %v3682
      %v3764 = vpop.f32.mrf.mxu0
      %v3765 = vadd.f32 0.0, %v3764
      %v3766 = vpop.f32.mrf.mxu0
      %3767 = vmatprep.mubr.f32.mxu0 0.0
      %3768 = vmatmul.mubr.f32.gmra.mxu0 %v3684
      %v3769 = vpop.f32.mrf.mxu0
      %v3770 = vadd.f32 0.0, %v3769
      %v3771 = vpop.f32.mrf.mxu0
      %3772 = vmatprep.mubr.f32.mxu0 0.0
      %3773 = vmatmul.mubr.f32.gmra.mxu0 %v3686
      %v3774 = vpop.f32.mrf.mxu0
      %v3775 = vadd.f32 0.0, %v3774
      %v3776 = vpop.f32.mrf.mxu0
      %3777 = vmatprep.mubr.f32.mxu0 0.0
      %3778 = vmatmul.mubr.f32.gmra.mxu0 %v3688
      %v3779 = vpop.f32.mrf.mxu0
      %v3780 = vadd.f32 0.0, %v3779
      %v3781 = vpop.f32.mrf.mxu0
      %3782 = vmatprep.mubr.f32.mxu0 0.0
      %3783 = vmatmul.mubr.f32.gmra.mxu0 %v3690
      %v3784 = vpop.f32.mrf.mxu0
      %v3785 = vadd.f32 0.0, %v3784
      %v3786 = vpop.f32.mrf.mxu0
      %3787 = vmatprep.mubr.f32.mxu0 0.0
      %3788 = vmatmul.mubr.f32.gmra.mxu0 %v3692
      %v3789 = vpop.f32.mrf.mxu0
      %v3790 = vadd.f32 0.0, %v3789
      %v3791 = vpop.f32.mrf.mxu0
      %3792 = vmatprep.mubr.f32.mxu0 0.0
      %3793 = vmatmul.mubr.f32.gmra.mxu0 %v3694
      %v3794 = vpop.f32.mrf.mxu0
      %v3795 = vadd.f32 0.0, %v3794
      %v3796 = vpop.f32.mrf.mxu0
      %3797 = vmatprep.mubr.f32.mxu0 0.0
      %3798 = vmatmul.mubr.f32.gmra.mxu0 %v3696
      %v3799 = vpop.f32.mrf.mxu0
      %v3800 = vadd.f32 0.0, %v3799
      %v3801 = vpop.f32.mrf.mxu0
      %3802 = vdwg.mxu0
      %3803 = vrot.lane.b32.xlu0 %v596, 104
      %v3804 = vpop.permute.xlu0 %3803
      %3805 = vrot.lane.b32.xlu0 %v597, 104
      %v3806 = vpop.permute.xlu0 %3805
      %3807 = vrot.lane.b32.xlu0 %v598, 104
      %v3808 = vpop.permute.xlu0 %3807
      %3809 = vrot.lane.b32.xlu0 %v599, 104
      %v3810 = vpop.permute.xlu0 %3809
      %3811 = vrot.lane.b32.xlu0 %v600, 104
      %v3812 = vpop.permute.xlu0 %3811
      %3813 = vrot.lane.b32.xlu0 %v601, 104
      %v3814 = vpop.permute.xlu0 %3813
      %3815 = vrot.lane.b32.xlu0 %v602, 104
      %v3816 = vpop.permute.xlu0 %3815
      %3817 = vrot.lane.b32.xlu0 %v603, 104
      %v3818 = vpop.permute.xlu0 %3817
      %v3819 = vsel %vm713, %v3804, 0
      %v3821 = vsel %vm713, %v3806, 0
      %v3823 = vsel %vm713, %v3808, 0
      %v3825 = vsel %vm713, %v3810, 0
      %v3827 = vsel %vm713, %v3812, 0
      %v3829 = vsel %vm713, %v3814, 0
      %v3831 = vsel %vm713, %v3816, 0
      %v3833 = vsel %vm713, %v3818, 0
      %3835 = vmatprep.subr.mxu0 0.0
      %3836 = vmatpush1.msra.mxu0 0.0
      %3837 = vmatprep.subr.mxu0 0.0
      %3838 = vmatpush1.msra.mxu0 0.0
      %3839 = vmatprep.subr.mxu0 0.0
      %3840 = vmatpush1.msra.mxu0 0.0
      %3841 = vmatprep.subr.mxu0 0.0
      %3842 = vmatpush1.msra.mxu0 0.0
      %3843 = vmatprep.subr.mxu0 0.0
      %3844 = vmatpush1.msra.mxu0 0.0
      %3845 = vmatprep.subr.mxu0 0.0
      %3846 = vmatpush1.msra.mxu0 0.0
      %3847 = vmatprep.subr.mxu0 0.0
      %3848 = vmatpush1.msra.mxu0 0.0
      %3849 = vmatprep.subr.mxu0 0.0
      %3850 = vmatpush1.msra.mxu0 0.0
      %3851 = vmatprep.subr.mxu0 0.0
      %3852 = vmatpush1.msra.mxu0 0.0
      %3853 = vmatprep.subr.mxu0 0.0
      %3854 = vmatpush1.msra.mxu0 0.0
      %3855 = vmatprep.subr.mxu0 0.0
      %3856 = vmatpush1.msra.mxu0 0.0
      %3857 = vmatprep.subr.mxu0 0.0
      %3858 = vmatpush1.msra.mxu0 0.0
      %3859 = vmatprep.subr.mxu0 0.0
      %3860 = vmatpush1.msra.mxu0 0.0
      %3861 = vmatprep.subr.mxu0 0.0
      %3862 = vmatpush1.msra.mxu0 0.0
      %3863 = vmatprep.subr.mxu0 0.0
      %3864 = vmatpush1.msra.mxu0 0.0
      %3865 = vmatprep.subr.mxu0 0.0
      %3866 = vmatpush1.msra.mxu0 %v3663
      %3867 = vmatprep.subr.mxu0 0.0
      %3868 = vmatpush2.msra.mxu0 0.0
      %3869 = vmatprep.subr.mxu0 0.0
      %3870 = vmatpush2.msra.mxu0 0.0
      %3871 = vmatprep.subr.mxu0 0.0
      %3872 = vmatpush2.msra.mxu0 0.0
      %3873 = vmatprep.subr.mxu0 0.0
      %3874 = vmatpush2.msra.mxu0 0.0
      %3875 = vmatprep.subr.mxu0 0.0
      %3876 = vmatpush2.msra.mxu0 0.0
      %3877 = vmatprep.subr.mxu0 0.0
      %3878 = vmatpush2.msra.mxu0 0.0
      %3879 = vmatprep.subr.mxu0 0.0
      %3880 = vmatpush2.msra.mxu0 0.0
      %3881 = vmatprep.subr.mxu0 0.0
      %3882 = vmatpush2.msra.mxu0 0.0
      %3883 = vmatprep.subr.mxu0 0.0
      %3884 = vmatpush2.msra.mxu0 0.0
      %3885 = vmatprep.subr.mxu0 0.0
      %3886 = vmatpush2.msra.mxu0 0.0
      %3887 = vmatprep.subr.mxu0 0.0
      %3888 = vmatpush2.msra.mxu0 0.0
      %3889 = vmatprep.subr.mxu0 0.0
      %3890 = vmatpush2.msra.mxu0 0.0
      %3891 = vmatprep.subr.mxu0 0.0
      %3892 = vmatpush2.msra.mxu0 0.0
      %3893 = vmatprep.subr.mxu0 0.0
      %3894 = vmatpush2.msra.mxu0 0.0
      %3895 = vmatprep.subr.mxu0 0.0
      %3896 = vmatpush2.msra.mxu0 0.0
      %3897 = vmatprep.subr.mxu0 0.0
      %3898 = vmatpush2.msra.mxu0 0.0
      %3899 = vmatprep.mubr.f32.mxu0 0.0
      %3900 = vmatmul.mubr.f32.gmra.mxu0 %v3819
      %v3901 = vpop.f32.mrf.mxu0
      %v3902 = vadd.f32 %v3765, %v3901
      %v3903 = vpop.f32.mrf.mxu0
      %3904 = vmatprep.mubr.f32.mxu0 0.0
      %3905 = vmatmul.mubr.f32.gmra.mxu0 %v3821
      %v3906 = vpop.f32.mrf.mxu0
      %v3907 = vadd.f32 %v3770, %v3906
      %v3908 = vpop.f32.mrf.mxu0
      %3909 = vmatprep.mubr.f32.mxu0 0.0
      %3910 = vmatmul.mubr.f32.gmra.mxu0 %v3823
      %v3911 = vpop.f32.mrf.mxu0
      %v3912 = vadd.f32 %v3775, %v3911
      %v3913 = vpop.f32.mrf.mxu0
      %3914 = vmatprep.mubr.f32.mxu0 0.0
      %3915 = vmatmul.mubr.f32.gmra.mxu0 %v3825
      %v3916 = vpop.f32.mrf.mxu0
      %v3917 = vadd.f32 %v3780, %v3916
      %v3918 = vpop.f32.mrf.mxu0
      %3919 = vmatprep.mubr.f32.mxu0 0.0
      %3920 = vmatmul.mubr.f32.gmra.mxu0 %v3827
      %v3921 = vpop.f32.mrf.mxu0
      %v3922 = vadd.f32 %v3785, %v3921
      %v3923 = vpop.f32.mrf.mxu0
      %3924 = vmatprep.mubr.f32.mxu0 0.0
      %3925 = vmatmul.mubr.f32.gmra.mxu0 %v3829
      %v3926 = vpop.f32.mrf.mxu0
      %v3927 = vadd.f32 %v3790, %v3926
      %v3928 = vpop.f32.mrf.mxu0
      %3929 = vmatprep.mubr.f32.mxu0 0.0
      %3930 = vmatmul.mubr.f32.gmra.mxu0 %v3831
      %v3931 = vpop.f32.mrf.mxu0
      %v3932 = vadd.f32 %v3795, %v3931
      %v3933 = vpop.f32.mrf.mxu0
      %3934 = vmatprep.mubr.f32.mxu0 0.0
      %3935 = vmatmul.mubr.f32.gmra.mxu0 %v3833
      %v3936 = vpop.f32.mrf.mxu0
      %v3937 = vadd.f32 %v3800, %v3936
      %v3938 = vpop.f32.mrf.mxu0
      %3939 = vdwg.mxu0
      %3940 = vrot.lane.b32.xlu0 %v684, 72
      %v3941 = vpop.permute.xlu0 %3940
      %3942 = vrot.lane.b32.xlu0 %v685, 72
      %v3943 = vpop.permute.xlu0 %3942
      %3944 = vrot.lane.b32.xlu0 %v686, 72
      %v3945 = vpop.permute.xlu0 %3944
      %3946 = vrot.lane.b32.xlu0 %v687, 72
      %v3947 = vpop.permute.xlu0 %3946
      %3948 = vrot.lane.b32.xlu0 %v688, 72
      %v3949 = vpop.permute.xlu0 %3948
      %3950 = vrot.lane.b32.xlu0 %v689, 72
      %v3951 = vpop.permute.xlu0 %3950
      %3952 = vrot.lane.b32.xlu0 %v690, 72
      %v3953 = vpop.permute.xlu0 %3952
      %3954 = vrot.lane.b32.xlu0 %v691, 72
      %v3955 = vpop.permute.xlu0 %3954
      %v3956 = vsel %vm713, %v3941, 0
      %v3958 = vsel %vm713, %v3943, 0
      %v3960 = vsel %vm713, %v3945, 0
      %v3962 = vsel %vm713, %v3947, 0
      %v3964 = vsel %vm713, %v3949, 0
      %v3966 = vsel %vm713, %v3951, 0
      %v3968 = vsel %vm713, %v3953, 0
      %v3970 = vsel %vm713, %v3955, 0
      %3972 = vmatprep.subr.mxu0 0.0
      %3973 = vmatpush1.xpose.msra.mxu0 0.0
      %3974 = vmatprep.subr.mxu0 0.0
      %3975 = vmatpush1.xpose.msra.mxu0 0.0
      %3976 = vmatprep.subr.mxu0 0.0
      %3977 = vmatpush1.xpose.msra.mxu0 0.0
      %3978 = vmatprep.subr.mxu0 0.0
      %3979 = vmatpush1.xpose.msra.mxu0 0.0
      %3980 = vmatprep.subr.mxu0 0.0
      %3981 = vmatpush1.xpose.msra.mxu0 0.0
      %3982 = vmatprep.subr.mxu0 0.0
      %3983 = vmatpush1.xpose.msra.mxu0 0.0
      %3984 = vmatprep.subr.mxu0 0.0
      %3985 = vmatpush1.xpose.msra.mxu0 0.0
      %3986 = vmatprep.subr.mxu0 0.0
      %3987 = vmatpush1.xpose.msra.mxu0 0.0
      %3988 = vmatprep.subr.mxu0 0.0
      %3989 = vmatpush1.xpose.msra.mxu0 %v3970
      %3990 = vmatprep.subr.mxu0 0.0
      %3991 = vmatpush1.xpose.msra.mxu0 %v3968
      %3992 = vmatprep.subr.mxu0 0.0
      %3993 = vmatpush1.xpose.msra.mxu0 %v3966
      %3994 = vmatprep.subr.mxu0 0.0
      %3995 = vmatpush1.xpose.msra.mxu0 %v3964
      %3996 = vmatprep.subr.mxu0 0.0
      %3997 = vmatpush1.xpose.msra.mxu0 %v3962
      %3998 = vmatprep.subr.mxu0 0.0
      %3999 = vmatpush1.xpose.msra.mxu0 %v3960
      %4000 = vmatprep.subr.mxu0 0.0
      %4001 = vmatpush1.xpose.msra.mxu0 %v3958
      %4002 = vmatprep.subr.mxu0 0.0
      %4003 = vmatpush1.xpose.msra.mxu0 %v3956
      %4004 = vmatprep.subr.mxu0 0.0
      %4005 = vmatpush2.xpose.msra.mxu0 0.0
      %4006 = vmatprep.subr.mxu0 0.0
      %4007 = vmatpush2.xpose.msra.mxu0 0.0
      %4008 = vmatprep.subr.mxu0 0.0
      %4009 = vmatpush2.xpose.msra.mxu0 0.0
      %4010 = vmatprep.subr.mxu0 0.0
      %4011 = vmatpush2.xpose.msra.mxu0 0.0
      %4012 = vmatprep.subr.mxu0 0.0
      %4013 = vmatpush2.xpose.msra.mxu0 0.0
      %4014 = vmatprep.subr.mxu0 0.0
      %4015 = vmatpush2.xpose.msra.mxu0 0.0
      %4016 = vmatprep.subr.mxu0 0.0
      %4017 = vmatpush2.xpose.msra.mxu0 0.0
      %4018 = vmatprep.subr.mxu0 0.0
      %4019 = vmatpush2.xpose.msra.mxu0 0.0
      %4020 = vmatprep.subr.mxu0 0.0
      %4021 = vmatpush2.xpose.msra.mxu0 0.0
      %4022 = vmatprep.subr.mxu0 0.0
      %4023 = vmatpush2.xpose.msra.mxu0 0.0
      %4024 = vmatprep.subr.mxu0 0.0
      %4025 = vmatpush2.xpose.msra.mxu0 0.0
      %4026 = vmatprep.subr.mxu0 0.0
      %4027 = vmatpush2.xpose.msra.mxu0 0.0
      %4028 = vmatprep.subr.mxu0 0.0
      %4029 = vmatpush2.xpose.msra.mxu0 0.0
      %4030 = vmatprep.subr.mxu0 0.0
      %4031 = vmatpush2.xpose.msra.mxu0 0.0
      %4032 = vmatprep.subr.mxu0 0.0
      %4033 = vmatpush2.xpose.msra.mxu0 0.0
      %4034 = vmatprep.subr.mxu0 0.0
      %4035 = vmatpush2.xpose.msra.mxu0 0.0
      %4036 = vmatprep.mubr.f32.mxu0 0.0
      %4037 = vmatmul.mubr.f32.gmra.mxu0 %v3682
      %v4038 = vpop.f32.mrf.mxu0
      %v4039 = vadd.f32 0.0, %v4038
      %v4040 = vpop.f32.mrf.mxu0
      %4041 = vmatprep.mubr.f32.mxu0 0.0
      %4042 = vmatmul.mubr.f32.gmra.mxu0 %v3684
      %v4043 = vpop.f32.mrf.mxu0
      %v4044 = vadd.f32 0.0, %v4043
      %v4045 = vpop.f32.mrf.mxu0
      %4046 = vmatprep.mubr.f32.mxu0 0.0
      %4047 = vmatmul.mubr.f32.gmra.mxu0 %v3686
      %v4048 = vpop.f32.mrf.mxu0
      %v4049 = vadd.f32 0.0, %v4048
      %v4050 = vpop.f32.mrf.mxu0
      %4051 = vmatprep.mubr.f32.mxu0 0.0
      %4052 = vmatmul.mubr.f32.gmra.mxu0 %v3688
      %v4053 = vpop.f32.mrf.mxu0
      %v4054 = vadd.f32 0.0, %v4053
      %v4055 = vpop.f32.mrf.mxu0
      %4056 = vmatprep.mubr.f32.mxu0 0.0
      %4057 = vmatmul.mubr.f32.gmra.mxu0 %v3690
      %v4058 = vpop.f32.mrf.mxu0
      %v4059 = vadd.f32 0.0, %v4058
      %v4060 = vpop.f32.mrf.mxu0
      %4061 = vmatprep.mubr.f32.mxu0 0.0
      %4062 = vmatmul.mubr.f32.gmra.mxu0 %v3692
      %v4063 = vpop.f32.mrf.mxu0
      %v4064 = vadd.f32 0.0, %v4063
      %v4065 = vpop.f32.mrf.mxu0
      %4066 = vmatprep.mubr.f32.mxu0 0.0
      %4067 = vmatmul.mubr.f32.gmra.mxu0 %v3694
      %v4068 = vpop.f32.mrf.mxu0
      %v4069 = vadd.f32 0.0, %v4068
      %v4070 = vpop.f32.mrf.mxu0
      %4071 = vmatprep.mubr.f32.mxu0 0.0
      %4072 = vmatmul.mubr.f32.gmra.mxu0 %v3696
      %v4073 = vpop.f32.mrf.mxu0
      %v4074 = vadd.f32 0.0, %v4073
      %v4075 = vpop.f32.mrf.mxu0
      %4076 = vdwg.mxu0
      %4077 = vrot.lane.b32.xlu0 %v644, 72
      %v4078 = vpop.permute.xlu0 %4077
      %4079 = vrot.lane.b32.xlu0 %v645, 72
      %v4080 = vpop.permute.xlu0 %4079
      %4081 = vrot.lane.b32.xlu0 %v646, 72
      %v4082 = vpop.permute.xlu0 %4081
      %4083 = vrot.lane.b32.xlu0 %v647, 72
      %v4084 = vpop.permute.xlu0 %4083
      %4085 = vrot.lane.b32.xlu0 %v648, 72
      %v4086 = vpop.permute.xlu0 %4085
      %4087 = vrot.lane.b32.xlu0 %v649, 72
      %v4088 = vpop.permute.xlu0 %4087
      %4089 = vrot.lane.b32.xlu0 %v650, 72
      %v4090 = vpop.permute.xlu0 %4089
      %4091 = vrot.lane.b32.xlu0 %v651, 72
      %v4092 = vpop.permute.xlu0 %4091
      %v4093 = vsel %vm713, %v4078, 0
      %v4095 = vsel %vm713, %v4080, 0
      %v4097 = vsel %vm713, %v4082, 0
      %v4099 = vsel %vm713, %v4084, 0
      %v4101 = vsel %vm713, %v4086, 0
      %v4103 = vsel %vm713, %v4088, 0
      %v4105 = vsel %vm713, %v4090, 0
      %v4107 = vsel %vm713, %v4092, 0
      %4109 = vmatprep.subr.mxu0 0.0
      %4110 = vmatpush1.xpose.msra.mxu0 0.0
      %4111 = vmatprep.subr.mxu0 0.0
      %4112 = vmatpush1.xpose.msra.mxu0 0.0
      %4113 = vmatprep.subr.mxu0 0.0
      %4114 = vmatpush1.xpose.msra.mxu0 0.0
      %4115 = vmatprep.subr.mxu0 0.0
      %4116 = vmatpush1.xpose.msra.mxu0 0.0
      %4117 = vmatprep.subr.mxu0 0.0
      %4118 = vmatpush1.xpose.msra.mxu0 0.0
      %4119 = vmatprep.subr.mxu0 0.0
      %4120 = vmatpush1.xpose.msra.mxu0 0.0
      %4121 = vmatprep.subr.mxu0 0.0
      %4122 = vmatpush1.xpose.msra.mxu0 0.0
      %4123 = vmatprep.subr.mxu0 0.0
      %4124 = vmatpush1.xpose.msra.mxu0 0.0
      %4125 = vmatprep.subr.mxu0 0.0
      %4126 = vmatpush1.xpose.msra.mxu0 %v4107
      %4127 = vmatprep.subr.mxu0 0.0
      %4128 = vmatpush1.xpose.msra.mxu0 %v4105
      %4129 = vmatprep.subr.mxu0 0.0
      %4130 = vmatpush1.xpose.msra.mxu0 %v4103
      %4131 = vmatprep.subr.mxu0 0.0
      %4132 = vmatpush1.xpose.msra.mxu0 %v4101
      %4133 = vmatprep.subr.mxu0 0.0
      %4134 = vmatpush1.xpose.msra.mxu0 %v4099
      %4135 = vmatprep.subr.mxu0 0.0
      %4136 = vmatpush1.xpose.msra.mxu0 %v4097
      %4137 = vmatprep.subr.mxu0 0.0
      %4138 = vmatpush1.xpose.msra.mxu0 %v4095
      %4139 = vmatprep.subr.mxu0 0.0
      %4140 = vmatpush1.xpose.msra.mxu0 %v4093
      %4141 = vmatprep.subr.mxu0 0.0
      %4142 = vmatpush2.xpose.msra.mxu0 0.0
      %4143 = vmatprep.subr.mxu0 0.0
      %4144 = vmatpush2.xpose.msra.mxu0 0.0
      %4145 = vmatprep.subr.mxu0 0.0
      %4146 = vmatpush2.xpose.msra.mxu0 0.0
      %4147 = vmatprep.subr.mxu0 0.0
      %4148 = vmatpush2.xpose.msra.mxu0 0.0
      %4149 = vmatprep.subr.mxu0 0.0
      %4150 = vmatpush2.xpose.msra.mxu0 0.0
      %4151 = vmatprep.subr.mxu0 0.0
      %4152 = vmatpush2.xpose.msra.mxu0 0.0
      %4153 = vmatprep.subr.mxu0 0.0
      %4154 = vmatpush2.xpose.msra.mxu0 0.0
      %4155 = vmatprep.subr.mxu0 0.0
      %4156 = vmatpush2.xpose.msra.mxu0 0.0
      %4157 = vmatprep.subr.mxu0 0.0
      %4158 = vmatpush2.xpose.msra.mxu0 0.0
      %4159 = vmatprep.subr.mxu0 0.0
      %4160 = vmatpush2.xpose.msra.mxu0 0.0
      %4161 = vmatprep.subr.mxu0 0.0
      %4162 = vmatpush2.xpose.msra.mxu0 0.0
      %4163 = vmatprep.subr.mxu0 0.0
      %4164 = vmatpush2.xpose.msra.mxu0 0.0
      %4165 = vmatprep.subr.mxu0 0.0
      %4166 = vmatpush2.xpose.msra.mxu0 0.0
      %4167 = vmatprep.subr.mxu0 0.0
      %4168 = vmatpush2.xpose.msra.mxu0 0.0
      %4169 = vmatprep.subr.mxu0 0.0
      %4170 = vmatpush2.xpose.msra.mxu0 0.0
      %4171 = vmatprep.subr.mxu0 0.0
      %4172 = vmatpush2.xpose.msra.mxu0 0.0
      %4173 = vmatprep.mubr.f32.mxu0 0.0
      %4174 = vmatmul.mubr.f32.gmra.mxu0 %v3819
      %v4175 = vpop.f32.mrf.mxu0
      %v4176 = vadd.f32 %v4039, %v4175
      %v4177 = vpop.f32.mrf.mxu0
      %4178 = vmatprep.mubr.f32.mxu0 0.0
      %4179 = vmatmul.mubr.f32.gmra.mxu0 %v3821
      %v4180 = vpop.f32.mrf.mxu0
      %v4181 = vadd.f32 %v4044, %v4180
      %v4182 = vpop.f32.mrf.mxu0
      %4183 = vmatprep.mubr.f32.mxu0 0.0
      %4184 = vmatmul.mubr.f32.gmra.mxu0 %v3823
      %v4185 = vpop.f32.mrf.mxu0
      %v4186 = vadd.f32 %v4049, %v4185
      %v4187 = vpop.f32.mrf.mxu0
      %4188 = vmatprep.mubr.f32.mxu0 0.0
      %4189 = vmatmul.mubr.f32.gmra.mxu0 %v3825
      %v4190 = vpop.f32.mrf.mxu0
      %v4191 = vadd.f32 %v4054, %v4190
      %v4192 = vpop.f32.mrf.mxu0
      %4193 = vmatprep.mubr.f32.mxu0 0.0
      %4194 = vmatmul.mubr.f32.gmra.mxu0 %v3827
      %v4195 = vpop.f32.mrf.mxu0
      %v4196 = vadd.f32 %v4059, %v4195
      %v4197 = vpop.f32.mrf.mxu0
      %4198 = vmatprep.mubr.f32.mxu0 0.0
      %4199 = vmatmul.mubr.f32.gmra.mxu0 %v3829
      %v4200 = vpop.f32.mrf.mxu0
      %v4201 = vadd.f32 %v4064, %v4200
      %v4202 = vpop.f32.mrf.mxu0
      %4203 = vmatprep.mubr.f32.mxu0 0.0
      %4204 = vmatmul.mubr.f32.gmra.mxu0 %v3831
      %v4205 = vpop.f32.mrf.mxu0
      %v4206 = vadd.f32 %v4069, %v4205
      %v4207 = vpop.f32.mrf.mxu0
      %4208 = vmatprep.mubr.f32.mxu0 0.0
      %4209 = vmatmul.mubr.f32.gmra.mxu0 %v3833
      %v4210 = vpop.f32.mrf.mxu0
      %v4211 = vadd.f32 %v4074, %v4210
      %v4212 = vpop.f32.mrf.mxu0
      %4213 = vdwg.mxu0
      %v4214 = vsel %vm703, %v4176, 0.0
      %v4215 = vsel %vm704, %v4181, 0.0
      %v4216 = vsel %vm705, %v4186, 0.0
      %v4217 = vsel %vm706, %v4191, 0.0
      %v4218 = vsel %vm707, %v4196, 0.0
      %v4219 = vsel %vm708, %v4201, 0.0
      %v4220 = vsel %vm709, %v4206, 0.0
      %v4221 = vsel %vm710, %v4211, 0.0
      %4222 = vrot.lane.b32.xlu0 %v486, 40
      %v4223 = vpop.permute.xlu0 %4222
      %4224 = vrot.lane.b32.xlu0 %v491, 40
      %v4225 = vpop.permute.xlu0 %4224
      %4226 = vrot.lane.b32.xlu0 %v496, 40
      %v4227 = vpop.permute.xlu0 %4226
      %4228 = vrot.lane.b32.xlu0 %v501, 40
      %v4229 = vpop.permute.xlu0 %4228
      %4230 = vrot.lane.b32.xlu0 %v506, 40
      %v4231 = vpop.permute.xlu0 %4230
      %4232 = vrot.lane.b32.xlu0 %v511, 40
      %v4233 = vpop.permute.xlu0 %4232
      %4234 = vrot.lane.b32.xlu0 %v516, 40
      %v4235 = vpop.permute.xlu0 %4234
      %4236 = vrot.lane.b32.xlu0 %v521, 40
      %v4237 = vpop.permute.xlu0 %4236
      %v4247 = vsel %vm1302, %v4214, 0
      %v4250 = vsel %vm1302, %v4215, 0
      %v4253 = vsel %vm1302, %v4216, 0
      %v4256 = vsel %vm1302, %v4217, 0
      %v4259 = vsel %vm1302, %v4218, 0
      %v4262 = vsel %vm1302, %v4219, 0
      %v4265 = vsel %vm1302, %v4220, 0
      %v4268 = vsel %vm1302, %v4221, 0
      %4270 = vmatprep.subr.mxu0 0.0
      %4271 = vmatpush1.msra.mxu0 0.0
      %4272 = vmatprep.subr.mxu0 0.0
      %4273 = vmatpush1.msra.mxu0 0.0
      %4274 = vmatprep.subr.mxu0 0.0
      %4275 = vmatpush1.msra.mxu0 0.0
      %4276 = vmatprep.subr.mxu0 0.0
      %4277 = vmatpush1.msra.mxu0 0.0
      %4278 = vmatprep.subr.mxu0 0.0
      %4279 = vmatpush1.msra.mxu0 0.0
      %4280 = vmatprep.subr.mxu0 0.0
      %4281 = vmatpush1.msra.mxu0 0.0
      %4282 = vmatprep.subr.mxu0 0.0
      %4283 = vmatpush1.msra.mxu0 0.0
      %4284 = vmatprep.subr.mxu0 0.0
      %4285 = vmatpush1.msra.mxu0 0.0
      %4286 = vmatprep.subr.mxu0 0.0
      %4287 = vmatpush1.msra.mxu0 %v4237
      %4288 = vmatprep.subr.mxu0 0.0
      %4289 = vmatpush1.msra.mxu0 %v4235
      %4290 = vmatprep.subr.mxu0 0.0
      %4291 = vmatpush1.msra.mxu0 %v4233
      %4292 = vmatprep.subr.mxu0 0.0
      %4293 = vmatpush1.msra.mxu0 %v4231
      %4294 = vmatprep.subr.mxu0 0.0
      %4295 = vmatpush1.msra.mxu0 %v4229
      %4296 = vmatprep.subr.mxu0 0.0
      %4297 = vmatpush1.msra.mxu0 %v4227
      %4298 = vmatprep.subr.mxu0 0.0
      %4299 = vmatpush1.msra.mxu0 %v4225
      %4300 = vmatprep.subr.mxu0 0.0
      %4301 = vmatpush1.msra.mxu0 %v4223
      %4302 = vmatprep.subr.mxu0 0.0
      %4303 = vmatpush2.msra.mxu0 0.0
      %4304 = vmatprep.subr.mxu0 0.0
      %4305 = vmatpush2.msra.mxu0 0.0
      %4306 = vmatprep.subr.mxu0 0.0
      %4307 = vmatpush2.msra.mxu0 0.0
      %4308 = vmatprep.subr.mxu0 0.0
      %4309 = vmatpush2.msra.mxu0 0.0
      %4310 = vmatprep.subr.mxu0 0.0
      %4311 = vmatpush2.msra.mxu0 0.0
      %4312 = vmatprep.subr.mxu0 0.0
      %4313 = vmatpush2.msra.mxu0 0.0
      %4314 = vmatprep.subr.mxu0 0.0
      %4315 = vmatpush2.msra.mxu0 0.0
      %4316 = vmatprep.subr.mxu0 0.0
      %4317 = vmatpush2.msra.mxu0 0.0
      %4318 = vmatprep.subr.mxu0 0.0
      %4319 = vmatpush2.msra.mxu0 0.0
      %4320 = vmatprep.subr.mxu0 0.0
      %4321 = vmatpush2.msra.mxu0 0.0
      %4322 = vmatprep.subr.mxu0 0.0
      %4323 = vmatpush2.msra.mxu0 0.0
      %4324 = vmatprep.subr.mxu0 0.0
      %4325 = vmatpush2.msra.mxu0 0.0
      %4326 = vmatprep.subr.mxu0 0.0
      %4327 = vmatpush2.msra.mxu0 0.0
      %4328 = vmatprep.subr.mxu0 0.0
      %4329 = vmatpush2.msra.mxu0 0.0
      %4330 = vmatprep.subr.mxu0 0.0
      %4331 = vmatpush2.msra.mxu0 0.0
      %4332 = vmatprep.subr.mxu0 0.0
      %4333 = vmatpush2.msra.mxu0 0.0
      %4334 = vmatprep.mubr.f32.mxu0 0.0
      %4335 = vmatmul.mubr.f32.gmra.mxu0 %v4247
      %v4336 = vpop.f32.mrf.mxu0
      %v4337 = vadd.f32 0.0, %v4336
      %v4338 = vpop.f32.mrf.mxu0
      %4339 = vmatprep.mubr.f32.mxu0 0.0
      %4340 = vmatmul.mubr.f32.gmra.mxu0 %v4250
      %v4341 = vpop.f32.mrf.mxu0
      %v4342 = vadd.f32 0.0, %v4341
      %v4343 = vpop.f32.mrf.mxu0
      %4344 = vmatprep.mubr.f32.mxu0 0.0
      %4345 = vmatmul.mubr.f32.gmra.mxu0 %v4253
      %v4346 = vpop.f32.mrf.mxu0
      %v4347 = vadd.f32 0.0, %v4346
      %v4348 = vpop.f32.mrf.mxu0
      %4349 = vmatprep.mubr.f32.mxu0 0.0
      %4350 = vmatmul.mubr.f32.gmra.mxu0 %v4256
      %v4351 = vpop.f32.mrf.mxu0
      %v4352 = vadd.f32 0.0, %v4351
      %v4353 = vpop.f32.mrf.mxu0
      %4354 = vmatprep.mubr.f32.mxu0 0.0
      %4355 = vmatmul.mubr.f32.gmra.mxu0 %v4259
      %v4356 = vpop.f32.mrf.mxu0
      %v4357 = vadd.f32 0.0, %v4356
      %v4358 = vpop.f32.mrf.mxu0
      %4359 = vmatprep.mubr.f32.mxu0 0.0
      %4360 = vmatmul.mubr.f32.gmra.mxu0 %v4262
      %v4361 = vpop.f32.mrf.mxu0
      %v4362 = vadd.f32 0.0, %v4361
      %v4363 = vpop.f32.mrf.mxu0
      %4364 = vmatprep.mubr.f32.mxu0 0.0
      %4365 = vmatmul.mubr.f32.gmra.mxu0 %v4265
      %v4366 = vpop.f32.mrf.mxu0
      %v4367 = vadd.f32 0.0, %v4366
      %v4368 = vpop.f32.mrf.mxu0
      %4369 = vmatprep.mubr.f32.mxu0 0.0
      %4370 = vmatmul.mubr.f32.gmra.mxu0 %v4268
      %v4371 = vpop.f32.mrf.mxu0
      %v4372 = vadd.f32 0.0, %v4371
      %v4373 = vpop.f32.mrf.mxu0
      %4374 = vdwg.mxu0
      %v4375 = vadd.f32 %v3902, %v4337
      %v4376 = vadd.f32 %v3907, %v4342
      %v4377 = vadd.f32 %v3912, %v4347
      %v4378 = vadd.f32 %v3917, %v4352
      %v4379 = vadd.f32 %v3922, %v4357
      %v4380 = vadd.f32 %v3927, %v4362
      %v4381 = vadd.f32 %v3932, %v4367
      %v4382 = vadd.f32 %v3937, %v4372
      %4391 = vrot.lane.b32.xlu0 %v4375, 24
      %v4392 = vpop.permute.xlu0 %4391
      %4393 = vrot.lane.b32.xlu0 %v4376, 24
      %v4394 = vpop.permute.xlu0 %4393
      %4395 = vrot.lane.b32.xlu0 %v4377, 24
      %v4396 = vpop.permute.xlu0 %4395
      %4397 = vrot.lane.b32.xlu0 %v4378, 24
      %v4398 = vpop.permute.xlu0 %4397
      %4399 = vrot.lane.b32.xlu0 %v4379, 24
      %v4400 = vpop.permute.xlu0 %4399
      %4401 = vrot.lane.b32.xlu0 %v4380, 24
      %v4402 = vpop.permute.xlu0 %4401
      %4403 = vrot.lane.b32.xlu0 %v4381, 24
      %v4404 = vpop.permute.xlu0 %4403
      %4405 = vrot.lane.b32.xlu0 %v4382, 24
      %v4406 = vpop.permute.xlu0 %4405
      %vm4415 = vcmask 261312
      %4416 = vst.msk [vmem:[#allocation4] sm:$0xff] %vm4415, %v4392
      %4417 = vst.msk [vmem:[#allocation4 + $0x8] sm:$0xff] %vm4415, %v4394
      %4418 = vst.msk [vmem:[#allocation4 + $0x10] sm:$0xff] %vm4415, %v4396
      %4419 = vst.msk [vmem:[#allocation4 + $0x18] sm:$0xff] %vm4415, %v4398
      %4420 = vst.msk [vmem:[#allocation4 + $0x20] sm:$0xff] %vm4415, %v4400
      %4421 = vst.msk [vmem:[#allocation4 + $0x28] sm:$0xff] %vm4415, %v4402
      %4422 = vst.msk [vmem:[#allocation4 + $0x30] sm:$0xff] %vm4415, %v4404
      %4423 = vst.msk [vmem:[#allocation4 + $0x38] sm:$0xff] %vm4415, %v4406
      %4432 = vxpose.xlu0.b32.start [1/16] %v4078, 128
      %4433 = vxpose.xlu0.b32.cont [2/16] %v4080, 128
      %4434 = vxpose.xlu0.b32.cont [3/16] %v4082, 128
      %4435 = vxpose.xlu0.b32.cont [4/16] %v4084, 128
      %4436 = vxpose.xlu0.b32.cont [5/16] %v4086, 128
      %4437 = vxpose.xlu0.b32.cont [6/16] %v4088, 128
      %4438 = vxpose.xlu0.b32.cont [7/16] %v4090, 128
      %4439 = vxpose.xlu0.b32.cont [8/16] %v4092, 128
      %4440 = vxpose.xlu0.b32.cont [9/16] 0.0, 128
      %4441 = vxpose.xlu0.b32.cont [10/16] 0.0, 128
      %4442 = vxpose.xlu0.b32.cont [11/16] 0.0, 128
      %4443 = vxpose.xlu0.b32.cont [12/16] 0.0, 128
      %4444 = vxpose.xlu0.b32.cont [13/16] 0.0, 128
      %4445 = vxpose.xlu0.b32.cont [14/16] 0.0, 128
      %4446 = vxpose.xlu0.b32.cont [15/16] 0.0, 128
      %4447 = vxpose.xlu0.b32.end [16/16] 0.0, 128
      %v4448 = vpop.trf.xlu0
      %v4449 = vpop.trf.xlu0
      %v4450 = vpop.trf.xlu0
      %v4451 = vpop.trf.xlu0
      %v4452 = vpop.trf.xlu0
      %v4453 = vpop.trf.xlu0
      %v4454 = vpop.trf.xlu0
      %v4455 = vpop.trf.xlu0
      %v4456 = vpop.trf.xlu0
      %v4457 = vpop.trf.xlu0
      %v4458 = vpop.trf.xlu0
      %v4459 = vpop.trf.xlu0
      %v4460 = vpop.trf.xlu0
      %v4461 = vpop.trf.xlu0
      %v4462 = vpop.trf.xlu0
      %v4463 = vpop.trf.xlu0
      %v4465 = vsel %vm1302, %v4448, 0
      %4467 = vmatprep.subr.mxu0 0.0
      %4468 = vmatpush1.msra.mxu0 0.0
      %4469 = vmatprep.subr.mxu0 0.0
      %4470 = vmatpush1.msra.mxu0 0.0
      %4471 = vmatprep.subr.mxu0 0.0
      %4472 = vmatpush1.msra.mxu0 0.0
      %4473 = vmatprep.subr.mxu0 0.0
      %4474 = vmatpush1.msra.mxu0 0.0
      %4475 = vmatprep.subr.mxu0 0.0
      %4476 = vmatpush1.msra.mxu0 0.0
      %4477 = vmatprep.subr.mxu0 0.0
      %4478 = vmatpush1.msra.mxu0 0.0
      %4479 = vmatprep.subr.mxu0 0.0
      %4480 = vmatpush1.msra.mxu0 0.0
      %4481 = vmatprep.subr.mxu0 0.0
      %4482 = vmatpush1.msra.mxu0 0.0
      %4483 = vmatprep.subr.mxu0 0.0
      %4484 = vmatpush1.msra.mxu0 %v4237
      %4485 = vmatprep.subr.mxu0 0.0
      %4486 = vmatpush1.msra.mxu0 %v4235
      %4487 = vmatprep.subr.mxu0 0.0
      %4488 = vmatpush1.msra.mxu0 %v4233
      %4489 = vmatprep.subr.mxu0 0.0
      %4490 = vmatpush1.msra.mxu0 %v4231
      %4491 = vmatprep.subr.mxu0 0.0
      %4492 = vmatpush1.msra.mxu0 %v4229
      %4493 = vmatprep.subr.mxu0 0.0
      %4494 = vmatpush1.msra.mxu0 %v4227
      %4495 = vmatprep.subr.mxu0 0.0
      %4496 = vmatpush1.msra.mxu0 %v4225
      %4497 = vmatprep.subr.mxu0 0.0
      %4498 = vmatpush1.msra.mxu0 %v4223
      %4499 = vmatprep.subr.mxu0 0.0
      %4500 = vmatpush2.msra.mxu0 0.0
      %4501 = vmatprep.subr.mxu0 0.0
      %4502 = vmatpush2.msra.mxu0 0.0
      %4503 = vmatprep.subr.mxu0 0.0
      %4504 = vmatpush2.msra.mxu0 0.0
      %4505 = vmatprep.subr.mxu0 0.0
      %4506 = vmatpush2.msra.mxu0 0.0
      %4507 = vmatprep.subr.mxu0 0.0
      %4508 = vmatpush2.msra.mxu0 0.0
      %4509 = vmatprep.subr.mxu0 0.0
      %4510 = vmatpush2.msra.mxu0 0.0
      %4511 = vmatprep.subr.mxu0 0.0
      %4512 = vmatpush2.msra.mxu0 0.0
      %4513 = vmatprep.subr.mxu0 0.0
      %4514 = vmatpush2.msra.mxu0 0.0
      %4515 = vmatprep.subr.mxu0 0.0
      %4516 = vmatpush2.msra.mxu0 0.0
      %4517 = vmatprep.subr.mxu0 0.0
      %4518 = vmatpush2.msra.mxu0 0.0
      %4519 = vmatprep.subr.mxu0 0.0
      %4520 = vmatpush2.msra.mxu0 0.0
      %4521 = vmatprep.subr.mxu0 0.0
      %4522 = vmatpush2.msra.mxu0 0.0
      %4523 = vmatprep.subr.mxu0 0.0
      %4524 = vmatpush2.msra.mxu0 0.0
      %4525 = vmatprep.subr.mxu0 0.0
      %4526 = vmatpush2.msra.mxu0 0.0
      %4527 = vmatprep.subr.mxu0 0.0
      %4528 = vmatpush2.msra.mxu0 0.0
      %4529 = vmatprep.subr.mxu0 0.0
      %4530 = vmatpush2.msra.mxu0 0.0
      %4531 = vmatprep.mubr.f32.mxu0 0.0
      %4532 = vmatmul.mubr.f32.gmra.mxu0 %v4465
      %v4533 = vpop.f32.mrf.mxu0
      %v4534 = vadd.f32 0.0, %v4533
      %v4535 = vpop.f32.mrf.mxu0
      %4536 = vdwg.mxu0
      %v4537 = vadd.f32 %v3663, %v4534
      %4538 = vst.msk [vmem:[%s3662] sm:$0xff] %vm713, %v4537
      %4547 = vxpose.xlu0.b32.start [1/16] %v3941, 128
      %4548 = vxpose.xlu0.b32.cont [2/16] %v3943, 128
      %4549 = vxpose.xlu0.b32.cont [3/16] %v3945, 128
      %4550 = vxpose.xlu0.b32.cont [4/16] %v3947, 128
      %4551 = vxpose.xlu0.b32.cont [5/16] %v3949, 128
      %4552 = vxpose.xlu0.b32.cont [6/16] %v3951, 128
      %4553 = vxpose.xlu0.b32.cont [7/16] %v3953, 128
      %4554 = vxpose.xlu0.b32.cont [8/16] %v3955, 128
      %4555 = vxpose.xlu0.b32.cont [9/16] 0.0, 128
      %4556 = vxpose.xlu0.b32.cont [10/16] 0.0, 128
      %4557 = vxpose.xlu0.b32.cont [11/16] 0.0, 128
      %4558 = vxpose.xlu0.b32.cont [12/16] 0.0, 128
      %4559 = vxpose.xlu0.b32.cont [13/16] 0.0, 128
      %4560 = vxpose.xlu0.b32.cont [14/16] 0.0, 128
      %4561 = vxpose.xlu0.b32.cont [15/16] 0.0, 128
      %4562 = vxpose.xlu0.b32.end [16/16] 0.0, 128
      %v4563 = vpop.trf.xlu0
      %v4564 = vpop.trf.xlu0
      %v4565 = vpop.trf.xlu0
      %v4566 = vpop.trf.xlu0
      %v4567 = vpop.trf.xlu0
      %v4568 = vpop.trf.xlu0
      %v4569 = vpop.trf.xlu0
      %v4570 = vpop.trf.xlu0
      %v4571 = vpop.trf.xlu0
      %v4572 = vpop.trf.xlu0
      %v4573 = vpop.trf.xlu0
      %v4574 = vpop.trf.xlu0
      %v4575 = vpop.trf.xlu0
      %v4576 = vpop.trf.xlu0
      %v4577 = vpop.trf.xlu0
      %v4578 = vpop.trf.xlu0
      %v4580 = vsel %vm1302, %v4563, 0
      %4582 = vmatprep.subr.mxu0 0.0
      %4583 = vmatpush1.msra.mxu0 0.0
      %4584 = vmatprep.subr.mxu0 0.0
      %4585 = vmatpush1.msra.mxu0 0.0
      %4586 = vmatprep.subr.mxu0 0.0
      %4587 = vmatpush1.msra.mxu0 0.0
      %4588 = vmatprep.subr.mxu0 0.0
      %4589 = vmatpush1.msra.mxu0 0.0
      %4590 = vmatprep.subr.mxu0 0.0
      %4591 = vmatpush1.msra.mxu0 0.0
      %4592 = vmatprep.subr.mxu0 0.0
      %4593 = vmatpush1.msra.mxu0 0.0
      %4594 = vmatprep.subr.mxu0 0.0
      %4595 = vmatpush1.msra.mxu0 0.0
      %4596 = vmatprep.subr.mxu0 0.0
      %4597 = vmatpush1.msra.mxu0 0.0
      %4598 = vmatprep.subr.mxu0 0.0
      %4599 = vmatpush1.msra.mxu0 %v4237
      %4600 = vmatprep.subr.mxu0 0.0
      %4601 = vmatpush1.msra.mxu0 %v4235
      %4602 = vmatprep.subr.mxu0 0.0
      %4603 = vmatpush1.msra.mxu0 %v4233
      %4604 = vmatprep.subr.mxu0 0.0
      %4605 = vmatpush1.msra.mxu0 %v4231
      %4606 = vmatprep.subr.mxu0 0.0
      %4607 = vmatpush1.msra.mxu0 %v4229
      %4608 = vmatprep.subr.mxu0 0.0
      %4609 = vmatpush1.msra.mxu0 %v4227
      %4610 = vmatprep.subr.mxu0 0.0
      %4611 = vmatpush1.msra.mxu0 %v4225
      %4612 = vmatprep.subr.mxu0 0.0
      %4613 = vmatpush1.msra.mxu0 %v4223
      %4614 = vmatprep.subr.mxu0 0.0
      %4615 = vmatpush2.msra.mxu0 0.0
      %4616 = vmatprep.subr.mxu0 0.0
      %4617 = vmatpush2.msra.mxu0 0.0
      %4618 = vmatprep.subr.mxu0 0.0
      %4619 = vmatpush2.msra.mxu0 0.0
      %4620 = vmatprep.subr.mxu0 0.0
      %4621 = vmatpush2.msra.mxu0 0.0
      %4622 = vmatprep.subr.mxu0 0.0
      %4623 = vmatpush2.msra.mxu0 0.0
      %4624 = vmatprep.subr.mxu0 0.0
      %4625 = vmatpush2.msra.mxu0 0.0
      %4626 = vmatprep.subr.mxu0 0.0
      %4627 = vmatpush2.msra.mxu0 0.0
      %4628 = vmatprep.subr.mxu0 0.0
      %4629 = vmatpush2.msra.mxu0 0.0
      %4630 = vmatprep.subr.mxu0 0.0
      %4631 = vmatpush2.msra.mxu0 0.0
      %4632 = vmatprep.subr.mxu0 0.0
      %4633 = vmatpush2.msra.mxu0 0.0
      %4634 = vmatprep.subr.mxu0 0.0
      %4635 = vmatpush2.msra.mxu0 0.0
      %4636 = vmatprep.subr.mxu0 0.0
      %4637 = vmatpush2.msra.mxu0 0.0
      %4638 = vmatprep.subr.mxu0 0.0
      %4639 = vmatpush2.msra.mxu0 0.0
      %4640 = vmatprep.subr.mxu0 0.0
      %4641 = vmatpush2.msra.mxu0 0.0
      %4642 = vmatprep.subr.mxu0 0.0
      %4643 = vmatpush2.msra.mxu0 0.0
      %4644 = vmatprep.subr.mxu0 0.0
      %4645 = vmatpush2.msra.mxu0 0.0
      %4646 = vmatprep.mubr.f32.mxu0 0.0
      %4647 = vmatmul.mubr.f32.gmra.mxu0 %v4580
      %v4648 = vpop.f32.mrf.mxu0
      %v4649 = vadd.f32 0.0, %v4648
      %v4650 = vpop.f32.mrf.mxu0
      %4651 = vdwg.mxu0
      %v4652 = vadd.f32 %v3665, %v4649
      %4653 = vst.msk [vmem:[%s3664] sm:$0xff] %vm713, %v4652
      %v4654 = vld [vmem:[#allocation4] sm:$0xff]
      %v4655 = vld [vmem:[#allocation4 + $0x8] sm:$0xff]
      %v4656 = vld [vmem:[#allocation4 + $0x10] sm:$0xff]
      %v4657 = vld [vmem:[#allocation4 + $0x18] sm:$0xff]
      %v4658 = vld [vmem:[#allocation4 + $0x20] sm:$0xff]
      %v4659 = vld [vmem:[#allocation4 + $0x28] sm:$0xff]
      %v4660 = vld [vmem:[#allocation4 + $0x30] sm:$0xff]
      %v4661 = vld [vmem:[#allocation4 + $0x38] sm:$0xff]
      %v4662 = vmul.f32 %v4654, %v4654
      %v4663 = vmul.f32 %v4655, %v4655
      %v4664 = vmul.f32 %v4656, %v4656
      %v4665 = vmul.f32 %v4657, %v4657
      %v4666 = vmul.f32 %v4658, %v4658
      %v4667 = vmul.f32 %v4659, %v4659
      %v4668 = vmul.f32 %v4660, %v4660
      %v4669 = vmul.f32 %v4661, %v4661
      %v4670 = vsel %vm394, %v4662, 0.0
      %4671 = vadd.xlane.f32.xlu0 %v4670
      %v4672 = vpop.xlane.xlu0 %4671
      %v4673 = vsel %vm394, %v4663, 0.0
      %4674 = vadd.xlane.f32.xlu0 %v4673
      %v4675 = vpop.xlane.xlu0 %4674
      %v4676 = vsel %vm394, %v4664, 0.0
      %4677 = vadd.xlane.f32.xlu0 %v4676
      %v4678 = vpop.xlane.xlu0 %4677
      %v4679 = vsel %vm394, %v4665, 0.0
      %4680 = vadd.xlane.f32.xlu0 %v4679
      %v4681 = vpop.xlane.xlu0 %4680
      %v4682 = vsel %vm394, %v4666, 0.0
      %4683 = vadd.xlane.f32.xlu0 %v4682
      %v4684 = vpop.xlane.xlu0 %4683
      %v4685 = vsel %vm394, %v4667, 0.0
      %4686 = vadd.xlane.f32.xlu0 %v4685
      %v4687 = vpop.xlane.xlu0 %4686
      %v4688 = vsel %vm394, %v4668, 0.0
      %4689 = vadd.xlane.f32.xlu0 %v4688
      %v4690 = vpop.xlane.xlu0 %4689
      %v4691 = vsel %vm394, %v4669, 0.0
      %4692 = vadd.xlane.f32.xlu0 %v4691
      %v4693 = vpop.xlane.xlu0 %4692
      %v4694 = vrcp.pop 32.0
      %v4695 = vmul.f32 %v4672, %v4694
      %v4696 = vmul.f32 %v4675, %v4694
      %v4697 = vmul.f32 %v4678, %v4694
      %v4698 = vmul.f32 %v4681, %v4694
      %v4699 = vmul.f32 %v4684, %v4694
      %v4700 = vmul.f32 %v4687, %v4694
      %v4701 = vmul.f32 %v4690, %v4694
      %v4702 = vmul.f32 %v4693, %v4694
      %v4703 = vadd.f32 %v4695, 1e-06
      %v4704 = vadd.f32 %v4696, 1e-06
      %v4705 = vadd.f32 %v4697, 1e-06
      %v4706 = vadd.f32 %v4698, 1e-06
      %v4707 = vadd.f32 %v4699, 1e-06
      %v4708 = vadd.f32 %v4700, 1e-06
      %v4709 = vadd.f32 %v4701, 1e-06
      %v4710 = vadd.f32 %v4702, 1e-06
      %v4711 = vrsqrt.pop %v4703
      %v4712 = vrsqrt.pop %v4704
      %v4713 = vrsqrt.pop %v4705
      %v4714 = vrsqrt.pop %v4706
      %v4715 = vrsqrt.pop %v4707
      %v4716 = vrsqrt.pop %v4708
      %v4717 = vrsqrt.pop %v4709
      %v4718 = vrsqrt.pop %v4710
      %v4719 = vmul.f32 %v4654, %v4711
      %v4720 = vmul.f32 %v4655, %v4712
      %v4721 = vmul.f32 %v4656, %v4713
      %v4722 = vmul.f32 %v4657, %v4714
      %v4723 = vmul.f32 %v4658, %v4715
      %v4724 = vmul.f32 %v4659, %v4716
      %v4725 = vmul.f32 %v4660, %v4717
      %v4726 = vmul.f32 %v4661, %v4718
      %4735 = vrot.lane.b32.xlu0 %v4719, 96
      %v4736 = vpop.permute.xlu0 %4735
      %4737 = vrot.lane.b32.xlu0 %v4720, 96
      %v4738 = vpop.permute.xlu0 %4737
      %4739 = vrot.lane.b32.xlu0 %v4721, 96
      %v4740 = vpop.permute.xlu0 %4739
      %4741 = vrot.lane.b32.xlu0 %v4722, 96
      %v4742 = vpop.permute.xlu0 %4741
      %4743 = vrot.lane.b32.xlu0 %v4723, 96
      %v4744 = vpop.permute.xlu0 %4743
      %4745 = vrot.lane.b32.xlu0 %v4724, 96
      %v4746 = vpop.permute.xlu0 %4745
      %4747 = vrot.lane.b32.xlu0 %v4725, 96
      %v4748 = vpop.permute.xlu0 %4747
      %4749 = vrot.lane.b32.xlu0 %v4726, 96
      %v4750 = vpop.permute.xlu0 %4749
      %v4759 = vmul.f32 %v486, %v4736
      %v4760 = vmul.f32 %v491, %v4738
      %v4761 = vmul.f32 %v496, %v4740
      %v4762 = vmul.f32 %v501, %v4742
      %v4763 = vmul.f32 %v506, %v4744
      %v4764 = vmul.f32 %v511, %v4746
      %v4765 = vmul.f32 %v516, %v4748
      %v4766 = vmul.f32 %v521, %v4750
      %v4767 = vld [vmem:[%s5] sm:$0xff]
      %v4768 = vld [vmem:[%s5 + $0x8] sm:$0xff]
      %v4769 = vld [vmem:[%s5 + $0x10] sm:$0xff]
      %v4770 = vld [vmem:[%s5 + $0x18] sm:$0xff]
      %v4771 = vld [vmem:[%s6] sm:$0x1]
      %v4773 = vlaneseq
      %v4774 = vshrl.u32 %v4773, 7
      %v4775 = vsub.s32 0, %v4774
      %v4776 = vrot.slane %v4771, %v4775
      %4786 = vrot.lane.b32.xlu0 %v4759, 32
      %v4787 = vpop.permute.xlu0 %4786
      %4788 = vrot.lane.b32.xlu0 %v4760, 32
      %v4789 = vpop.permute.xlu0 %4788
      %4790 = vrot.lane.b32.xlu0 %v4761, 32
      %v4791 = vpop.permute.xlu0 %4790
      %4792 = vrot.lane.b32.xlu0 %v4762, 32
      %v4793 = vpop.permute.xlu0 %4792
      %4794 = vrot.lane.b32.xlu0 %v4763, 32
      %v4795 = vpop.permute.xlu0 %4794
      %4796 = vrot.lane.b32.xlu0 %v4764, 32
      %v4797 = vpop.permute.xlu0 %4796
      %4798 = vrot.lane.b32.xlu0 %v4765, 32
      %v4799 = vpop.permute.xlu0 %4798
      %4800 = vrot.lane.b32.xlu0 %v4766, 32
      %v4801 = vpop.permute.xlu0 %4800
      %v4802 = vsel %vm394, %v4787, 0
      %v4804 = vsel %vm394, %v4789, 0
      %v4806 = vsel %vm394, %v4791, 0
      %v4808 = vsel %vm394, %v4793, 0
      %v4810 = vsel %vm394, %v4795, 0
      %v4812 = vsel %vm394, %v4797, 0
      %v4814 = vsel %vm394, %v4799, 0
      %v4816 = vsel %vm394, %v4801, 0
      %4818 = vmatprep.subr.mxu0 0.0
      %4819 = vmatpush1.msra.mxu0 0.0
      %4820 = vmatprep.subr.mxu0 0.0
      %4821 = vmatpush1.msra.mxu0 0.0
      %4822 = vmatprep.subr.mxu0 0.0
      %4823 = vmatpush1.msra.mxu0 0.0
      %4824 = vmatprep.subr.mxu0 0.0
      %4825 = vmatpush1.msra.mxu0 0.0
      %4826 = vmatprep.subr.mxu0 0.0
      %4827 = vmatpush1.msra.mxu0 0.0
      %4828 = vmatprep.subr.mxu0 0.0
      %4829 = vmatpush1.msra.mxu0 0.0
      %4830 = vmatprep.subr.mxu0 0.0
      %4831 = vmatpush1.msra.mxu0 0.0
      %4832 = vmatprep.subr.mxu0 0.0
      %4833 = vmatpush1.msra.mxu0 0.0
      %4834 = vmatprep.subr.mxu0 0.0
      %4835 = vmatpush1.msra.mxu0 0.0
      %4836 = vmatprep.subr.mxu0 0.0
      %4837 = vmatpush1.msra.mxu0 0.0
      %4838 = vmatprep.subr.mxu0 0.0
      %4839 = vmatpush1.msra.mxu0 0.0
      %4840 = vmatprep.subr.mxu0 0.0
      %4841 = vmatpush1.msra.mxu0 0.0
      %4842 = vmatprep.subr.mxu0 0.0
      %4843 = vmatpush1.msra.mxu0 %v4770
      %4844 = vmatprep.subr.mxu0 0.0
      %4845 = vmatpush1.msra.mxu0 %v4769
      %4846 = vmatprep.subr.mxu0 0.0
      %4847 = vmatpush1.msra.mxu0 %v4768
      %4848 = vmatprep.subr.mxu0 0.0
      %4849 = vmatpush1.msra.mxu0 %v4767
      %4850 = vmatprep.subr.mxu0 0.0
      %4851 = vmatpush2.msra.mxu0 0.0
      %4852 = vmatprep.subr.mxu0 0.0
      %4853 = vmatpush2.msra.mxu0 0.0
      %4854 = vmatprep.subr.mxu0 0.0
      %4855 = vmatpush2.msra.mxu0 0.0
      %4856 = vmatprep.subr.mxu0 0.0
      %4857 = vmatpush2.msra.mxu0 0.0
      %4858 = vmatprep.subr.mxu0 0.0
      %4859 = vmatpush2.msra.mxu0 0.0
      %4860 = vmatprep.subr.mxu0 0.0
      %4861 = vmatpush2.msra.mxu0 0.0
      %4862 = vmatprep.subr.mxu0 0.0
      %4863 = vmatpush2.msra.mxu0 0.0
      %4864 = vmatprep.subr.mxu0 0.0
      %4865 = vmatpush2.msra.mxu0 0.0
      %4866 = vmatprep.subr.mxu0 0.0
      %4867 = vmatpush2.msra.mxu0 0.0
      %4868 = vmatprep.subr.mxu0 0.0
      %4869 = vmatpush2.msra.mxu0 0.0
      %4870 = vmatprep.subr.mxu0 0.0
      %4871 = vmatpush2.msra.mxu0 0.0
      %4872 = vmatprep.subr.mxu0 0.0
      %4873 = vmatpush2.msra.mxu0 0.0
      %4874 = vmatprep.subr.mxu0 0.0
      %4875 = vmatpush2.msra.mxu0 0.0
      %4876 = vmatprep.subr.mxu0 0.0
      %4877 = vmatpush2.msra.mxu0 0.0
      %4878 = vmatprep.subr.mxu0 0.0
      %4879 = vmatpush2.msra.mxu0 0.0
      %4880 = vmatprep.subr.mxu0 0.0
      %4881 = vmatpush2.msra.mxu0 0.0
      %4882 = vmatprep.mubr.f32.mxu0 0.0
      %4883 = vmatmul.mubr.f32.gmra.mxu0 %v4802
      %v4884 = vpop.f32.mrf.mxu0
      %v4885 = vadd.f32 %v4776, %v4884
      %v4886 = vpop.f32.mrf.mxu0
      %4887 = vmatprep.mubr.f32.mxu0 0.0
      %4888 = vmatmul.mubr.f32.gmra.mxu0 %v4804
      %v4889 = vpop.f32.mrf.mxu0
      %v4890 = vadd.f32 %v4776, %v4889
      %v4891 = vpop.f32.mrf.mxu0
      %4892 = vmatprep.mubr.f32.mxu0 0.0
      %4893 = vmatmul.mubr.f32.gmra.mxu0 %v4806
      %v4894 = vpop.f32.mrf.mxu0
      %v4895 = vadd.f32 %v4776, %v4894
      %v4896 = vpop.f32.mrf.mxu0
      %4897 = vmatprep.mubr.f32.mxu0 0.0
      %4898 = vmatmul.mubr.f32.gmra.mxu0 %v4808
      %v4899 = vpop.f32.mrf.mxu0
      %v4900 = vadd.f32 %v4776, %v4899
      %v4901 = vpop.f32.mrf.mxu0
      %4902 = vmatprep.mubr.f32.mxu0 0.0
      %4903 = vmatmul.mubr.f32.gmra.mxu0 %v4810
      %v4904 = vpop.f32.mrf.mxu0
      %v4905 = vadd.f32 %v4776, %v4904
      %v4906 = vpop.f32.mrf.mxu0
      %4907 = vmatprep.mubr.f32.mxu0 0.0
      %4908 = vmatmul.mubr.f32.gmra.mxu0 %v4812
      %v4909 = vpop.f32.mrf.mxu0
      %v4910 = vadd.f32 %v4776, %v4909
      %v4911 = vpop.f32.mrf.mxu0
      %4912 = vmatprep.mubr.f32.mxu0 0.0
      %4913 = vmatmul.mubr.f32.gmra.mxu0 %v4814
      %v4914 = vpop.f32.mrf.mxu0
      %v4915 = vadd.f32 %v4776, %v4914
      %v4916 = vpop.f32.mrf.mxu0
      %4917 = vmatprep.mubr.f32.mxu0 0.0
      %4918 = vmatmul.mubr.f32.gmra.mxu0 %v4816
      %v4919 = vpop.f32.mrf.mxu0
      %v4920 = vadd.f32 %v4776, %v4919
      %v4921 = vpop.f32.mrf.mxu0
      %4922 = vdwg.mxu0
      %4923 = vst.msk [vmem:[%s360] sm:$0xff] %vm394, %v4885
      %4924 = vst.msk [vmem:[%s360 + $0x8] sm:$0xff] %vm394, %v4890
      %4925 = vst.msk [vmem:[%s360 + $0x10] sm:$0xff] %vm394, %v4895
      %4926 = vst.msk [vmem:[%s360 + $0x18] sm:$0xff] %vm394, %v4900
      %4927 = vst.msk [vmem:[%s360 + $0x20] sm:$0xff] %vm394, %v4905
      %4928 = vst.msk [vmem:[%s360 + $0x28] sm:$0xff] %vm394, %v4910
      %4929 = vst.msk [vmem:[%s360 + $0x30] sm:$0xff] %vm394, %v4915
      %4930 = vst.msk [vmem:[%s360 + $0x38] sm:$0xff] %vm394, %v4920
      %s4931 = smul.u32 8, %s23
      %p4932 = scmp.lt.s32.totalorder %s22, 1
      %s4933 = scalar_select %p4932, %s22, 1
      %p4934 = scmp.lt.s32.totalorder %s4931, 15
      %s4935 = scalar_select %p4934, %s4931, 15
      %s4936 = smul.addr %s4933, 16
      %s4937 = sadd.s32 %s4935, %s4936
      %s4938 = smul.addr %s4937, 8
      %s4939 = scalar_lea.vmem %s7, %s4938
      // Predicated region
      $region53: #{tpu_custom_call.1} parent=47 // pred_check
        %p4940 = pneg %p214
      $region54: #{tpu_custom_call.1} parent=47 // pred_check_branch
        %4942 = sbr.rel (%p4940) target = $region56
      $region55: #{tpu_custom_call.1} parent=47 // pred_region
        %s4943 = smul.u32 8, %s23
      $region56: #{tpu_custom_call.1} parent=47 // pred_fallthru
        _
    $region48: #{tpu_custom_call.1} parent=5 // pred_fallthru
      _
    %p4944 = scmp.le.s32.totalorder 2, %s13
    // Predicated region
    $region57: #{tpu_custom_call.1} parent=5 // pred_check
      %p4945 = pneg %p4944
    $region58: #{tpu_custom_call.1} parent=5 // pred_check_branch
      %4947 = sbr.rel (%p4945) target = $region60
    $region59: #{tpu_custom_call.1} parent=5 // pred_region
      %s4948 = ssub.s32 %s13, 2
      // Predicated region
      $region61: #{tpu_custom_call.1} parent=59 // pred_check
        %p4949 = pneg %p220
      $region62: #{tpu_custom_call.1} parent=59 // pred_check_branch
        %4951 = sbr.rel (%p4949) target = $region64
      $region63: #{tpu_custom_call.1} parent=59 // pred_region
        %s4952 = smul.u32 8, %s25
        %p4953 = scmp.lt.s32.totalorder %s24, 1
        %s4954 = scalar_select %p4953, %s24, 1
        %p4955 = scmp.lt.s32.totalorder %s4952, 15
        %s4956 = scalar_select %p4955, %s4952, 15
        %s4957 = smul.addr %s4954, 16
        %s4958 = sadd.s32 %s4956, %s4957
        %s4959 = smul.addr %s4958, 8
        %s4960 = scalar_lea.vmem %s7, %s4959
      $region64: #{tpu_custom_call.1} parent=59 // pred_fallthru
        _
    $region60: #{tpu_custom_call.1} parent=5 // pred_fallthru
      _
  $region6: #{tpu_custom_call.1} parent=0 // loop_footer
    %s17 = sadd.s32 1, %s13
  $region7: #{tpu_custom_call.1} parent=0 // loop_footer_branch
    %12 = sbr.rel target = $region3
  $region8: #{tpu_custom_call.1} parent=0 // loop_exit
    _

</llo_original>
